<compile_context>
chip_gen: v6e
topology: v6e:2x2x1
jax: 0.10.0
libtpu: 0.0.40
codegen_flags: <defaults>
</compile_context>

<pallas_src>
import functools

import jax
import jax.numpy as jnp
from jax.experimental import pallas as pl
from jax.experimental.pallas import tpu as pltpu


def _perceiver_attention_kernel(
    x_ref,      # (Bt, Nx, D)     bf16
    lat_ref,    # (Bt, Nl, D)     bf16
    gx_ref,     # (1, D)          bf16  norm_x.weight
    bx_ref,     # (1, D)          bf16  norm_x.bias
    gl_ref,     # (1, D)          bf16  norm_latents.weight
    bl_ref,     # (1, D)          bf16  norm_latents.bias
    wq_ref,     # (H, D, Dh)      bf16  to_q  (head-split, pre-transposed)
    wk_ref,     # (H, D, Dh)      bf16  to_kv (k half)
    wv_ref,     # (H, D, Dh)      bf16  to_kv (v half)
    wout_ref,   # (H, Dh, D)      bf16  to_out
    o_ref,      # (Bt, Nl, D)     bf16
    acc_ref,    # (Bt*Nl, D)      fp32  VMEM scratch accumulator
    *,
    heads: int,
    dim_head: int,
    scale: float,
    eps: float,
):
    Bt, Nx, D = x_ref.shape
    _, Nl, _ = lat_ref.shape
    f32, bf16 = jnp.float32, jnp.bfloat16

    # ---- LayerNorm (fp32 stats), activations folded to 2-D: (Bt*N, D) ----
    x = x_ref[...].reshape(Bt * Nx, D).astype(f32)
    lat = lat_ref[...].reshape(Bt * Nl, D).astype(f32)

    def layer_norm(t, g, b):
        mu = jnp.mean(t, axis=-1, keepdims=True)
        var = jnp.mean((t - mu) ** 2, axis=-1, keepdims=True)
        return (t - mu) * jax.lax.rsqrt(var + eps) * g + b

    xn = layer_norm(x, gx_ref[...].astype(f32), bx_ref[...].astype(f32)).astype(bf16)
    latn = layer_norm(lat, gl_ref[...].astype(f32), bl_ref[...].astype(f32)).astype(bf16)

    # ---- Per-head attention, accumulated into fp32 scratch ----
    acc_ref[...] = jnp.zeros_like(acc_ref)

    for h in range(heads):  # heads is a static Python int -> unrolled
        # Projections: big-M 2-D matmuls against per-head weight slabs
        # (leading-axis static index on the weight refs: no lane slicing).
        qh = jnp.dot(latn, wq_ref[h], preferred_element_type=f32)   # (Bt*Nl, Dh)
        kh = jnp.dot(xn, wk_ref[h], preferred_element_type=f32)     # (Bt*Nx, Dh)
        vh = jnp.dot(xn, wv_ref[h], preferred_element_type=f32)     # (Bt*Nx, Dh)

        qh = (qh * scale).astype(bf16).reshape(Bt, Nl, dim_head)
        kh = kh.astype(bf16).reshape(Bt, Nx, dim_head)
        vh = vh.astype(bf16).reshape(Bt, Nx, dim_head)

        # sim = q k^T per batch element: (Bt, Nl, Nx)
        sim = jnp.einsum("bqe,bke->bqk", qh, kh, preferred_element_type=f32)
        sim = sim - jnp.max(sim, axis=-1, keepdims=True)
        p = jnp.exp(sim)
        attn = p * pl.reciprocal(jnp.sum(p, axis=-1, keepdims=True), approx=True)

        # out_h = attn @ v : (Bt, Nl, Dh)
        oh = jnp.einsum("bqk,bke->bqe", attn.astype(bf16), vh,
                        preferred_element_type=f32)

        # Fold the output projection per head and accumulate in fp32:
        # equivalent to concat-over-heads followed by (Bt*Nl, inner) @ (inner, D).
        acc_ref[...] += jnp.dot(oh.astype(bf16).reshape(Bt * Nl, dim_head),
                                wout_ref[h], preferred_element_type=f32)

    o_ref[...] = acc_ref[...].reshape(Bt, Nl, D).astype(o_ref.dtype)


def _choose_block_b(B, Nx, Nl, D, heads, dim_head, vmem_budget_bytes=8 << 20):
    """Pick batch-block size: as large as fits a conservative VMEM budget,
    while keeping >= 2 grid steps so v7x's two TensorCores both get work."""
    # Rough per-batch-element working set inside one grid step (fp32 temps +
    # double-buffered bf16 input/output blocks).
    per_b = 4 * (Nx * D + Nl * D                 # layernormed activations
                 + 3 * max(Nx, Nl) * dim_head    # q/k/v for one head
                 + Nl * Nx                       # sim / attn for one head
                 + Nl * dim_head                 # per-head output
                 + Nl * D)                       # fp32 accumulator
    per_b += 2 * 2 * (Nx * D + 2 * Nl * D)
    cap = max(1, min(B // 2 if B >= 2 else 1,
                     vmem_budget_bytes // max(per_b, 1)))
    bt = 1
    for d in range(1, B + 1):
        if B % d == 0 and d <= cap:
            bt = d
    return bt


def perceiver_attention(x, latents, params, *, heads, dim_head, block_b=None):
    """x: (B, Nx, D) bf16; latents: (B, Nl, D) bf16 -> (B, Nl, D) bf16."""
    B, Nx, D = x.shape
    _, Nl, _ = latents.shape
    inner = heads * dim_head
    scale = dim_head ** (-0.5)

    gx, bx = params["norm_x_w"], params["norm_x_b"]
    gl, bl = params["norm_l_w"], params["norm_l_b"]
    wq, wkv, wout = params["w_q"], params["w_kv"], params["w_out"]

    # One-time weight layout plumbing: heads become a leading batch axis so the
    # kernel never has to lane-slice sub-128-wide head chunks.
    wq_h = wq.reshape(D, heads, dim_head).transpose(1, 0, 2)                 # (H, D, Dh)
    wk_h = wkv[:, :inner].reshape(D, heads, dim_head).transpose(1, 0, 2)     # (H, D, Dh)
    wv_h = wkv[:, inner:].reshape(D, heads, dim_head).transpose(1, 0, 2)     # (H, D, Dh)
    wout_h = wout.reshape(heads, dim_head, D)                                # (H, Dh, D)

    if block_b is None:
        block_b = _choose_block_b(B, Nx, Nl, D, heads, dim_head)
    assert B % block_b == 0, (B, block_b)
    grid = (B // block_b,)

    kernel = functools.partial(
        _perceiver_attention_kernel,
        heads=heads, dim_head=dim_head, scale=scale, eps=1e-5,
    )

    def const2d(shape):
        return pl.BlockSpec(shape, lambda b: (0, 0))

    def const3d(shape):
        return pl.BlockSpec(shape, lambda b: (0, 0, 0))

    return pl.pallas_call(
        kernel,
        out_shape=jax.ShapeDtypeStruct((B, Nl, D), jnp.bfloat16),
        grid_spec=pltpu.PrefetchScalarGridSpec(
            num_scalar_prefetch=0,
            grid=grid,
            in_specs=[
                pl.BlockSpec((block_b, Nx, D), lambda b: (b, 0, 0)),   # x
                pl.BlockSpec((block_b, Nl, D), lambda b: (b, 0, 0)),   # latents
                const2d((1, D)),                 # norm_x weight
                const2d((1, D)),                 # norm_x bias
                const2d((1, D)),                 # norm_latents weight
                const2d((1, D)),                 # norm_latents bias
                const3d((heads, D, dim_head)),   # W_q  (head-split)
                const3d((heads, D, dim_head)),   # W_k  (head-split)
                const3d((heads, D, dim_head)),   # W_v  (head-split)
                const3d((heads, dim_head, D)),   # W_out (head-split)
            ],
            out_specs=pl.BlockSpec((block_b, Nl, D), lambda b: (b, 0, 0)),
            scratch_shapes=[pltpu.VMEM((block_b * Nl, D), jnp.float32)],
        ),
        compiler_params=pltpu.CompilerParams(
            dimension_semantics=("parallel",),
            vmem_limit_bytes=32 * 1024 * 1024,
        ),
    )(x, latents, gx, bx, gl, bl, wq_h, wk_h, wv_h, wout_h)


def perceiver_attention_ref(x, latents, params, *, heads, dim_head):
    """Pure-JAX reference mirroring the kernel's precision strategy."""
    f32, bf16 = jnp.float32, jnp.bfloat16
    eps = 1e-5
    inner = heads * dim_head
    scale = dim_head ** (-0.5)
    B = x.shape[0]

    def ln(t, g, b):
        t = t.astype(f32)
        mu = jnp.mean(t, axis=-1, keepdims=True)
        var = jnp.mean((t - mu) ** 2, axis=-1, keepdims=True)
        return ((t - mu) * jax.lax.rsqrt(var + eps) * g.astype(f32)
                + b.astype(f32)).astype(bf16)

    xn = ln(x, params["norm_x_w"], params["norm_x_b"])
    latn = ln(latents, params["norm_l_w"], params["norm_l_b"])

    q = jnp.einsum("bnd,de->bne", latn, params["w_q"], preferred_element_type=f32)
    kv = jnp.einsum("bnd,de->bne", xn, params["w_kv"], preferred_element_type=f32)
    k, v = kv[..., :inner], kv[..., inner:]

    def heads_split(t):
        return t.reshape(B, -1, heads, dim_head).transpose(0, 2, 1, 3)

    q = (heads_split(q) * scale).astype(bf16)
    k = heads_split(k).astype(bf16)
    v = heads_split(v).astype(bf16)

    sim = jnp.einsum("bhqe,bhke->bhqk", q, k, preferred_element_type=f32)
    sim = sim - jnp.max(sim, axis=-1, keepdims=True)
    p = jnp.exp(sim)
    attn = p / jnp.sum(p, axis=-1, keepdims=True)

    out = jnp.einsum("bhqk,bhke->bhqe", attn.astype(bf16), v,
                     preferred_element_type=f32)
    out = out.transpose(0, 2, 1, 3).reshape(B, -1, inner).astype(bf16)
    o = jnp.einsum("bne,ed->bnd", out, params["w_out"], preferred_element_type=f32)
    return o.astype(bf16)


def init_params(key, dim, dim_head, heads):
    """Deterministic synthetic parameters matching the torch module's shapes."""
    inner = dim_head * heads
    k1, k2, k3 = jax.random.split(key, 3)

    def linear_w(k, fan_in, fan_out):
        # nn.Linear default init: uniform(-1/sqrt(fan_in), 1/sqrt(fan_in)).
        # Stored transposed to (fan_in, fan_out) so forward is x @ W.
        bound = 1.0 / (fan_in ** 0.5)
        return jax.random.uniform(
            k, (fan_in, fan_out), jnp.float32, -bound, bound
        ).astype(jnp.bfloat16)

    return {
        "norm_x_w": jnp.ones((1, dim), jnp.bfloat16),
        "norm_x_b": jnp.zeros((1, dim), jnp.bfloat16),
        "norm_l_w": jnp.ones((1, dim), jnp.bfloat16),
        "norm_l_b": jnp.zeros((1, dim), jnp.bfloat16),
        "w_q": linear_w(k1, dim, inner),
        "w_kv": linear_w(k2, dim, 2 * inner),
        "w_out": linear_w(k3, inner, dim),
    }


if __name__ == "__main__":
    dim, dim_head, heads = 32, 16, 4
    B, Nx, Nl = 8, 16, 8

    key = jax.random.PRNGKey(0)
    kx, kl, kp = jax.random.split(key, 3)

    x = jax.random.normal(kx, (B, Nx, dim), jnp.float32).astype(jnp.bfloat16)
    latents = jax.random.normal(kl, (B, Nl, dim), jnp.float32).astype(jnp.bfloat16)
    params = init_params(kp, dim, dim_head, heads)

    out = perceiver_attention(x, latents, params, heads=heads, dim_head=dim_head)
    out = jax.block_until_ready(out)

    assert out.shape == (B, Nl, dim), out.shape
    assert out.dtype == jnp.bfloat16, out.dtype
    assert bool(jnp.all(jnp.isfinite(out.astype(jnp.float32))))

    ref = perceiver_attention_ref(x, latents, params, heads=heads, dim_head=dim_head)
    max_err = float(jnp.max(jnp.abs(out.astype(jnp.float32) - ref.astype(jnp.float32))))
    assert max_err < 2e-2, f"max abs err vs reference: {max_err}"

    print("KERNEL_OK")
</pallas_src>

<mosaic_0001>
module attributes {stable_mosaic.version = 11 : i64} {
  func.func @_perceiver_attention_kernel(%arg0: i32, %arg1: memref<4x16x32xbf16, #tpu.memory_space<vmem>>, %arg2: memref<4x8x32xbf16, #tpu.memory_space<vmem>>, %arg3: memref<1x32xbf16, #tpu.memory_space<vmem>>, %arg4: memref<1x32xbf16, #tpu.memory_space<vmem>>, %arg5: memref<1x32xbf16, #tpu.memory_space<vmem>>, %arg6: memref<1x32xbf16, #tpu.memory_space<vmem>>, %arg7: memref<4x32x16xbf16, #tpu.memory_space<vmem>>, %arg8: memref<4x32x16xbf16, #tpu.memory_space<vmem>>, %arg9: memref<4x32x16xbf16, #tpu.memory_space<vmem>>, %arg10: memref<4x16x32xbf16, #tpu.memory_space<vmem>>, %arg11: memref<4x8x32xbf16, #tpu.memory_space<vmem>>, %arg12: memref<32x32xf32, #tpu.memory_space<vmem>>) attributes {dimension_semantics = [#tpu.dimension_semantics<parallel>], iteration_bounds = array<i64: 2>, scalar_prefetch = 0 : i64, scratch_operands = 1 : i64, tpu.core_type = #tpu.core_type<tc>, window_params = [{transform_indices = @transform_0, window_bounds = array<i64: 4, 16, 32>}, {transform_indices = @transform_1, window_bounds = array<i64: 4, 8, 32>}, {pipeline_mode = #tpu.pipeline_mode<synchronous>, transform_indices = @transform_2, window_bounds = array<i64: 1, 32>}, {pipeline_mode = #tpu.pipeline_mode<synchronous>, transform_indices = @transform_3, window_bounds = array<i64: 1, 32>}, {pipeline_mode = #tpu.pipeline_mode<synchronous>, transform_indices = @transform_4, window_bounds = array<i64: 1, 32>}, {pipeline_mode = #tpu.pipeline_mode<synchronous>, transform_indices = @transform_5, window_bounds = array<i64: 1, 32>}, {pipeline_mode = #tpu.pipeline_mode<synchronous>, transform_indices = @transform_6, window_bounds = array<i64: 4, 32, 16>}, {pipeline_mode = #tpu.pipeline_mode<synchronous>, transform_indices = @transform_7, window_bounds = array<i64: 4, 32, 16>}, {pipeline_mode = #tpu.pipeline_mode<synchronous>, transform_indices = @transform_8, window_bounds = array<i64: 4, 32, 16>}, {pipeline_mode = #tpu.pipeline_mode<synchronous>, transform_indices = @transform_9, window_bounds = array<i64: 4, 16, 32>}, {transform_indices = @transform_10, window_bounds = array<i64: 4, 8, 32>}]} {
    %c0 = arith.constant 0 : index
    %c0_0 = arith.constant 0 : index
    %c0_1 = arith.constant 0 : index
    %0 = vector.load %arg1[%c0, %c0_0, %c0_1] : memref<4x16x32xbf16, #tpu.memory_space<vmem>>, vector<4x16x32xbf16>
    %1 = vector.shape_cast %0 : vector<4x16x32xbf16> to vector<64x32xbf16>
    %2 = arith.extf %1 : vector<64x32xbf16> to vector<64x32xf32>
    %c0_2 = arith.constant 0 : index
    %c0_3 = arith.constant 0 : index
    %c0_4 = arith.constant 0 : index
    %3 = vector.load %arg2[%c0_2, %c0_3, %c0_4] : memref<4x8x32xbf16, #tpu.memory_space<vmem>>, vector<4x8x32xbf16>
    %4 = vector.shape_cast %3 : vector<4x8x32xbf16> to vector<32x32xbf16>
    %5 = arith.extf %4 : vector<32x32xbf16> to vector<32x32xf32>
    %c0_5 = arith.constant 0 : index
    %c0_6 = arith.constant 0 : index
    %6 = vector.load %arg3[%c0_5, %c0_6] : memref<1x32xbf16, #tpu.memory_space<vmem>>, vector<1x32xbf16>
    %7 = arith.extf %6 : vector<1x32xbf16> to vector<1x32xf32>
    %c0_7 = arith.constant 0 : index
    %c0_8 = arith.constant 0 : index
    %8 = vector.load %arg4[%c0_7, %c0_8] : memref<1x32xbf16, #tpu.memory_space<vmem>>, vector<1x32xbf16>
    %9 = arith.extf %8 : vector<1x32xbf16> to vector<1x32xf32>
    %cst = arith.constant dense<0.000000e+00> : vector<64xf32>
    %10 = vector.multi_reduction <add>, %2, %cst [1] : vector<64x32xf32> to vector<64xf32>
    %11 = vector.shape_cast %10 : vector<64xf32> to vector<64x1xf32>
    %cst_9 = arith.constant 3.200000e+01 : f32
    %12 = vector.broadcast %cst_9 : f32 to vector<64x1xf32>
    %13 = arith.divf %11, %12 : vector<64x1xf32>
    %14 = vector.broadcast %13 : vector<64x1xf32> to vector<64x32xf32>
    %15 = arith.subf %2, %14 : vector<64x32xf32>
    %16 = arith.mulf %15, %15 : vector<64x32xf32>
    %cst_10 = arith.constant dense<0.000000e+00> : vector<64xf32>
    %17 = vector.multi_reduction <add>, %16, %cst_10 [1] : vector<64x32xf32> to vector<64xf32>
    %18 = vector.shape_cast %17 : vector<64xf32> to vector<64x1xf32>
    %cst_11 = arith.constant 3.200000e+01 : f32
    %19 = vector.broadcast %cst_11 : f32 to vector<64x1xf32>
    %20 = arith.divf %18, %19 : vector<64x1xf32>
    %21 = vector.broadcast %13 : vector<64x1xf32> to vector<64x32xf32>
    %22 = arith.subf %2, %21 : vector<64x32xf32>
    %cst_12 = arith.constant 9.99999974E-6 : f32
    %23 = vector.broadcast %cst_12 : f32 to vector<64x1xf32>
    %24 = arith.addf %20, %23 : vector<64x1xf32>
    %25 = math.rsqrt %24 : vector<64x1xf32>
    %26 = vector.broadcast %25 : vector<64x1xf32> to vector<64x32xf32>
    %27 = arith.mulf %22, %26 : vector<64x32xf32>
    %28 = vector.broadcast %7 : vector<1x32xf32> to vector<64x32xf32>
    %29 = arith.mulf %27, %28 : vector<64x32xf32>
    %30 = vector.broadcast %9 : vector<1x32xf32> to vector<64x32xf32>
    %31 = arith.addf %29, %30 : vector<64x32xf32>
    %32 = arith.truncf %31 : vector<64x32xf32> to vector<64x32xbf16>
    %c0_13 = arith.constant 0 : index
    %c0_14 = arith.constant 0 : index
    %33 = vector.load %arg5[%c0_13, %c0_14] : memref<1x32xbf16, #tpu.memory_space<vmem>>, vector<1x32xbf16>
    %34 = arith.extf %33 : vector<1x32xbf16> to vector<1x32xf32>
    %c0_15 = arith.constant 0 : index
    %c0_16 = arith.constant 0 : index
    %35 = vector.load %arg6[%c0_15, %c0_16] : memref<1x32xbf16, #tpu.memory_space<vmem>>, vector<1x32xbf16>
    %36 = arith.extf %35 : vector<1x32xbf16> to vector<1x32xf32>
    %cst_17 = arith.constant dense<0.000000e+00> : vector<32xf32>
    %37 = vector.multi_reduction <add>, %5, %cst_17 [1] : vector<32x32xf32> to vector<32xf32>
    %38 = vector.shape_cast %37 : vector<32xf32> to vector<32x1xf32>
    %cst_18 = arith.constant 3.200000e+01 : f32
    %39 = vector.broadcast %cst_18 : f32 to vector<32x1xf32>
    %40 = arith.divf %38, %39 : vector<32x1xf32>
    %41 = vector.broadcast %40 : vector<32x1xf32> to vector<32x32xf32>
    %42 = arith.subf %5, %41 : vector<32x32xf32>
    %43 = arith.mulf %42, %42 : vector<32x32xf32>
    %cst_19 = arith.constant dense<0.000000e+00> : vector<32xf32>
    %44 = vector.multi_reduction <add>, %43, %cst_19 [1] : vector<32x32xf32> to vector<32xf32>
    %45 = vector.shape_cast %44 : vector<32xf32> to vector<32x1xf32>
    %cst_20 = arith.constant 3.200000e+01 : f32
    %46 = vector.broadcast %cst_20 : f32 to vector<32x1xf32>
    %47 = arith.divf %45, %46 : vector<32x1xf32>
    %48 = vector.broadcast %40 : vector<32x1xf32> to vector<32x32xf32>
    %49 = arith.subf %5, %48 : vector<32x32xf32>
    %cst_21 = arith.constant 9.99999974E-6 : f32
    %50 = vector.broadcast %cst_21 : f32 to vector<32x1xf32>
    %51 = arith.addf %47, %50 : vector<32x1xf32>
    %52 = math.rsqrt %51 : vector<32x1xf32>
    %53 = vector.broadcast %52 : vector<32x1xf32> to vector<32x32xf32>
    %54 = arith.mulf %49, %53 : vector<32x32xf32>
    %55 = vector.broadcast %34 : vector<1x32xf32> to vector<32x32xf32>
    %56 = arith.mulf %54, %55 : vector<32x32xf32>
    %57 = vector.broadcast %36 : vector<1x32xf32> to vector<32x32xf32>
    %58 = arith.addf %56, %57 : vector<32x32xf32>
    %59 = arith.truncf %58 : vector<32x32xf32> to vector<32x32xbf16>
    %cst_22 = arith.constant 0.000000e+00 : f32
    %60 = vector.broadcast %cst_22 : f32 to vector<32x32xf32>
    %c0_23 = arith.constant 0 : index
    %c0_24 = arith.constant 0 : index
    %61 = vector.load %arg12[%c0_23, %c0_24] : memref<32x32xf32, #tpu.memory_space<vmem>>, vector<32x32xf32>
    tpu.vector_store %arg12[%c0_23, %c0_24], %60 {strides = array<i32>} : memref<32x32xf32, #tpu.memory_space<vmem>>, vector<32x32xf32>,
    %c0_25 = arith.constant 0 : index
    %c0_26 = arith.constant 0 : index
    %c0_27 = arith.constant 0 : index
    %62 = vector.load %arg7[%c0_25, %c0_26, %c0_27] : memref<4x32x16xbf16, #tpu.memory_space<vmem>>, vector<1x32x16xbf16>
    %63 = vector.shape_cast %62 : vector<1x32x16xbf16> to vector<32x16xbf16>
    %cst_28 = arith.constant dense<0.000000e+00> : vector<32x16xf32>
    %64 = tpu.matmul %59, %63, %cst_28 {dimension_numbers = #tpu.dot_dimension_numbers<[1], [0], [0], [1], [0, 0, 1, 1], [], []>} : vector<32x32xbf16>, vector<32x16xbf16>, vector<32x16xf32> -> vector<32x16xf32>
    %c0_29 = arith.constant 0 : index
    %c0_30 = arith.constant 0 : index
    %c0_31 = arith.constant 0 : index
    %65 = vector.load %arg8[%c0_29, %c0_30, %c0_31] : memref<4x32x16xbf16, #tpu.memory_space<vmem>>, vector<1x32x16xbf16>
    %66 = vector.shape_cast %65 : vector<1x32x16xbf16> to vector<32x16xbf16>
    %cst_32 = arith.constant dense<0.000000e+00> : vector<64x16xf32>
    %67 = tpu.matmul %32, %66, %cst_32 {dimension_numbers = #tpu.dot_dimension_numbers<[1], [0], [0], [1], [0, 0, 1, 1], [], []>} : vector<64x32xbf16>, vector<32x16xbf16>, vector<64x16xf32> -> vector<64x16xf32>
    %c0_33 = arith.constant 0 : index
    %c0_34 = arith.constant 0 : index
    %c0_35 = arith.constant 0 : index
    %68 = vector.load %arg9[%c0_33, %c0_34, %c0_35] : memref<4x32x16xbf16, #tpu.memory_space<vmem>>, vector<1x32x16xbf16>
    %69 = vector.shape_cast %68 : vector<1x32x16xbf16> to vector<32x16xbf16>
    %cst_36 = arith.constant dense<0.000000e+00> : vector<64x16xf32>
    %70 = tpu.matmul %32, %69, %cst_36 {dimension_numbers = #tpu.dot_dimension_numbers<[1], [0], [0], [1], [0, 0, 1, 1], [], []>} : vector<64x32xbf16>, vector<32x16xbf16>, vector<64x16xf32> -> vector<64x16xf32>
    %cst_37 = arith.constant 2.500000e-01 : f32
    %71 = vector.broadcast %cst_37 : f32 to vector<32x16xf32>
    %72 = arith.mulf %64, %71 : vector<32x16xf32>
    %73 = arith.truncf %72 : vector<32x16xf32> to vector<32x16xbf16>
    %74 = vector.shape_cast %73 : vector<32x16xbf16> to vector<4x8x16xbf16>
    %75 = arith.truncf %67 : vector<64x16xf32> to vector<64x16xbf16>
    %76 = vector.shape_cast %75 : vector<64x16xbf16> to vector<4x16x16xbf16>
    %77 = arith.truncf %70 : vector<64x16xf32> to vector<64x16xbf16>
    %78 = vector.shape_cast %77 : vector<64x16xbf16> to vector<4x16x16xbf16>
    "tpu.trace_start"() <{level = 10 : i32, message = "bqe,bke->bqk"}> : () -> ()
    %cst_38 = arith.constant dense<0.000000e+00> : vector<4x8x16xf32>
    %79 = tpu.matmul %74, %76, %cst_38 {dimension_numbers = #tpu.dot_dimension_numbers<[2], [2], [1], [1], [0, 0, 0, 1, 1, 1], [0], [0]>} : vector<4x8x16xbf16>, vector<4x16x16xbf16>, vector<4x8x16xf32> -> vector<4x8x16xf32>
    "tpu.trace_stop"() : () -> ()
    %cst_39 = arith.constant dense<0xFF800000> : vector<4x8xf32>
    %80 = vector.multi_reduction <maximumf>, %79, %cst_39 [2] : vector<4x8x16xf32> to vector<4x8xf32>
    %81 = vector.shape_cast %80 : vector<4x8xf32> to vector<4x8x1xf32>
    %82 = vector.broadcast %81 : vector<4x8x1xf32> to vector<4x8x16xf32>
    %83 = arith.subf %79, %82 : vector<4x8x16xf32>
    %84 = math.exp %83 : vector<4x8x16xf32>
    %cst_40 = arith.constant dense<0.000000e+00> : vector<4x8xf32>
    %85 = vector.multi_reduction <add>, %84, %cst_40 [2] : vector<4x8x16xf32> to vector<4x8xf32>
    %86 = vector.shape_cast %85 : vector<4x8xf32> to vector<4x8x1xf32>
    %87 = tpu.reciprocal %86 {approx = true} : vector<4x8x1xf32> -> vector<4x8x1xf32>
    %88 = vector.broadcast %87 : vector<4x8x1xf32> to vector<4x8x16xf32>
    %89 = arith.mulf %84, %88 : vector<4x8x16xf32>
    %90 = arith.truncf %89 : vector<4x8x16xf32> to vector<4x8x16xbf16>
    "tpu.trace_start"() <{level = 10 : i32, message = "bqk,bke->bqe"}> : () -> ()
    %cst_41 = arith.constant dense<0.000000e+00> : vector<4x8x16xf32>
    %91 = tpu.matmul %90, %78, %cst_41 {dimension_numbers = #tpu.dot_dimension_numbers<[2], [1], [1], [2], [0, 0, 0, 1, 1, 2], [0], [0]>} : vector<4x8x16xbf16>, vector<4x16x16xbf16>, vector<4x8x16xf32> -> vector<4x8x16xf32>
    "tpu.trace_stop"() : () -> ()
    %c0_42 = arith.constant 0 : index
    %c0_43 = arith.constant 0 : index
    %92 = vector.load %arg12[%c0_42, %c0_43] : memref<32x32xf32, #tpu.memory_space<vmem>>, vector<32x32xf32>
    %93 = arith.truncf %91 : vector<4x8x16xf32> to vector<4x8x16xbf16>
    %94 = vector.shape_cast %93 : vector<4x8x16xbf16> to vector<32x16xbf16>
    %c0_44 = arith.constant 0 : index
    %c0_45 = arith.constant 0 : index
    %c0_46 = arith.constant 0 : index
    %95 = vector.load %arg10[%c0_44, %c0_45, %c0_46] : memref<4x16x32xbf16, #tpu.memory_space<vmem>>, vector<1x16x32xbf16>
    %96 = vector.shape_cast %95 : vector<1x16x32xbf16> to vector<16x32xbf16>
    %cst_47 = arith.constant dense<0.000000e+00> : vector<32x32xf32>
    %97 = tpu.matmul %94, %96, %cst_47 {dimension_numbers = #tpu.dot_dimension_numbers<[1], [0], [0], [1], [0, 0, 1, 1], [], []>} : vector<32x16xbf16>, vector<16x32xbf16>, vector<32x32xf32> -> vector<32x32xf32>
    %98 = arith.addf %92, %97 : vector<32x32xf32>
    %c0_48 = arith.constant 0 : index
    %c0_49 = arith.constant 0 : index
    %99 = vector.load %arg12[%c0_48, %c0_49] : memref<32x32xf32, #tpu.memory_space<vmem>>, vector<32x32xf32>
    tpu.vector_store %arg12[%c0_48, %c0_49], %98 {strides = array<i32>} : memref<32x32xf32, #tpu.memory_space<vmem>>, vector<32x32xf32>,
    %c1 = arith.constant 1 : index
    %c0_50 = arith.constant 0 : index
    %c0_51 = arith.constant 0 : index
    %100 = vector.load %arg7[%c1, %c0_50, %c0_51] : memref<4x32x16xbf16, #tpu.memory_space<vmem>>, vector<1x32x16xbf16>
    %101 = vector.shape_cast %100 : vector<1x32x16xbf16> to vector<32x16xbf16>
    %cst_52 = arith.constant dense<0.000000e+00> : vector<32x16xf32>
    %102 = tpu.matmul %59, %101, %cst_52 {dimension_numbers = #tpu.dot_dimension_numbers<[1], [0], [0], [1], [0, 0, 1, 1], [], []>} : vector<32x32xbf16>, vector<32x16xbf16>, vector<32x16xf32> -> vector<32x16xf32>
    %c1_53 = arith.constant 1 : index
    %c0_54 = arith.constant 0 : index
    %c0_55 = arith.constant 0 : index
    %103 = vector.load %arg8[%c1_53, %c0_54, %c0_55] : memref<4x32x16xbf16, #tpu.memory_space<vmem>>, vector<1x32x16xbf16>
    %104 = vector.shape_cast %103 : vector<1x32x16xbf16> to vector<32x16xbf16>
    %cst_56 = arith.constant dense<0.000000e+00> : vector<64x16xf32>
    %105 = tpu.matmul %32, %104, %cst_56 {dimension_numbers = #tpu.dot_dimension_numbers<[1], [0], [0], [1], [0, 0, 1, 1], [], []>} : vector<64x32xbf16>, vector<32x16xbf16>, vector<64x16xf32> -> vector<64x16xf32>
    %c1_57 = arith.constant 1 : index
    %c0_58 = arith.constant 0 : index
    %c0_59 = arith.constant 0 : index
    %106 = vector.load %arg9[%c1_57, %c0_58, %c0_59] : memref<4x32x16xbf16, #tpu.memory_space<vmem>>, vector<1x32x16xbf16>
    %107 = vector.shape_cast %106 : vector<1x32x16xbf16> to vector<32x16xbf16>
    %cst_60 = arith.constant dense<0.000000e+00> : vector<64x16xf32>
    %108 = tpu.matmul %32, %107, %cst_60 {dimension_numbers = #tpu.dot_dimension_numbers<[1], [0], [0], [1], [0, 0, 1, 1], [], []>} : vector<64x32xbf16>, vector<32x16xbf16>, vector<64x16xf32> -> vector<64x16xf32>
    %cst_61 = arith.constant 2.500000e-01 : f32
    %109 = vector.broadcast %cst_61 : f32 to vector<32x16xf32>
    %110 = arith.mulf %102, %109 : vector<32x16xf32>
    %111 = arith.truncf %110 : vector<32x16xf32> to vector<32x16xbf16>
    %112 = vector.shape_cast %111 : vector<32x16xbf16> to vector<4x8x16xbf16>
    %113 = arith.truncf %105 : vector<64x16xf32> to vector<64x16xbf16>
    %114 = vector.shape_cast %113 : vector<64x16xbf16> to vector<4x16x16xbf16>
    %115 = arith.truncf %108 : vector<64x16xf32> to vector<64x16xbf16>
    %116 = vector.shape_cast %115 : vector<64x16xbf16> to vector<4x16x16xbf16>
    "tpu.trace_start"() <{level = 10 : i32, message = "bqe,bke->bqk"}> : () -> ()
    %cst_62 = arith.constant dense<0.000000e+00> : vector<4x8x16xf32>
    %117 = tpu.matmul %112, %114, %cst_62 {dimension_numbers = #tpu.dot_dimension_numbers<[2], [2], [1], [1], [0, 0, 0, 1, 1, 1], [0], [0]>} : vector<4x8x16xbf16>, vector<4x16x16xbf16>, vector<4x8x16xf32> -> vector<4x8x16xf32>
    "tpu.trace_stop"() : () -> ()
    %cst_63 = arith.constant dense<0xFF800000> : vector<4x8xf32>
    %118 = vector.multi_reduction <maximumf>, %117, %cst_63 [2] : vector<4x8x16xf32> to vector<4x8xf32>
    %119 = vector.shape_cast %118 : vector<4x8xf32> to vector<4x8x1xf32>
    %120 = vector.broadcast %119 : vector<4x8x1xf32> to vector<4x8x16xf32>
    %121 = arith.subf %117, %120 : vector<4x8x16xf32>
    %122 = math.exp %121 : vector<4x8x16xf32>
    %cst_64 = arith.constant dense<0.000000e+00> : vector<4x8xf32>
    %123 = vector.multi_reduction <add>, %122, %cst_64 [2] : vector<4x8x16xf32> to vector<4x8xf32>
    %124 = vector.shape_cast %123 : vector<4x8xf32> to vector<4x8x1xf32>
    %125 = tpu.reciprocal %124 {approx = true} : vector<4x8x1xf32> -> vector<4x8x1xf32>
    %126 = vector.broadcast %125 : vector<4x8x1xf32> to vector<4x8x16xf32>
    %127 = arith.mulf %122, %126 : vector<4x8x16xf32>
    %128 = arith.truncf %127 : vector<4x8x16xf32> to vector<4x8x16xbf16>
    "tpu.trace_start"() <{level = 10 : i32, message = "bqk,bke->bqe"}> : () -> ()
    %cst_65 = arith.constant dense<0.000000e+00> : vector<4x8x16xf32>
    %129 = tpu.matmul %128, %116, %cst_65 {dimension_numbers = #tpu.dot_dimension_numbers<[2], [1], [1], [2], [0, 0, 0, 1, 1, 2], [0], [0]>} : vector<4x8x16xbf16>, vector<4x16x16xbf16>, vector<4x8x16xf32> -> vector<4x8x16xf32>
    "tpu.trace_stop"() : () -> ()
    %c0_66 = arith.constant 0 : index
    %c0_67 = arith.constant 0 : index
    %130 = vector.load %arg12[%c0_66, %c0_67] : memref<32x32xf32, #tpu.memory_space<vmem>>, vector<32x32xf32>
    %131 = arith.truncf %129 : vector<4x8x16xf32> to vector<4x8x16xbf16>
    %132 = vector.shape_cast %131 : vector<4x8x16xbf16> to vector<32x16xbf16>
    %c1_68 = arith.constant 1 : index
    %c0_69 = arith.constant 0 : index
    %c0_70 = arith.constant 0 : index
    %133 = vector.load %arg10[%c1_68, %c0_69, %c0_70] : memref<4x16x32xbf16, #tpu.memory_space<vmem>>, vector<1x16x32xbf16>
    %134 = vector.shape_cast %133 : vector<1x16x32xbf16> to vector<16x32xbf16>
    %cst_71 = arith.constant dense<0.000000e+00> : vector<32x32xf32>
    %135 = tpu.matmul %132, %134, %cst_71 {dimension_numbers = #tpu.dot_dimension_numbers<[1], [0], [0], [1], [0, 0, 1, 1], [], []>} : vector<32x16xbf16>, vector<16x32xbf16>, vector<32x32xf32> -> vector<32x32xf32>
    %136 = arith.addf %130, %135 : vector<32x32xf32>
    %c0_72 = arith.constant 0 : index
    %c0_73 = arith.constant 0 : index
    %137 = vector.load %arg12[%c0_72, %c0_73] : memref<32x32xf32, #tpu.memory_space<vmem>>, vector<32x32xf32>
    tpu.vector_store %arg12[%c0_72, %c0_73], %136 {strides = array<i32>} : memref<32x32xf32, #tpu.memory_space<vmem>>, vector<32x32xf32>,
    %c2 = arith.constant 2 : index
    %c0_74 = arith.constant 0 : index
    %c0_75 = arith.constant 0 : index
    %138 = vector.load %arg7[%c2, %c0_74, %c0_75] : memref<4x32x16xbf16, #tpu.memory_space<vmem>>, vector<1x32x16xbf16>
    %139 = vector.shape_cast %138 : vector<1x32x16xbf16> to vector<32x16xbf16>
    %cst_76 = arith.constant dense<0.000000e+00> : vector<32x16xf32>
    %140 = tpu.matmul %59, %139, %cst_76 {dimension_numbers = #tpu.dot_dimension_numbers<[1], [0], [0], [1], [0, 0, 1, 1], [], []>} : vector<32x32xbf16>, vector<32x16xbf16>, vector<32x16xf32> -> vector<32x16xf32>
    %c2_77 = arith.constant 2 : index
    %c0_78 = arith.constant 0 : index
    %c0_79 = arith.constant 0 : index
    %141 = vector.load %arg8[%c2_77, %c0_78, %c0_79] : memref<4x32x16xbf16, #tpu.memory_space<vmem>>, vector<1x32x16xbf16>
    %142 = vector.shape_cast %141 : vector<1x32x16xbf16> to vector<32x16xbf16>
    %cst_80 = arith.constant dense<0.000000e+00> : vector<64x16xf32>
    %143 = tpu.matmul %32, %142, %cst_80 {dimension_numbers = #tpu.dot_dimension_numbers<[1], [0], [0], [1], [0, 0, 1, 1], [], []>} : vector<64x32xbf16>, vector<32x16xbf16>, vector<64x16xf32> -> vector<64x16xf32>
    %c2_81 = arith.constant 2 : index
    %c0_82 = arith.constant 0 : index
    %c0_83 = arith.constant 0 : index
    %144 = vector.load %arg9[%c2_81, %c0_82, %c0_83] : memref<4x32x16xbf16, #tpu.memory_space<vmem>>, vector<1x32x16xbf16>
    %145 = vector.shape_cast %144 : vector<1x32x16xbf16> to vector<32x16xbf16>
    %cst_84 = arith.constant dense<0.000000e+00> : vector<64x16xf32>
    %146 = tpu.matmul %32, %145, %cst_84 {dimension_numbers = #tpu.dot_dimension_numbers<[1], [0], [0], [1], [0, 0, 1, 1], [], []>} : vector<64x32xbf16>, vector<32x16xbf16>, vector<64x16xf32> -> vector<64x16xf32>
    %cst_85 = arith.constant 2.500000e-01 : f32
    %147 = vector.broadcast %cst_85 : f32 to vector<32x16xf32>
    %148 = arith.mulf %140, %147 : vector<32x16xf32>
    %149 = arith.truncf %148 : vector<32x16xf32> to vector<32x16xbf16>
    %150 = vector.shape_cast %149 : vector<32x16xbf16> to vector<4x8x16xbf16>
    %151 = arith.truncf %143 : vector<64x16xf32> to vector<64x16xbf16>
    %152 = vector.shape_cast %151 : vector<64x16xbf16> to vector<4x16x16xbf16>
    %153 = arith.truncf %146 : vector<64x16xf32> to vector<64x16xbf16>
    %154 = vector.shape_cast %153 : vector<64x16xbf16> to vector<4x16x16xbf16>
    "tpu.trace_start"() <{level = 10 : i32, message = "bqe,bke->bqk"}> : () -> ()
    %cst_86 = arith.constant dense<0.000000e+00> : vector<4x8x16xf32>
    %155 = tpu.matmul %150, %152, %cst_86 {dimension_numbers = #tpu.dot_dimension_numbers<[2], [2], [1], [1], [0, 0, 0, 1, 1, 1], [0], [0]>} : vector<4x8x16xbf16>, vector<4x16x16xbf16>, vector<4x8x16xf32> -> vector<4x8x16xf32>
    "tpu.trace_stop"() : () -> ()
    %cst_87 = arith.constant dense<0xFF800000> : vector<4x8xf32>
    %156 = vector.multi_reduction <maximumf>, %155, %cst_87 [2] : vector<4x8x16xf32> to vector<4x8xf32>
    %157 = vector.shape_cast %156 : vector<4x8xf32> to vector<4x8x1xf32>
    %158 = vector.broadcast %157 : vector<4x8x1xf32> to vector<4x8x16xf32>
    %159 = arith.subf %155, %158 : vector<4x8x16xf32>
    %160 = math.exp %159 : vector<4x8x16xf32>
    %cst_88 = arith.constant dense<0.000000e+00> : vector<4x8xf32>
    %161 = vector.multi_reduction <add>, %160, %cst_88 [2] : vector<4x8x16xf32> to vector<4x8xf32>
    %162 = vector.shape_cast %161 : vector<4x8xf32> to vector<4x8x1xf32>
    %163 = tpu.reciprocal %162 {approx = true} : vector<4x8x1xf32> -> vector<4x8x1xf32>
    %164 = vector.broadcast %163 : vector<4x8x1xf32> to vector<4x8x16xf32>
    %165 = arith.mulf %160, %164 : vector<4x8x16xf32>
    %166 = arith.truncf %165 : vector<4x8x16xf32> to vector<4x8x16xbf16>
    "tpu.trace_start"() <{level = 10 : i32, message = "bqk,bke->bqe"}> : () -> ()
    %cst_89 = arith.constant dense<0.000000e+00> : vector<4x8x16xf32>
    %167 = tpu.matmul %166, %154, %cst_89 {dimension_numbers = #tpu.dot_dimension_numbers<[2], [1], [1], [2], [0, 0, 0, 1, 1, 2], [0], [0]>} : vector<4x8x16xbf16>, vector<4x16x16xbf16>, vector<4x8x16xf32> -> vector<4x8x16xf32>
    "tpu.trace_stop"() : () -> ()
    %c0_90 = arith.constant 0 : index
    %c0_91 = arith.constant 0 : index
    %168 = vector.load %arg12[%c0_90, %c0_91] : memref<32x32xf32, #tpu.memory_space<vmem>>, vector<32x32xf32>
    %169 = arith.truncf %167 : vector<4x8x16xf32> to vector<4x8x16xbf16>
    %170 = vector.shape_cast %169 : vector<4x8x16xbf16> to vector<32x16xbf16>
    %c2_92 = arith.constant 2 : index
    %c0_93 = arith.constant 0 : index
    %c0_94 = arith.constant 0 : index
    %171 = vector.load %arg10[%c2_92, %c0_93, %c0_94] : memref<4x16x32xbf16, #tpu.memory_space<vmem>>, vector<1x16x32xbf16>
    %172 = vector.shape_cast %171 : vector<1x16x32xbf16> to vector<16x32xbf16>
    %cst_95 = arith.constant dense<0.000000e+00> : vector<32x32xf32>
    %173 = tpu.matmul %170, %172, %cst_95 {dimension_numbers = #tpu.dot_dimension_numbers<[1], [0], [0], [1], [0, 0, 1, 1], [], []>} : vector<32x16xbf16>, vector<16x32xbf16>, vector<32x32xf32> -> vector<32x32xf32>
    %174 = arith.addf %168, %173 : vector<32x32xf32>
    %c0_96 = arith.constant 0 : index
    %c0_97 = arith.constant 0 : index
    %175 = vector.load %arg12[%c0_96, %c0_97] : memref<32x32xf32, #tpu.memory_space<vmem>>, vector<32x32xf32>
    tpu.vector_store %arg12[%c0_96, %c0_97], %174 {strides = array<i32>} : memref<32x32xf32, #tpu.memory_space<vmem>>, vector<32x32xf32>,
    %c3 = arith.constant 3 : index
    %c0_98 = arith.constant 0 : index
    %c0_99 = arith.constant 0 : index
    %176 = vector.load %arg7[%c3, %c0_98, %c0_99] : memref<4x32x16xbf16, #tpu.memory_space<vmem>>, vector<1x32x16xbf16>
    %177 = vector.shape_cast %176 : vector<1x32x16xbf16> to vector<32x16xbf16>
    %cst_100 = arith.constant dense<0.000000e+00> : vector<32x16xf32>
    %178 = tpu.matmul %59, %177, %cst_100 {dimension_numbers = #tpu.dot_dimension_numbers<[1], [0], [0], [1], [0, 0, 1, 1], [], []>} : vector<32x32xbf16>, vector<32x16xbf16>, vector<32x16xf32> -> vector<32x16xf32>
    %c3_101 = arith.constant 3 : index
    %c0_102 = arith.constant 0 : index
    %c0_103 = arith.constant 0 : index
    %179 = vector.load %arg8[%c3_101, %c0_102, %c0_103] : memref<4x32x16xbf16, #tpu.memory_space<vmem>>, vector<1x32x16xbf16>
    %180 = vector.shape_cast %179 : vector<1x32x16xbf16> to vector<32x16xbf16>
    %cst_104 = arith.constant dense<0.000000e+00> : vector<64x16xf32>
    %181 = tpu.matmul %32, %180, %cst_104 {dimension_numbers = #tpu.dot_dimension_numbers<[1], [0], [0], [1], [0, 0, 1, 1], [], []>} : vector<64x32xbf16>, vector<32x16xbf16>, vector<64x16xf32> -> vector<64x16xf32>
    %c3_105 = arith.constant 3 : index
    %c0_106 = arith.constant 0 : index
    %c0_107 = arith.constant 0 : index
    %182 = vector.load %arg9[%c3_105, %c0_106, %c0_107] : memref<4x32x16xbf16, #tpu.memory_space<vmem>>, vector<1x32x16xbf16>
    %183 = vector.shape_cast %182 : vector<1x32x16xbf16> to vector<32x16xbf16>
    %cst_108 = arith.constant dense<0.000000e+00> : vector<64x16xf32>
    %184 = tpu.matmul %32, %183, %cst_108 {dimension_numbers = #tpu.dot_dimension_numbers<[1], [0], [0], [1], [0, 0, 1, 1], [], []>} : vector<64x32xbf16>, vector<32x16xbf16>, vector<64x16xf32> -> vector<64x16xf32>
    %cst_109 = arith.constant 2.500000e-01 : f32
    %185 = vector.broadcast %cst_109 : f32 to vector<32x16xf32>
    %186 = arith.mulf %178, %185 : vector<32x16xf32>
    %187 = arith.truncf %186 : vector<32x16xf32> to vector<32x16xbf16>
    %188 = vector.shape_cast %187 : vector<32x16xbf16> to vector<4x8x16xbf16>
    %189 = arith.truncf %181 : vector<64x16xf32> to vector<64x16xbf16>
    %190 = vector.shape_cast %189 : vector<64x16xbf16> to vector<4x16x16xbf16>
    %191 = arith.truncf %184 : vector<64x16xf32> to vector<64x16xbf16>
    %192 = vector.shape_cast %191 : vector<64x16xbf16> to vector<4x16x16xbf16>
    "tpu.trace_start"() <{level = 10 : i32, message = "bqe,bke->bqk"}> : () -> ()
    %cst_110 = arith.constant dense<0.000000e+00> : vector<4x8x16xf32>
    %193 = tpu.matmul %188, %190, %cst_110 {dimension_numbers = #tpu.dot_dimension_numbers<[2], [2], [1], [1], [0, 0, 0, 1, 1, 1], [0], [0]>} : vector<4x8x16xbf16>, vector<4x16x16xbf16>, vector<4x8x16xf32> -> vector<4x8x16xf32>
    "tpu.trace_stop"() : () -> ()
    %cst_111 = arith.constant dense<0xFF800000> : vector<4x8xf32>
    %194 = vector.multi_reduction <maximumf>, %193, %cst_111 [2] : vector<4x8x16xf32> to vector<4x8xf32>
    %195 = vector.shape_cast %194 : vector<4x8xf32> to vector<4x8x1xf32>
    %196 = vector.broadcast %195 : vector<4x8x1xf32> to vector<4x8x16xf32>
    %197 = arith.subf %193, %196 : vector<4x8x16xf32>
    %198 = math.exp %197 : vector<4x8x16xf32>
    %cst_112 = arith.constant dense<0.000000e+00> : vector<4x8xf32>
    %199 = vector.multi_reduction <add>, %198, %cst_112 [2] : vector<4x8x16xf32> to vector<4x8xf32>
    %200 = vector.shape_cast %199 : vector<4x8xf32> to vector<4x8x1xf32>
    %201 = tpu.reciprocal %200 {approx = true} : vector<4x8x1xf32> -> vector<4x8x1xf32>
    %202 = vector.broadcast %201 : vector<4x8x1xf32> to vector<4x8x16xf32>
    %203 = arith.mulf %198, %202 : vector<4x8x16xf32>
    %204 = arith.truncf %203 : vector<4x8x16xf32> to vector<4x8x16xbf16>
    "tpu.trace_start"() <{level = 10 : i32, message = "bqk,bke->bqe"}> : () -> ()
    %cst_113 = arith.constant dense<0.000000e+00> : vector<4x8x16xf32>
    %205 = tpu.matmul %204, %192, %cst_113 {dimension_numbers = #tpu.dot_dimension_numbers<[2], [1], [1], [2], [0, 0, 0, 1, 1, 2], [0], [0]>} : vector<4x8x16xbf16>, vector<4x16x16xbf16>, vector<4x8x16xf32> -> vector<4x8x16xf32>
    "tpu.trace_stop"() : () -> ()
    %c0_114 = arith.constant 0 : index
    %c0_115 = arith.constant 0 : index
    %206 = vector.load %arg12[%c0_114, %c0_115] : memref<32x32xf32, #tpu.memory_space<vmem>>, vector<32x32xf32>
    %207 = arith.truncf %205 : vector<4x8x16xf32> to vector<4x8x16xbf16>
    %208 = vector.shape_cast %207 : vector<4x8x16xbf16> to vector<32x16xbf16>
    %c3_116 = arith.constant 3 : index
    %c0_117 = arith.constant 0 : index
    %c0_118 = arith.constant 0 : index
    %209 = vector.load %arg10[%c3_116, %c0_117, %c0_118] : memref<4x16x32xbf16, #tpu.memory_space<vmem>>, vector<1x16x32xbf16>
    %210 = vector.shape_cast %209 : vector<1x16x32xbf16> to vector<16x32xbf16>
    %cst_119 = arith.constant dense<0.000000e+00> : vector<32x32xf32>
    %211 = tpu.matmul %208, %210, %cst_119 {dimension_numbers = #tpu.dot_dimension_numbers<[1], [0], [0], [1], [0, 0, 1, 1], [], []>} : vector<32x16xbf16>, vector<16x32xbf16>, vector<32x32xf32> -> vector<32x32xf32>
    %212 = arith.addf %206, %211 : vector<32x32xf32>
    %c0_120 = arith.constant 0 : index
    %c0_121 = arith.constant 0 : index
    %213 = vector.load %arg12[%c0_120, %c0_121] : memref<32x32xf32, #tpu.memory_space<vmem>>, vector<32x32xf32>
    tpu.vector_store %arg12[%c0_120, %c0_121], %212 {strides = array<i32>} : memref<32x32xf32, #tpu.memory_space<vmem>>, vector<32x32xf32>,
    %c0_122 = arith.constant 0 : index
    %c0_123 = arith.constant 0 : index
    %214 = vector.load %arg12[%c0_122, %c0_123] : memref<32x32xf32, #tpu.memory_space<vmem>>, vector<32x32xf32>
    %215 = vector.shape_cast %214 : vector<32x32xf32> to vector<4x8x32xf32>
    %216 = arith.truncf %215 : vector<4x8x32xf32> to vector<4x8x32xbf16>
    %c0_124 = arith.constant 0 : index
    %c0_125 = arith.constant 0 : index
    %c0_126 = arith.constant 0 : index
    %217 = vector.load %arg11[%c0_124, %c0_125, %c0_126] : memref<4x8x32xbf16, #tpu.memory_space<vmem>>, vector<4x8x32xbf16>
    tpu.vector_store %arg11[%c0_124, %c0_125, %c0_126], %216 {strides = array<i32>} : memref<4x8x32xbf16, #tpu.memory_space<vmem>>, vector<4x8x32xbf16>,
    return
  }
  func.func @transform_0(%arg0: i32) -> (i32, i32, i32) {
    %c0_i32 = arith.constant 0 : i32
    %c0_i32_0 = arith.constant 0 : i32
    %c0_i32_1 = arith.constant 0 : i32
    return %arg0, %c0_i32, %c0_i32_0 : i32, i32, i32
  }
  func.func @transform_1(%arg0: i32) -> (i32, i32, i32) {
    %c0_i32 = arith.constant 0 : i32
    %c0_i32_0 = arith.constant 0 : i32
    %c0_i32_1 = arith.constant 0 : i32
    return %arg0, %c0_i32, %c0_i32_0 : i32, i32, i32
  }
  func.func @transform_2(%arg0: i32) -> (i32, i32) {
    %c0_i32 = arith.constant 0 : i32
    %c0_i32_0 = arith.constant 0 : i32
    %c0_i32_1 = arith.constant 0 : i32
    return %c0_i32, %c0_i32_0 : i32, i32
  }
  func.func @transform_3(%arg0: i32) -> (i32, i32) {
    %c0_i32 = arith.constant 0 : i32
    %c0_i32_0 = arith.constant 0 : i32
    %c0_i32_1 = arith.constant 0 : i32
    return %c0_i32, %c0_i32_0 : i32, i32
  }
  func.func @transform_4(%arg0: i32) -> (i32, i32) {
    %c0_i32 = arith.constant 0 : i32
    %c0_i32_0 = arith.constant 0 : i32
    %c0_i32_1 = arith.constant 0 : i32
    return %c0_i32, %c0_i32_0 : i32, i32
  }
  func.func @transform_5(%arg0: i32) -> (i32, i32) {
    %c0_i32 = arith.constant 0 : i32
    %c0_i32_0 = arith.constant 0 : i32
    %c0_i32_1 = arith.constant 0 : i32
    return %c0_i32, %c0_i32_0 : i32, i32
  }
  func.func @transform_6(%arg0: i32) -> (i32, i32, i32) {
    %c0_i32 = arith.constant 0 : i32
    %c0_i32_0 = arith.constant 0 : i32
    %c0_i32_1 = arith.constant 0 : i32
    %c0_i32_2 = arith.constant 0 : i32
    return %c0_i32, %c0_i32_0, %c0_i32_1 : i32, i32, i32
  }
  func.func @transform_7(%arg0: i32) -> (i32, i32, i32) {
    %c0_i32 = arith.constant 0 : i32
    %c0_i32_0 = arith.constant 0 : i32
    %c0_i32_1 = arith.constant 0 : i32
    %c0_i32_2 = arith.constant 0 : i32
    return %c0_i32, %c0_i32_0, %c0_i32_1 : i32, i32, i32
  }
  func.func @transform_8(%arg0: i32) -> (i32, i32, i32) {
    %c0_i32 = arith.constant 0 : i32
    %c0_i32_0 = arith.constant 0 : i32
    %c0_i32_1 = arith.constant 0 : i32
    %c0_i32_2 = arith.constant 0 : i32
    return %c0_i32, %c0_i32_0, %c0_i32_1 : i32, i32, i32
  }
  func.func @transform_9(%arg0: i32) -> (i32, i32, i32) {
    %c0_i32 = arith.constant 0 : i32
    %c0_i32_0 = arith.constant 0 : i32
    %c0_i32_1 = arith.constant 0 : i32
    %c0_i32_2 = arith.constant 0 : i32
    return %c0_i32, %c0_i32_0, %c0_i32_1 : i32, i32, i32
  }
  func.func @transform_10(%arg0: i32) -> (i32, i32, i32) {
    %c0_i32 = arith.constant 0 : i32
    %c0_i32_0 = arith.constant 0 : i32
    %c0_i32_1 = arith.constant 0 : i32
    return %arg0, %c0_i32, %c0_i32_0 : i32, i32, i32
  }
}

</mosaic_0001>

<llo_original>
// kernel: tpu_custom_call.1
$region0: #{tpu_custom_call.1}
  #allocation0 [shape = 'u32[]', space=smem, size = 0x4, offset = 0x4, fixed_abs, tag = 'smem constant byte address 0x4 - core index']
  #allocation1 [shape = 'u32[144,128]{1,0:T(1,128)}', space=vmem, size = 0x12000, scoped, tag = 'internal scratch']
  #allocation2 [shape = 'f32[32,32]{1,0:T(8,128)}', space=vmem, size = 0x4000, scoped, tag = 'scratch operand']
  %s0 = inlined_call_operand.vmem [shape: bf16[8,16,32], index: 0, kind: input, shape index: {}]
  %s1 = inlined_call_operand.vmem [shape: bf16[8,8,32], index: 1, kind: input, shape index: {}]
  %s2 = inlined_call_operand.vmem [shape: bf16[1,32], index: 2, kind: input, shape index: {}]
  %s3 = inlined_call_operand.vmem [shape: bf16[1,32], index: 3, kind: input, shape index: {}]
  %s4 = inlined_call_operand.vmem [shape: bf16[1,32], index: 4, kind: input, shape index: {}]
  %s5 = inlined_call_operand.vmem [shape: bf16[1,32], index: 5, kind: input, shape index: {}]
  %s6 = inlined_call_operand.vmem [shape: bf16[4,32,16], index: 6, kind: input, shape index: {}]
  %s7 = inlined_call_operand.vmem [shape: bf16[4,32,16], index: 7, kind: input, shape index: {}]
  %s8 = inlined_call_operand.vmem [shape: bf16[4,32,16], index: 8, kind: input, shape index: {}]
  %s9 = inlined_call_operand.vmem [shape: bf16[4,16,32], index: 9, kind: input, shape index: {}]
  %s10 = inlined_call_operand.hbm [shape: bf16[8,8,32], index: 10, kind: output, shape index: {}]
  %s11 = sld [smem:[#allocation0]]
  $region73: #{tpu_custom_call.1} parent=0
    _
  %s13 = ssub.s32 1, %s11
  %s14 = scalar_select 0, %s13, %s11
  $region1: #{tpu_custom_call.1} parent=0
    #allocation3 [shape = 'u8[16384]{0}', space=vmem, size = 0x4000, scoped, tag = 'output window, operand 0']
    #allocation4 [shape = 's32[2]{0}', space=sflag, size = 0x8, scoped, tag = 'scoped memory for tpu_custom_call.1']
    %15 = vsyncpa [#allocation4], 0
    %s16 = scalar_lea.sflag [#allocation4], 1
    %17 = vsyncpa %s16, 0
    loop: start=0, step=1, limit=4
    $region2: #{tpu_custom_call.1} parent=1 // loop_pre_header
      _
    $region3: #{tpu_custom_call.1} parent=1 // loop_header
      %s19 = sphi 0, %s23
      %p20 = scmp.ge.s32.totalorder %s19, 4
      %s29 = sphi 0, %s31
      %s32 = sphi 0, %s29
      %s33 = sphi 0, %s32
      %s49 = sphi 0, %s33
      %s55 = sphi 0, %s57
      %s58 = sphi 0, %s55
      %s59 = sphi 0, %s58
      %s75 = sphi 0, %s59
      %s79 = sphi 0, %s79
      %s81 = sphi 0, %s79
      %s82 = sphi 0, %s81
      %s96 = sphi 0, %s82
      %s100 = sphi 0, %s100
      %s102 = sphi 0, %s100
      %s103 = sphi 0, %s102
      %s117 = sphi 0, %s103
      %s121 = sphi 0, %s121
      %s123 = sphi 0, %s121
      %s124 = sphi 0, %s123
      %s138 = sphi 0, %s124
      %s142 = sphi 0, %s142
      %s144 = sphi 0, %s142
      %s145 = sphi 0, %s144
      %s159 = sphi 0, %s145
      %s163 = sphi 0, %s163
      %s165 = sphi 0, %s163
      %s166 = sphi 0, %s165
      %s180 = sphi 0, %s166
      %s184 = sphi 0, %s184
      %s186 = sphi 0, %s184
      %s187 = sphi 0, %s186
      %s201 = sphi 0, %s187
      %s205 = sphi 0, %s205
      %s207 = sphi 0, %s205
      %s208 = sphi 0, %s207
      %s222 = sphi 0, %s208
      %s226 = sphi 0, %s226
      %s228 = sphi 0, %s226
      %s229 = sphi 0, %s228
      %s243 = sphi 0, %s229
      %s249 = sphi 0, %s251
      %s252 = sphi 0, %s249
      %s253 = sphi 0, %s252
      %s269 = sphi 0, %s253
    $region4: #{tpu_custom_call.1} parent=1 // loop_header_branch
      %22 = sbr.rel (%p20) target = $region8
    $region5: #{tpu_custom_call.1} parent=1 // loop_body
      %s24 = ssub.s32 %s19, 1
      %s25 = ssub.s32 %s19, 2
      %s26 = sadd.s32 %s19, 1
      %s27 = ssub.s32 %s19, %s26
      %p28 = scmp.eq.s32.totalorder %s27, 0
      %s30 = sadd.s32 %s29, 1
      %s31 = scalar_select %p28, %s29, %s30
      %p34 = pneg %p28
      %p35 = scmp.eq.s32.totalorder %s19, 1
      %p36 = por %p34, %p35
      %p37 = scmp.ne.s32.totalorder %s29, %s32
      %p38 = scmp.eq.s32.totalorder %s19, 0
      %p39 = por %p37, %p38
      %p40 = scmp.ne.s32.totalorder %s29, %s32
      %p41 = scmp.eq.s32.totalorder %s24, 1
      %p42 = por %p40, %p41
      %p43 = scmp.ne.s32.totalorder %s32, %s33
      %p44 = scmp.eq.s32.totalorder %s24, 0
      %p45 = por %p43, %p44
      %p46 = scmp.ne.s32.totalorder %s32, %s33
      %p47 = scmp.eq.s32.totalorder %s25, 1
      %p48 = por %p46, %p47
      %p50 = scmp.ne.s32.totalorder %s33, %s49
      %p51 = scmp.eq.s32.totalorder %s25, 0
      %p52 = por %p50, %p51
      %s53 = ssub.s32 %s19, %s26
      %p54 = scmp.eq.s32.totalorder %s53, 0
      %s56 = sadd.s32 %s55, 1
      %s57 = scalar_select %p54, %s55, %s56
      %p60 = pneg %p54
      %p61 = scmp.eq.s32.totalorder %s19, 1
      %p62 = por %p60, %p61
      %p63 = scmp.ne.s32.totalorder %s55, %s58
      %p64 = scmp.eq.s32.totalorder %s19, 0
      %p65 = por %p63, %p64
      %p66 = scmp.ne.s32.totalorder %s55, %s58
      %p67 = scmp.eq.s32.totalorder %s24, 1
      %p68 = por %p66, %p67
      %p69 = scmp.ne.s32.totalorder %s58, %s59
      %p70 = scmp.eq.s32.totalorder %s24, 0
      %p71 = por %p69, %p70
      %p72 = scmp.ne.s32.totalorder %s58, %s59
      %p73 = scmp.eq.s32.totalorder %s25, 1
      %p74 = por %p72, %p73
      %p76 = scmp.ne.s32.totalorder %s59, %s75
      %p77 = scmp.eq.s32.totalorder %s25, 0
      %p78 = por %p76, %p77
      %s80 = sadd.s32 %s79, 1
      %p83 = scmp.eq.s32.totalorder %s19, 1
      %p84 = scmp.ne.s32.totalorder %s79, %s81
      %p85 = scmp.eq.s32.totalorder %s19, 0
      %p86 = por %p84, %p85
      %p87 = scmp.ne.s32.totalorder %s79, %s81
      %p88 = scmp.eq.s32.totalorder %s24, 1
      %p89 = por %p87, %p88
      %p90 = scmp.ne.s32.totalorder %s81, %s82
      %p91 = scmp.eq.s32.totalorder %s24, 0
      %p92 = por %p90, %p91
      %p93 = scmp.ne.s32.totalorder %s81, %s82
      %p94 = scmp.eq.s32.totalorder %s25, 1
      %p95 = por %p93, %p94
      %p97 = scmp.ne.s32.totalorder %s82, %s96
      %p98 = scmp.eq.s32.totalorder %s25, 0
      %p99 = por %p97, %p98
      %s101 = sadd.s32 %s100, 1
      %p104 = scmp.eq.s32.totalorder %s19, 1
      %p105 = scmp.ne.s32.totalorder %s100, %s102
      %p106 = scmp.eq.s32.totalorder %s19, 0
      %p107 = por %p105, %p106
      %p108 = scmp.ne.s32.totalorder %s100, %s102
      %p109 = scmp.eq.s32.totalorder %s24, 1
      %p110 = por %p108, %p109
      %p111 = scmp.ne.s32.totalorder %s102, %s103
      %p112 = scmp.eq.s32.totalorder %s24, 0
      %p113 = por %p111, %p112
      %p114 = scmp.ne.s32.totalorder %s102, %s103
      %p115 = scmp.eq.s32.totalorder %s25, 1
      %p116 = por %p114, %p115
      %p118 = scmp.ne.s32.totalorder %s103, %s117
      %p119 = scmp.eq.s32.totalorder %s25, 0
      %p120 = por %p118, %p119
      %s122 = sadd.s32 %s121, 1
      %p125 = scmp.eq.s32.totalorder %s19, 1
      %p126 = scmp.ne.s32.totalorder %s121, %s123
      %p127 = scmp.eq.s32.totalorder %s19, 0
      %p128 = por %p126, %p127
      %p129 = scmp.ne.s32.totalorder %s121, %s123
      %p130 = scmp.eq.s32.totalorder %s24, 1
      %p131 = por %p129, %p130
      %p132 = scmp.ne.s32.totalorder %s123, %s124
      %p133 = scmp.eq.s32.totalorder %s24, 0
      %p134 = por %p132, %p133
      %p135 = scmp.ne.s32.totalorder %s123, %s124
      %p136 = scmp.eq.s32.totalorder %s25, 1
      %p137 = por %p135, %p136
      %p139 = scmp.ne.s32.totalorder %s124, %s138
      %p140 = scmp.eq.s32.totalorder %s25, 0
      %p141 = por %p139, %p140
      %s143 = sadd.s32 %s142, 1
      %p146 = scmp.eq.s32.totalorder %s19, 1
      %p147 = scmp.ne.s32.totalorder %s142, %s144
      %p148 = scmp.eq.s32.totalorder %s19, 0
      %p149 = por %p147, %p148
      %p150 = scmp.ne.s32.totalorder %s142, %s144
      %p151 = scmp.eq.s32.totalorder %s24, 1
      %p152 = por %p150, %p151
      %p153 = scmp.ne.s32.totalorder %s144, %s145
      %p154 = scmp.eq.s32.totalorder %s24, 0
      %p155 = por %p153, %p154
      %p156 = scmp.ne.s32.totalorder %s144, %s145
      %p157 = scmp.eq.s32.totalorder %s25, 1
      %p158 = por %p156, %p157
      %p160 = scmp.ne.s32.totalorder %s145, %s159
      %p161 = scmp.eq.s32.totalorder %s25, 0
      %p162 = por %p160, %p161
      %s164 = sadd.s32 %s163, 1
      %p167 = scmp.eq.s32.totalorder %s19, 1
      %p168 = scmp.ne.s32.totalorder %s163, %s165
      %p169 = scmp.eq.s32.totalorder %s19, 0
      %p170 = por %p168, %p169
      %p171 = scmp.ne.s32.totalorder %s163, %s165
      %p172 = scmp.eq.s32.totalorder %s24, 1
      %p173 = por %p171, %p172
      %p174 = scmp.ne.s32.totalorder %s165, %s166
      %p175 = scmp.eq.s32.totalorder %s24, 0
      %p176 = por %p174, %p175
      %p177 = scmp.ne.s32.totalorder %s165, %s166
      %p178 = scmp.eq.s32.totalorder %s25, 1
      %p179 = por %p177, %p178
      %p181 = scmp.ne.s32.totalorder %s166, %s180
      %p182 = scmp.eq.s32.totalorder %s25, 0
      %p183 = por %p181, %p182
      %s185 = sadd.s32 %s184, 1
      %p188 = scmp.eq.s32.totalorder %s19, 1
      %p189 = scmp.ne.s32.totalorder %s184, %s186
      %p190 = scmp.eq.s32.totalorder %s19, 0
      %p191 = por %p189, %p190
      %p192 = scmp.ne.s32.totalorder %s184, %s186
      %p193 = scmp.eq.s32.totalorder %s24, 1
      %p194 = por %p192, %p193
      %p195 = scmp.ne.s32.totalorder %s186, %s187
      %p196 = scmp.eq.s32.totalorder %s24, 0
      %p197 = por %p195, %p196
      %p198 = scmp.ne.s32.totalorder %s186, %s187
      %p199 = scmp.eq.s32.totalorder %s25, 1
      %p200 = por %p198, %p199
      %p202 = scmp.ne.s32.totalorder %s187, %s201
      %p203 = scmp.eq.s32.totalorder %s25, 0
      %p204 = por %p202, %p203
      %s206 = sadd.s32 %s205, 1
      %p209 = scmp.eq.s32.totalorder %s19, 1
      %p210 = scmp.ne.s32.totalorder %s205, %s207
      %p211 = scmp.eq.s32.totalorder %s19, 0
      %p212 = por %p210, %p211
      %p213 = scmp.ne.s32.totalorder %s205, %s207
      %p214 = scmp.eq.s32.totalorder %s24, 1
      %p215 = por %p213, %p214
      %p216 = scmp.ne.s32.totalorder %s207, %s208
      %p217 = scmp.eq.s32.totalorder %s24, 0
      %p218 = por %p216, %p217
      %p219 = scmp.ne.s32.totalorder %s207, %s208
      %p220 = scmp.eq.s32.totalorder %s25, 1
      %p221 = por %p219, %p220
      %p223 = scmp.ne.s32.totalorder %s208, %s222
      %p224 = scmp.eq.s32.totalorder %s25, 0
      %p225 = por %p223, %p224
      %s227 = sadd.s32 %s226, 1
      %p230 = scmp.eq.s32.totalorder %s19, 1
      %p231 = scmp.ne.s32.totalorder %s226, %s228
      %p232 = scmp.eq.s32.totalorder %s19, 0
      %p233 = por %p231, %p232
      %p234 = scmp.ne.s32.totalorder %s226, %s228
      %p235 = scmp.eq.s32.totalorder %s24, 1
      %p236 = por %p234, %p235
      %p237 = scmp.ne.s32.totalorder %s228, %s229
      %p238 = scmp.eq.s32.totalorder %s24, 0
      %p239 = por %p237, %p238
      %p240 = scmp.ne.s32.totalorder %s228, %s229
      %p241 = scmp.eq.s32.totalorder %s25, 1
      %p242 = por %p240, %p241
      %p244 = scmp.ne.s32.totalorder %s229, %s243
      %p245 = scmp.eq.s32.totalorder %s25, 0
      %p246 = por %p244, %p245
      %s247 = ssub.s32 %s19, %s26
      %p248 = scmp.eq.s32.totalorder %s247, 0
      %s250 = sadd.s32 %s249, 1
      %s251 = scalar_select %p248, %s249, %s250
      %p254 = pneg %p248
      %p255 = scmp.eq.s32.totalorder %s19, 1
      %p256 = por %p254, %p255
      %p257 = scmp.ne.s32.totalorder %s249, %s252
      %p258 = scmp.eq.s32.totalorder %s19, 0
      %p259 = por %p257, %p258
      %p260 = scmp.ne.s32.totalorder %s249, %s252
      %p261 = scmp.eq.s32.totalorder %s24, 1
      %p262 = por %p260, %p261
      %p263 = scmp.ne.s32.totalorder %s252, %s253
      %p264 = scmp.eq.s32.totalorder %s24, 0
      %p265 = por %p263, %p264
      %p266 = scmp.ne.s32.totalorder %s252, %s253
      %p267 = scmp.eq.s32.totalorder %s25, 1
      %p268 = por %p266, %p267
      %p270 = scmp.ne.s32.totalorder %s253, %s269
      %p271 = scmp.eq.s32.totalorder %s25, 0
      %p272 = por %p270, %p271
      %p273 = scmp.le.s32.totalorder 1, %s19
      %p274 = scmp.lt.s32.totalorder %s19, 3
      %p275 = pnand %p273, %p274
      %p276 = pneg %p275
      // Predicated region
      $region9: #{tpu_custom_call.1} parent=5 // pred_check
        _
      $region10: #{tpu_custom_call.1} parent=5 // pred_check_branch
        %278 = sbr.rel (%p275) target = $region12
      $region11: #{tpu_custom_call.1} parent=5 // pred_region
        %s279 = ssub.s32 %s19, 1
        // Predicated region
        $region13: #{tpu_custom_call.1} parent=11 // pred_check
          %p280 = pneg %p92
        $region14: #{tpu_custom_call.1} parent=11 // pred_check_branch
          %282 = sbr.rel (%p280) target = $region16
        $region15: #{tpu_custom_call.1} parent=11 // pred_region
          _
        $region16: #{tpu_custom_call.1} parent=11 // pred_fallthru
          _
        // Predicated region
        $region17: #{tpu_custom_call.1} parent=11 // pred_check
          %p283 = pneg %p113
        $region18: #{tpu_custom_call.1} parent=11 // pred_check_branch
          %285 = sbr.rel (%p283) target = $region20
        $region19: #{tpu_custom_call.1} parent=11 // pred_region
          _
        $region20: #{tpu_custom_call.1} parent=11 // pred_fallthru
          _
        // Predicated region
        $region21: #{tpu_custom_call.1} parent=11 // pred_check
          %p286 = pneg %p134
        $region22: #{tpu_custom_call.1} parent=11 // pred_check_branch
          %288 = sbr.rel (%p286) target = $region24
        $region23: #{tpu_custom_call.1} parent=11 // pred_region
          _
        $region24: #{tpu_custom_call.1} parent=11 // pred_fallthru
          _
        // Predicated region
        $region25: #{tpu_custom_call.1} parent=11 // pred_check
          %p289 = pneg %p155
        $region26: #{tpu_custom_call.1} parent=11 // pred_check_branch
          %291 = sbr.rel (%p289) target = $region28
        $region27: #{tpu_custom_call.1} parent=11 // pred_region
          _
        $region28: #{tpu_custom_call.1} parent=11 // pred_fallthru
          _
        // Predicated region
        $region29: #{tpu_custom_call.1} parent=11 // pred_check
          %p292 = pneg %p176
        $region30: #{tpu_custom_call.1} parent=11 // pred_check_branch
          %294 = sbr.rel (%p292) target = $region32
        $region31: #{tpu_custom_call.1} parent=11 // pred_region
          _
        $region32: #{tpu_custom_call.1} parent=11 // pred_fallthru
          _
        // Predicated region
        $region33: #{tpu_custom_call.1} parent=11 // pred_check
          %p295 = pneg %p197
        $region34: #{tpu_custom_call.1} parent=11 // pred_check_branch
          %297 = sbr.rel (%p295) target = $region36
        $region35: #{tpu_custom_call.1} parent=11 // pred_region
          _
        $region36: #{tpu_custom_call.1} parent=11 // pred_fallthru
          _
        // Predicated region
        $region37: #{tpu_custom_call.1} parent=11 // pred_check
          %p298 = pneg %p218
        $region38: #{tpu_custom_call.1} parent=11 // pred_check_branch
          %300 = sbr.rel (%p298) target = $region40
        $region39: #{tpu_custom_call.1} parent=11 // pred_region
          _
        $region40: #{tpu_custom_call.1} parent=11 // pred_fallthru
          _
        // Predicated region
        $region41: #{tpu_custom_call.1} parent=11 // pred_check
          %p301 = pneg %p239
        $region42: #{tpu_custom_call.1} parent=11 // pred_check_branch
          %303 = sbr.rel (%p301) target = $region44
        $region43: #{tpu_custom_call.1} parent=11 // pred_region
          _
        $region44: #{tpu_custom_call.1} parent=11 // pred_fallthru
          _
      $region12: #{tpu_custom_call.1} parent=5 // pred_fallthru
        _
      %p304 = scmp.lt.s32.totalorder %s19, 2
      // Predicated region
      $region45: #{tpu_custom_call.1} parent=5 // pred_check
        %p305 = pneg %p304
      $region46: #{tpu_custom_call.1} parent=5 // pred_check_branch
        %307 = sbr.rel (%p305) target = $region48
      $region47: #{tpu_custom_call.1} parent=5 // pred_region
        // Predicated region
        $region49: #{tpu_custom_call.1} parent=47 // pred_check
          %p308 = pneg %p39
        $region50: #{tpu_custom_call.1} parent=47 // pred_check_branch
          %310 = sbr.rel (%p308) target = $region52
        $region51: #{tpu_custom_call.1} parent=47 // pred_region
          %s311 = smul.u32 4, %s19
          %p312 = scmp.lt.s32.totalorder %s311, 7
          %s313 = scalar_select %p312, %s311, 7
          %s314 = smul.addr %s313, 2
          %s315 = smul.addr %s314, 4
          %s316 = scalar_lea.vmem %s0, %s315
          %s317 = smul.u32 4, %s19
        $region52: #{tpu_custom_call.1} parent=47 // pred_fallthru
          _
        // Predicated region
        $region53: #{tpu_custom_call.1} parent=47 // pred_check
          %p318 = pneg %p65
        $region54: #{tpu_custom_call.1} parent=47 // pred_check_branch
          %320 = sbr.rel (%p318) target = $region56
        $region55: #{tpu_custom_call.1} parent=47 // pred_region
          %s321 = smul.u32 4, %s19
          %p322 = scmp.lt.s32.totalorder %s321, 7
          %s323 = scalar_select %p322, %s321, 7
          %s324 = smul.addr %s323, 4
          %s325 = scalar_lea.vmem %s1, %s324
          %s326 = smul.u32 4, %s19
        $region56: #{tpu_custom_call.1} parent=47 // pred_fallthru
          _
      $region48: #{tpu_custom_call.1} parent=5 // pred_fallthru
        _
      %p327 = scmp.le.s32.totalorder 1, %s19
      %p328 = scmp.lt.s32.totalorder %s19, 3
      %p329 = pnand %p327, %p328
      %p330 = pneg %p329
      // Predicated region
      $region57: #{tpu_custom_call.1} parent=5 // pred_check
        _
      $region58: #{tpu_custom_call.1} parent=5 // pred_check_branch
        %332 = sbr.rel (%p329) target = $region60
      $region59: #{tpu_custom_call.1} parent=5 // pred_region
        %s333 = ssub.s32 %s19, 1
        %s334 = smul.u32 4, %s24
        %p335 = scmp.lt.s32.totalorder %s334, 7
        %s336 = scalar_select %p335, %s334, 7
        %s337 = smul.addr %s336, 2
        %s338 = smul.addr %s337, 4
        %s339 = scalar_lea.vmem %s0, %s338
        %p340 = pneg %p45
        %p341 = pneg %p42
        %s342 = smul.u32 4, %s24
        %p343 = scmp.lt.s32.totalorder %s342, 7
        %s344 = scalar_select %p343, %s342, 7
        %s345 = smul.addr %s344, 4
        %s346 = scalar_lea.vmem %s1, %s345
        %p347 = pneg %p71
        %p348 = pneg %p68
        %p349 = pneg %p92
        %p350 = pneg %p89
        %p351 = pneg %p113
        %p352 = pneg %p110
        %p353 = pneg %p134
        %p354 = pneg %p131
        %p355 = pneg %p155
        %p356 = pneg %p152
        %p357 = pneg %p176
        %p358 = pneg %p173
        %p359 = pneg %p197
        %p360 = pneg %p194
        %p361 = pneg %p218
        %p362 = pneg %p215
        %p363 = pneg %p239
        %p364 = pneg %p236
        %p365 = pneg %p265
        %p366 = pneg %p262
        %s367 = sand.u32 %s252, 1
        %s368 = scalar_lea.sflag [#allocation4], %s367
        %s369 = sand.u32 %s252, 1
        %s370 = smul.addr %s369, 16
        %s371 = scalar_lea.vmem [#allocation3], %s370
        %s372 = smul.u32 4, %s24
        %p373 = scmp.lt.s32.totalorder %s372, 7
        %s374 = scalar_select %p373, %s372, 7
        %s375 = smul.addr %s374, 2
        %s376 = smul.addr %s375, 4
        %s377 = scalar_lea.vmem %s0, %s376
        %s378 = smul.u32 4, %s24
        %s379 = smul.u32 4, %s24
        %p380 = scmp.lt.s32.totalorder %s379, 7
        %s381 = scalar_select %p380, %s379, 7
        %s382 = smul.addr %s381, 4
        %s383 = scalar_lea.vmem %s1, %s382
        %s384 = smul.u32 4, %s24
        %s385 = smul.u32 4, %s24
        %v387 = vld [vmem:[%s377] sm:$0xf]
        %v388 = vld [vmem:[%s377 + $0x4] sm:$0xf]
        %v389 = vld [vmem:[%s377 + $0x8] sm:$0xf]
        %v390 = vld [vmem:[%s377 + $0xc] sm:$0xf]
        %v391 = vld [vmem:[%s377 + $0x10] sm:$0xf]
        %v392 = vld [vmem:[%s377 + $0x14] sm:$0xf]
        %v393 = vld [vmem:[%s377 + $0x18] sm:$0xf]
        %v394 = vld [vmem:[%s377 + $0x1c] sm:$0xf]
        %v395 = vunpack.c.l.bf16 %v387
        %v396 = vunpack.c.l.bf16 %v388
        %v397 = vunpack.c.l.bf16 %v389
        %v398 = vunpack.c.l.bf16 %v390
        %v399 = vunpack.c.l.bf16 %v391
        %v400 = vunpack.c.l.bf16 %v392
        %v401 = vunpack.c.l.bf16 %v393
        %v402 = vunpack.c.l.bf16 %v394
        %v403 = vld [vmem:[%s383] sm:$0xf]
        %v404 = vld [vmem:[%s383 + $0x4] sm:$0xf]
        %v405 = vld [vmem:[%s383 + $0x8] sm:$0xf]
        %v406 = vld [vmem:[%s383 + $0xc] sm:$0xf]
        %v407 = vunpack.c.l.bf16 %v403
        %v408 = vunpack.c.l.bf16 %v404
        %v409 = vunpack.c.l.bf16 %v405
        %v410 = vunpack.c.l.bf16 %v406
        %v411 = vld [vmem:[%s2] sm:$0x1]
        %v412 = vunpack.c.l.bf16 %v411
        %v413 = vld [vmem:[%s3] sm:$0x1]
        %v414 = vunpack.c.l.bf16 %v413
        %vm415 = vcmask 261120
        %v416 = vsel %vm415, %v395, 0.0
        %417 = vadd.xlane.f32.xlu0 %v416
        %v418 = vpop.xlane.xlu0 %417
        %v419 = vsel %vm415, %v396, 0.0
        %420 = vadd.xlane.f32.xlu0 %v419
        %v421 = vpop.xlane.xlu0 %420
        %v422 = vsel %vm415, %v397, 0.0
        %423 = vadd.xlane.f32.xlu0 %v422
        %v424 = vpop.xlane.xlu0 %423
        %v425 = vsel %vm415, %v398, 0.0
        %426 = vadd.xlane.f32.xlu0 %v425
        %v427 = vpop.xlane.xlu0 %426
        %v428 = vsel %vm415, %v399, 0.0
        %429 = vadd.xlane.f32.xlu0 %v428
        %v430 = vpop.xlane.xlu0 %429
        %v431 = vsel %vm415, %v400, 0.0
        %432 = vadd.xlane.f32.xlu0 %v431
        %v433 = vpop.xlane.xlu0 %432
        %v434 = vsel %vm415, %v401, 0.0
        %435 = vadd.xlane.f32.xlu0 %v434
        %v436 = vpop.xlane.xlu0 %435
        %v437 = vsel %vm415, %v402, 0.0
        %438 = vadd.xlane.f32.xlu0 %v437
        %v439 = vpop.xlane.xlu0 %438
        %v440 = vrcp.pop 32.0
        %v441 = vmul.f32 %v418, %v440
        %v442 = vmul.f32 %v421, %v440
        %v443 = vmul.f32 %v424, %v440
        %v444 = vmul.f32 %v427, %v440
        %v445 = vmul.f32 %v430, %v440
        %v446 = vmul.f32 %v433, %v440
        %v447 = vmul.f32 %v436, %v440
        %v448 = vmul.f32 %v439, %v440
        %v449 = vsub.f32 %v395, %v441
        %v450 = vsub.f32 %v396, %v442
        %v451 = vsub.f32 %v397, %v443
        %v452 = vsub.f32 %v398, %v444
        %v453 = vsub.f32 %v399, %v445
        %v454 = vsub.f32 %v400, %v446
        %v455 = vsub.f32 %v401, %v447
        %v456 = vsub.f32 %v402, %v448
        %v457 = vmul.f32 %v449, %v449
        %v458 = vmul.f32 %v450, %v450
        %v459 = vmul.f32 %v451, %v451
        %v460 = vmul.f32 %v452, %v452
        %v461 = vmul.f32 %v453, %v453
        %v462 = vmul.f32 %v454, %v454
        %v463 = vmul.f32 %v455, %v455
        %v464 = vmul.f32 %v456, %v456
        %v465 = vsel %vm415, %v457, 0.0
        %466 = vadd.xlane.f32.xlu0 %v465
        %v467 = vpop.xlane.xlu0 %466
        %v468 = vsel %vm415, %v458, 0.0
        %469 = vadd.xlane.f32.xlu0 %v468
        %v470 = vpop.xlane.xlu0 %469
        %v471 = vsel %vm415, %v459, 0.0
        %472 = vadd.xlane.f32.xlu0 %v471
        %v473 = vpop.xlane.xlu0 %472
        %v474 = vsel %vm415, %v460, 0.0
        %475 = vadd.xlane.f32.xlu0 %v474
        %v476 = vpop.xlane.xlu0 %475
        %v477 = vsel %vm415, %v461, 0.0
        %478 = vadd.xlane.f32.xlu0 %v477
        %v479 = vpop.xlane.xlu0 %478
        %v480 = vsel %vm415, %v462, 0.0
        %481 = vadd.xlane.f32.xlu0 %v480
        %v482 = vpop.xlane.xlu0 %481
        %v483 = vsel %vm415, %v463, 0.0
        %484 = vadd.xlane.f32.xlu0 %v483
        %v485 = vpop.xlane.xlu0 %484
        %v486 = vsel %vm415, %v464, 0.0
        %487 = vadd.xlane.f32.xlu0 %v486
        %v488 = vpop.xlane.xlu0 %487
        %v489 = vmul.f32 %v467, %v440
        %v490 = vmul.f32 %v470, %v440
        %v491 = vmul.f32 %v473, %v440
        %v492 = vmul.f32 %v476, %v440
        %v493 = vmul.f32 %v479, %v440
        %v494 = vmul.f32 %v482, %v440
        %v495 = vmul.f32 %v485, %v440
        %v496 = vmul.f32 %v488, %v440
        %v497 = vadd.f32 %v489, 1e-05
        %v498 = vadd.f32 %v490, 1e-05
        %v499 = vadd.f32 %v491, 1e-05
        %v500 = vadd.f32 %v492, 1e-05
        %v501 = vadd.f32 %v493, 1e-05
        %v502 = vadd.f32 %v494, 1e-05
        %v503 = vadd.f32 %v495, 1e-05
        %v504 = vadd.f32 %v496, 1e-05
        %v505 = vrsqrt.pop %v497
        %v506 = vrsqrt.pop %v498
        %v507 = vrsqrt.pop %v499
        %v508 = vrsqrt.pop %v500
        %v509 = vrsqrt.pop %v501
        %v510 = vrsqrt.pop %v502
        %v511 = vrsqrt.pop %v503
        %v512 = vrsqrt.pop %v504
        %v513 = vmul.f32 %v449, %v505
        %v514 = vmul.f32 %v450, %v506
        %v515 = vmul.f32 %v451, %v507
        %v516 = vmul.f32 %v452, %v508
        %v517 = vmul.f32 %v453, %v509
        %v518 = vmul.f32 %v454, %v510
        %v519 = vmul.f32 %v455, %v511
        %v520 = vmul.f32 %v456, %v512
        %v521 = vlaneseq
        %v522 = vshrl.u32 %v521, 7
        %v523 = vsub.s32 0, %v522
        %v524 = vrot.slane %v412, %v523
        %v525 = vmul.f32 %v513, %v524
        %v526 = vmul.f32 %v514, %v524
        %v527 = vmul.f32 %v515, %v524
        %v528 = vmul.f32 %v516, %v524
        %v529 = vmul.f32 %v517, %v524
        %v530 = vmul.f32 %v518, %v524
        %v531 = vmul.f32 %v519, %v524
        %v532 = vmul.f32 %v520, %v524
        %v533 = vlaneseq
        %v534 = vshrl.u32 %v533, 7
        %v535 = vsub.s32 0, %v534
        %v536 = vrot.slane %v414, %v535
        %v537 = vadd.f32 %v525, %v536
        %v538 = vadd.f32 %v526, %v536
        %v539 = vadd.f32 %v527, %v536
        %v540 = vadd.f32 %v528, %v536
        %v541 = vadd.f32 %v529, %v536
        %v542 = vadd.f32 %v530, %v536
        %v543 = vadd.f32 %v531, %v536
        %v544 = vadd.f32 %v532, %v536
        %v545 = vpack.c.bf16 %v538, %v537
        %v546 = vpack.c.bf16 %v540, %v539
        %v547 = vpack.c.bf16 %v542, %v541
        %v548 = vpack.c.bf16 %v544, %v543
        %v549 = vld [vmem:[%s4] sm:$0x1]
        %v550 = vunpack.c.l.bf16 %v549
        %v551 = vld [vmem:[%s5] sm:$0x1]
        %v552 = vunpack.c.l.bf16 %v551
        %v553 = vsel %vm415, %v407, 0.0
        %554 = vadd.xlane.f32.xlu0 %v553
        %v555 = vpop.xlane.xlu0 %554
        %v556 = vsel %vm415, %v408, 0.0
        %557 = vadd.xlane.f32.xlu0 %v556
        %v558 = vpop.xlane.xlu0 %557
        %v559 = vsel %vm415, %v409, 0.0
        %560 = vadd.xlane.f32.xlu0 %v559
        %v561 = vpop.xlane.xlu0 %560
        %v562 = vsel %vm415, %v410, 0.0
        %563 = vadd.xlane.f32.xlu0 %v562
        %v564 = vpop.xlane.xlu0 %563
        %v565 = vmul.f32 %v555, %v440
        %v566 = vmul.f32 %v558, %v440
        %v567 = vmul.f32 %v561, %v440
        %v568 = vmul.f32 %v564, %v440
        %v569 = vsub.f32 %v407, %v565
        %v570 = vsub.f32 %v408, %v566
        %v571 = vsub.f32 %v409, %v567
        %v572 = vsub.f32 %v410, %v568
        %v573 = vmul.f32 %v569, %v569
        %v574 = vmul.f32 %v570, %v570
        %v575 = vmul.f32 %v571, %v571
        %v576 = vmul.f32 %v572, %v572
        %v577 = vsel %vm415, %v573, 0.0
        %578 = vadd.xlane.f32.xlu0 %v577
        %v579 = vpop.xlane.xlu0 %578
        %v580 = vsel %vm415, %v574, 0.0
        %581 = vadd.xlane.f32.xlu0 %v580
        %v582 = vpop.xlane.xlu0 %581
        %v583 = vsel %vm415, %v575, 0.0
        %584 = vadd.xlane.f32.xlu0 %v583
        %v585 = vpop.xlane.xlu0 %584
        %v586 = vsel %vm415, %v576, 0.0
        %587 = vadd.xlane.f32.xlu0 %v586
        %v588 = vpop.xlane.xlu0 %587
        %v589 = vmul.f32 %v579, %v440
        %v590 = vmul.f32 %v582, %v440
        %v591 = vmul.f32 %v585, %v440
        %v592 = vmul.f32 %v588, %v440
        %v593 = vadd.f32 %v589, 1e-05
        %v594 = vadd.f32 %v590, 1e-05
        %v595 = vadd.f32 %v591, 1e-05
        %v596 = vadd.f32 %v592, 1e-05
        %v597 = vrsqrt.pop %v593
        %v598 = vrsqrt.pop %v594
        %v599 = vrsqrt.pop %v595
        %v600 = vrsqrt.pop %v596
        %v601 = vmul.f32 %v569, %v597
        %v602 = vmul.f32 %v570, %v598
        %v603 = vmul.f32 %v571, %v599
        %v604 = vmul.f32 %v572, %v600
        %v605 = vlaneseq
        %v606 = vshrl.u32 %v605, 7
        %v607 = vsub.s32 0, %v606
        %v608 = vrot.slane %v550, %v607
        %v609 = vmul.f32 %v601, %v608
        %v610 = vmul.f32 %v602, %v608
        %v611 = vmul.f32 %v603, %v608
        %v612 = vmul.f32 %v604, %v608
        %v613 = vlaneseq
        %v614 = vshrl.u32 %v613, 7
        %v615 = vsub.s32 0, %v614
        %v616 = vrot.slane %v552, %v615
        %v617 = vadd.f32 %v609, %v616
        %v618 = vadd.f32 %v610, %v616
        %v619 = vadd.f32 %v611, %v616
        %v620 = vadd.f32 %v612, %v616
        %v621 = vpack.c.bf16 %v618, %v617
        %v622 = vpack.c.bf16 %v620, %v619
        %623 = vst.msk [vmem:[#allocation2] sm:$0xff] %vm415, 0.0
        %624 = vst.msk [vmem:[#allocation2 + $0x8] sm:$0xff] %vm415, 0.0
        %625 = vst.msk [vmem:[#allocation2 + $0x10] sm:$0xff] %vm415, 0.0
        %626 = vst.msk [vmem:[#allocation2 + $0x18] sm:$0xff] %vm415, 0.0
        %v627 = vld [vmem:[%s6] sm:$0xf]
        %v628 = vld [vmem:[%s6 + $0x4] sm:$0xf]
        %v629 = vld [vmem:[%s6 + $0x8] sm:$0xf]
        %v630 = vld [vmem:[%s6 + $0xc] sm:$0xf]
        %v635 = vunpack.c.l.b16 %v627
        %v636 = vunpack.c.l.b16 %v628
        %v637 = vunpack.c.l.b16 %v629
        %v638 = vunpack.c.l.b16 %v630
        %v639 = vpack.c.b16 %v636, %v635
        %v640 = vpack.c.b16 %v638, %v637
        %v644 = vsel %vm415, %v621, 0
        %v647 = vsel %vm415, %v622, 0
        %649 = vmatprep.subr.bf16.mxu0 0
        %650 = vmatpush1.bf16.msra.mxu0 0
        %651 = vmatprep.subr.bf16.mxu0 0
        %652 = vmatpush1.bf16.msra.mxu0 0
        %653 = vmatprep.subr.bf16.mxu0 0
        %654 = vmatpush1.bf16.msra.mxu0 0
        %655 = vmatprep.subr.bf16.mxu0 0
        %656 = vmatpush1.bf16.msra.mxu0 0
        %657 = vmatprep.subr.bf16.mxu0 0
        %658 = vmatpush1.bf16.msra.mxu0 0
        %659 = vmatprep.subr.bf16.mxu0 0
        %660 = vmatpush1.bf16.msra.mxu0 0
        %661 = vmatprep.subr.bf16.mxu0 0
        %662 = vmatpush1.bf16.msra.mxu0 %v640
        %663 = vmatprep.subr.bf16.mxu0 0
        %664 = vmatpush1.bf16.msra.mxu0 %v639
        %665 = vmatprep.subr.bf16.mxu0 0
        %666 = vmatpush2.bf16.msra.mxu0 0
        %667 = vmatprep.subr.bf16.mxu0 0
        %668 = vmatpush2.bf16.msra.mxu0 0
        %669 = vmatprep.subr.bf16.mxu0 0
        %670 = vmatpush2.bf16.msra.mxu0 0
        %671 = vmatprep.subr.bf16.mxu0 0
        %672 = vmatpush2.bf16.msra.mxu0 0
        %673 = vmatprep.subr.bf16.mxu0 0
        %674 = vmatpush2.bf16.msra.mxu0 0
        %675 = vmatprep.subr.bf16.mxu0 0
        %676 = vmatpush2.bf16.msra.mxu0 0
        %677 = vmatprep.subr.bf16.mxu0 0
        %678 = vmatpush2.bf16.msra.mxu0 0
        %679 = vmatprep.subr.bf16.mxu0 0
        %680 = vmatpush2.bf16.msra.mxu0 0
        %681 = vmatprep.mubr.bf16.mxu0 0
        %682 = vmatmul.mubr.bf16.gmra.mxu0 %v644
        %v683 = vpop.f32.mrf.mxu0
        %v684 = vadd.f32 0.0, %v683
        %v685 = vpop.f32.mrf.mxu0
        %v686 = vpop.f32.mrf.mxu0
        %v687 = vadd.f32 0.0, %v686
        %v688 = vpop.f32.mrf.mxu0
        %689 = vmatprep.mubr.bf16.mxu0 0
        %690 = vmatmul.mubr.bf16.gmra.mxu0 %v647
        %v691 = vpop.f32.mrf.mxu0
        %v692 = vadd.f32 0.0, %v691
        %v693 = vpop.f32.mrf.mxu0
        %v694 = vpop.f32.mrf.mxu0
        %v695 = vadd.f32 0.0, %v694
        %v696 = vpop.f32.mrf.mxu0
        %697 = vdwg.mxu0
        %v698 = vld [vmem:[%s7] sm:$0xf]
        %v699 = vld [vmem:[%s7 + $0x4] sm:$0xf]
        %v700 = vld [vmem:[%s7 + $0x8] sm:$0xf]
        %v701 = vld [vmem:[%s7 + $0xc] sm:$0xf]
        %v706 = vunpack.c.l.b16 %v698
        %v707 = vunpack.c.l.b16 %v699
        %v708 = vunpack.c.l.b16 %v700
        %v709 = vunpack.c.l.b16 %v701
        %v710 = vpack.c.b16 %v707, %v706
        %v711 = vpack.c.b16 %v709, %v708
        %v715 = vsel %vm415, %v545, 0
        %v718 = vsel %vm415, %v546, 0
        %v721 = vsel %vm415, %v547, 0
        %v724 = vsel %vm415, %v548, 0
        %726 = vmatprep.subr.bf16.mxu0 0
        %727 = vmatpush1.bf16.msra.mxu0 0
        %728 = vmatprep.subr.bf16.mxu0 0
        %729 = vmatpush1.bf16.msra.mxu0 0
        %730 = vmatprep.subr.bf16.mxu0 0
        %731 = vmatpush1.bf16.msra.mxu0 0
        %732 = vmatprep.subr.bf16.mxu0 0
        %733 = vmatpush1.bf16.msra.mxu0 0
        %734 = vmatprep.subr.bf16.mxu0 0
        %735 = vmatpush1.bf16.msra.mxu0 0
        %736 = vmatprep.subr.bf16.mxu0 0
        %737 = vmatpush1.bf16.msra.mxu0 0
        %738 = vmatprep.subr.bf16.mxu0 0
        %739 = vmatpush1.bf16.msra.mxu0 %v711
        %740 = vmatprep.subr.bf16.mxu0 0
        %741 = vmatpush1.bf16.msra.mxu0 %v710
        %742 = vmatprep.subr.bf16.mxu0 0
        %743 = vmatpush2.bf16.msra.mxu0 0
        %744 = vmatprep.subr.bf16.mxu0 0
        %745 = vmatpush2.bf16.msra.mxu0 0
        %746 = vmatprep.subr.bf16.mxu0 0
        %747 = vmatpush2.bf16.msra.mxu0 0
        %748 = vmatprep.subr.bf16.mxu0 0
        %749 = vmatpush2.bf16.msra.mxu0 0
        %750 = vmatprep.subr.bf16.mxu0 0
        %751 = vmatpush2.bf16.msra.mxu0 0
        %752 = vmatprep.subr.bf16.mxu0 0
        %753 = vmatpush2.bf16.msra.mxu0 0
        %754 = vmatprep.subr.bf16.mxu0 0
        %755 = vmatpush2.bf16.msra.mxu0 0
        %756 = vmatprep.subr.bf16.mxu0 0
        %757 = vmatpush2.bf16.msra.mxu0 0
        %758 = vmatprep.mubr.bf16.mxu0 0
        %759 = vmatmul.mubr.bf16.gmra.mxu0 %v715
        %v760 = vpop.f32.mrf.mxu0
        %v761 = vadd.f32 0.0, %v760
        %v762 = vpop.f32.mrf.mxu0
        %v763 = vpop.f32.mrf.mxu0
        %v764 = vadd.f32 0.0, %v763
        %v765 = vpop.f32.mrf.mxu0
        %766 = vmatprep.mubr.bf16.mxu0 0
        %767 = vmatmul.mubr.bf16.gmra.mxu0 %v718
        %v768 = vpop.f32.mrf.mxu0
        %v769 = vadd.f32 0.0, %v768
        %v770 = vpop.f32.mrf.mxu0
        %v771 = vpop.f32.mrf.mxu0
        %v772 = vadd.f32 0.0, %v771
        %v773 = vpop.f32.mrf.mxu0
        %774 = vmatprep.mubr.bf16.mxu0 0
        %775 = vmatmul.mubr.bf16.gmra.mxu0 %v721
        %v776 = vpop.f32.mrf.mxu0
        %v777 = vadd.f32 0.0, %v776
        %v778 = vpop.f32.mrf.mxu0
        %v779 = vpop.f32.mrf.mxu0
        %v780 = vadd.f32 0.0, %v779
        %v781 = vpop.f32.mrf.mxu0
        %782 = vmatprep.mubr.bf16.mxu0 0
        %783 = vmatmul.mubr.bf16.gmra.mxu0 %v724
        %v784 = vpop.f32.mrf.mxu0
        %v785 = vadd.f32 0.0, %v784
        %v786 = vpop.f32.mrf.mxu0
        %v787 = vpop.f32.mrf.mxu0
        %v788 = vadd.f32 0.0, %v787
        %v789 = vpop.f32.mrf.mxu0
        %790 = vdwg.mxu0
        %v791 = vld [vmem:[%s8] sm:$0xf]
        %v792 = vld [vmem:[%s8 + $0x4] sm:$0xf]
        %v793 = vld [vmem:[%s8 + $0x8] sm:$0xf]
        %v794 = vld [vmem:[%s8 + $0xc] sm:$0xf]
        %v799 = vunpack.c.l.b16 %v791
        %v800 = vunpack.c.l.b16 %v792
        %v801 = vunpack.c.l.b16 %v793
        %v802 = vunpack.c.l.b16 %v794
        %v803 = vpack.c.b16 %v800, %v799
        %v804 = vpack.c.b16 %v802, %v801
        %807 = vmatprep.subr.bf16.mxu0 0
        %808 = vmatpush1.bf16.msra.mxu0 0
        %809 = vmatprep.subr.bf16.mxu0 0
        %810 = vmatpush1.bf16.msra.mxu0 0
        %811 = vmatprep.subr.bf16.mxu0 0
        %812 = vmatpush1.bf16.msra.mxu0 0
        %813 = vmatprep.subr.bf16.mxu0 0
        %814 = vmatpush1.bf16.msra.mxu0 0
        %815 = vmatprep.subr.bf16.mxu0 0
        %816 = vmatpush1.bf16.msra.mxu0 0
        %817 = vmatprep.subr.bf16.mxu0 0
        %818 = vmatpush1.bf16.msra.mxu0 0
        %819 = vmatprep.subr.bf16.mxu0 0
        %820 = vmatpush1.bf16.msra.mxu0 %v804
        %821 = vmatprep.subr.bf16.mxu0 0
        %822 = vmatpush1.bf16.msra.mxu0 %v803
        %823 = vmatprep.subr.bf16.mxu0 0
        %824 = vmatpush2.bf16.msra.mxu0 0
        %825 = vmatprep.subr.bf16.mxu0 0
        %826 = vmatpush2.bf16.msra.mxu0 0
        %827 = vmatprep.subr.bf16.mxu0 0
        %828 = vmatpush2.bf16.msra.mxu0 0
        %829 = vmatprep.subr.bf16.mxu0 0
        %830 = vmatpush2.bf16.msra.mxu0 0
        %831 = vmatprep.subr.bf16.mxu0 0
        %832 = vmatpush2.bf16.msra.mxu0 0
        %833 = vmatprep.subr.bf16.mxu0 0
        %834 = vmatpush2.bf16.msra.mxu0 0
        %835 = vmatprep.subr.bf16.mxu0 0
        %836 = vmatpush2.bf16.msra.mxu0 0
        %837 = vmatprep.subr.bf16.mxu0 0
        %838 = vmatpush2.bf16.msra.mxu0 0
        %839 = vmatprep.mubr.bf16.mxu0 0
        %840 = vmatmul.mubr.bf16.gmra.mxu0 %v715
        %v841 = vpop.f32.mrf.mxu0
        %v842 = vadd.f32 0.0, %v841
        %v843 = vpop.f32.mrf.mxu0
        %v844 = vpop.f32.mrf.mxu0
        %v845 = vadd.f32 0.0, %v844
        %v846 = vpop.f32.mrf.mxu0
        %847 = vmatprep.mubr.bf16.mxu0 0
        %848 = vmatmul.mubr.bf16.gmra.mxu0 %v718
        %v849 = vpop.f32.mrf.mxu0
        %v850 = vadd.f32 0.0, %v849
        %v851 = vpop.f32.mrf.mxu0
        %v852 = vpop.f32.mrf.mxu0
        %v853 = vadd.f32 0.0, %v852
        %v854 = vpop.f32.mrf.mxu0
        %855 = vmatprep.mubr.bf16.mxu0 0
        %856 = vmatmul.mubr.bf16.gmra.mxu0 %v721
        %v857 = vpop.f32.mrf.mxu0
        %v858 = vadd.f32 0.0, %v857
        %v859 = vpop.f32.mrf.mxu0
        %v860 = vpop.f32.mrf.mxu0
        %v861 = vadd.f32 0.0, %v860
        %v862 = vpop.f32.mrf.mxu0
        %863 = vmatprep.mubr.bf16.mxu0 0
        %864 = vmatmul.mubr.bf16.gmra.mxu0 %v724
        %v865 = vpop.f32.mrf.mxu0
        %v866 = vadd.f32 0.0, %v865
        %v867 = vpop.f32.mrf.mxu0
        %v868 = vpop.f32.mrf.mxu0
        %v869 = vadd.f32 0.0, %v868
        %v870 = vpop.f32.mrf.mxu0
        %871 = vdwg.mxu0
        %v872 = vmul.f32 %v684, 0.25
        %v873 = vmul.f32 %v687, 0.25
        %v874 = vmul.f32 %v692, 0.25
        %v875 = vmul.f32 %v695, 0.25
        %v876 = vpack.c.bf16 %v873, %v872
        %v877 = vpack.c.bf16 %v875, %v874
        %v880 = vunpack.c.l.b16 %v876
        %v881 = vunpack.c.h.b16 %v876
        %v882 = vunpack.c.l.b16 %v877
        %v883 = vunpack.c.h.b16 %v877
        %v884 = vpack.c.b16 %v880, %v880
        %v885 = vpack.c.b16 %v881, %v881
        %v886 = vpack.c.b16 %v882, %v882
        %v887 = vpack.c.b16 %v883, %v883
        %v888 = vpack.c.bf16 %v764, %v761
        %v889 = vpack.c.bf16 %v772, %v769
        %v890 = vpack.c.bf16 %v780, %v777
        %v891 = vpack.c.bf16 %v788, %v785
        %v892 = vpack.c.bf16 %v845, %v842
        %v893 = vpack.c.bf16 %v853, %v850
        %v894 = vpack.c.bf16 %v861, %v858
        %v895 = vpack.c.bf16 %v869, %v866
        %vm896 = vcmask 130048
        %v898 = vsel %vm896, %v884, 0
        %v901 = vsel %vm896, %v888, 0
        %903 = vmatprep.subr.bf16.mxu0 0
        %904 = vmatpush1.bf16.xpose.msra.mxu0 0
        %905 = vmatprep.subr.bf16.mxu0 0
        %906 = vmatpush1.bf16.xpose.msra.mxu0 0
        %907 = vmatprep.subr.bf16.mxu0 0
        %908 = vmatpush1.bf16.xpose.msra.mxu0 0
        %909 = vmatprep.subr.bf16.mxu0 0
        %910 = vmatpush1.bf16.xpose.msra.mxu0 0
        %911 = vmatprep.subr.bf16.mxu0 0
        %912 = vmatpush1.bf16.xpose.msra.mxu0 0
        %913 = vmatprep.subr.bf16.mxu0 0
        %914 = vmatpush1.bf16.xpose.msra.mxu0 0
        %915 = vmatprep.subr.bf16.mxu0 0
        %916 = vmatpush1.bf16.xpose.msra.mxu0 0
        %917 = vmatprep.subr.bf16.mxu0 0
        %918 = vmatpush1.bf16.xpose.msra.mxu0 %v901
        %919 = vmatprep.subr.bf16.mxu0 0
        %920 = vmatpush2.bf16.xpose.msra.mxu0 0
        %921 = vmatprep.subr.bf16.mxu0 0
        %922 = vmatpush2.bf16.xpose.msra.mxu0 0
        %923 = vmatprep.subr.bf16.mxu0 0
        %924 = vmatpush2.bf16.xpose.msra.mxu0 0
        %925 = vmatprep.subr.bf16.mxu0 0
        %926 = vmatpush2.bf16.xpose.msra.mxu0 0
        %927 = vmatprep.subr.bf16.mxu0 0
        %928 = vmatpush2.bf16.xpose.msra.mxu0 0
        %929 = vmatprep.subr.bf16.mxu0 0
        %930 = vmatpush2.bf16.xpose.msra.mxu0 0
        %931 = vmatprep.subr.bf16.mxu0 0
        %932 = vmatpush2.bf16.xpose.msra.mxu0 0
        %933 = vmatprep.subr.bf16.mxu0 0
        %934 = vmatpush2.bf16.xpose.msra.mxu0 0
        %935 = vmatprep.mubr.bf16.mxu0 0
        %936 = vmatmul.mubr.bf16.gmra.mxu0 %v898
        %v937 = vpop.f32.mrf.mxu0
        %v938 = vadd.f32 0.0, %v937
        %v939 = vpop.f32.mrf.mxu0
        %v940 = vpop.f32.mrf.mxu0
        %v941 = vpop.f32.mrf.mxu0
        %942 = vdwg.mxu0
        %v944 = vsel %vm896, %v885, 0
        %v947 = vsel %vm896, %v889, 0
        %949 = vmatprep.subr.bf16.mxu0 0
        %950 = vmatpush1.bf16.xpose.msra.mxu0 0
        %951 = vmatprep.subr.bf16.mxu0 0
        %952 = vmatpush1.bf16.xpose.msra.mxu0 0
        %953 = vmatprep.subr.bf16.mxu0 0
        %954 = vmatpush1.bf16.xpose.msra.mxu0 0
        %955 = vmatprep.subr.bf16.mxu0 0
        %956 = vmatpush1.bf16.xpose.msra.mxu0 0
        %957 = vmatprep.subr.bf16.mxu0 0
        %958 = vmatpush1.bf16.xpose.msra.mxu0 0
        %959 = vmatprep.subr.bf16.mxu0 0
        %960 = vmatpush1.bf16.xpose.msra.mxu0 0
        %961 = vmatprep.subr.bf16.mxu0 0
        %962 = vmatpush1.bf16.xpose.msra.mxu0 0
        %963 = vmatprep.subr.bf16.mxu0 0
        %964 = vmatpush1.bf16.xpose.msra.mxu0 %v947
        %965 = vmatprep.subr.bf16.mxu0 0
        %966 = vmatpush2.bf16.xpose.msra.mxu0 0
        %967 = vmatprep.subr.bf16.mxu0 0
        %968 = vmatpush2.bf16.xpose.msra.mxu0 0
        %969 = vmatprep.subr.bf16.mxu0 0
        %970 = vmatpush2.bf16.xpose.msra.mxu0 0
        %971 = vmatprep.subr.bf16.mxu0 0
        %972 = vmatpush2.bf16.xpose.msra.mxu0 0
        %973 = vmatprep.subr.bf16.mxu0 0
        %974 = vmatpush2.bf16.xpose.msra.mxu0 0
        %975 = vmatprep.subr.bf16.mxu0 0
        %976 = vmatpush2.bf16.xpose.msra.mxu0 0
        %977 = vmatprep.subr.bf16.mxu0 0
        %978 = vmatpush2.bf16.xpose.msra.mxu0 0
        %979 = vmatprep.subr.bf16.mxu0 0
        %980 = vmatpush2.bf16.xpose.msra.mxu0 0
        %981 = vmatprep.mubr.bf16.mxu0 0
        %982 = vmatmul.mubr.bf16.gmra.mxu0 %v944
        %v983 = vpop.f32.mrf.mxu0
        %v984 = vadd.f32 0.0, %v983
        %v985 = vpop.f32.mrf.mxu0
        %v986 = vpop.f32.mrf.mxu0
        %v987 = vpop.f32.mrf.mxu0
        %988 = vdwg.mxu0
        %v990 = vsel %vm896, %v886, 0
        %v993 = vsel %vm896, %v890, 0
        %995 = vmatprep.subr.bf16.mxu0 0
        %996 = vmatpush1.bf16.xpose.msra.mxu0 0
        %997 = vmatprep.subr.bf16.mxu0 0
        %998 = vmatpush1.bf16.xpose.msra.mxu0 0
        %999 = vmatprep.subr.bf16.mxu0 0
        %1000 = vmatpush1.bf16.xpose.msra.mxu0 0
        %1001 = vmatprep.subr.bf16.mxu0 0
        %1002 = vmatpush1.bf16.xpose.msra.mxu0 0
        %1003 = vmatprep.subr.bf16.mxu0 0
        %1004 = vmatpush1.bf16.xpose.msra.mxu0 0
        %1005 = vmatprep.subr.bf16.mxu0 0
        %1006 = vmatpush1.bf16.xpose.msra.mxu0 0
        %1007 = vmatprep.subr.bf16.mxu0 0
        %1008 = vmatpush1.bf16.xpose.msra.mxu0 0
        %1009 = vmatprep.subr.bf16.mxu0 0
        %1010 = vmatpush1.bf16.xpose.msra.mxu0 %v993
        %1011 = vmatprep.subr.bf16.mxu0 0
        %1012 = vmatpush2.bf16.xpose.msra.mxu0 0
        %1013 = vmatprep.subr.bf16.mxu0 0
        %1014 = vmatpush2.bf16.xpose.msra.mxu0 0
        %1015 = vmatprep.subr.bf16.mxu0 0
        %1016 = vmatpush2.bf16.xpose.msra.mxu0 0
        %1017 = vmatprep.subr.bf16.mxu0 0
        %1018 = vmatpush2.bf16.xpose.msra.mxu0 0
        %1019 = vmatprep.subr.bf16.mxu0 0
        %1020 = vmatpush2.bf16.xpose.msra.mxu0 0
        %1021 = vmatprep.subr.bf16.mxu0 0
        %1022 = vmatpush2.bf16.xpose.msra.mxu0 0
        %1023 = vmatprep.subr.bf16.mxu0 0
        %1024 = vmatpush2.bf16.xpose.msra.mxu0 0
        %1025 = vmatprep.subr.bf16.mxu0 0
        %1026 = vmatpush2.bf16.xpose.msra.mxu0 0
        %1027 = vmatprep.mubr.bf16.mxu0 0
        %1028 = vmatmul.mubr.bf16.gmra.mxu0 %v990
        %v1029 = vpop.f32.mrf.mxu0
        %v1030 = vadd.f32 0.0, %v1029
        %v1031 = vpop.f32.mrf.mxu0
        %v1032 = vpop.f32.mrf.mxu0
        %v1033 = vpop.f32.mrf.mxu0
        %1034 = vdwg.mxu0
        %v1036 = vsel %vm896, %v887, 0
        %v1039 = vsel %vm896, %v891, 0
        %1041 = vmatprep.subr.bf16.mxu0 0
        %1042 = vmatpush1.bf16.xpose.msra.mxu0 0
        %1043 = vmatprep.subr.bf16.mxu0 0
        %1044 = vmatpush1.bf16.xpose.msra.mxu0 0
        %1045 = vmatprep.subr.bf16.mxu0 0
        %1046 = vmatpush1.bf16.xpose.msra.mxu0 0
        %1047 = vmatprep.subr.bf16.mxu0 0
        %1048 = vmatpush1.bf16.xpose.msra.mxu0 0
        %1049 = vmatprep.subr.bf16.mxu0 0
        %1050 = vmatpush1.bf16.xpose.msra.mxu0 0
        %1051 = vmatprep.subr.bf16.mxu0 0
        %1052 = vmatpush1.bf16.xpose.msra.mxu0 0
        %1053 = vmatprep.subr.bf16.mxu0 0
        %1054 = vmatpush1.bf16.xpose.msra.mxu0 0
        %1055 = vmatprep.subr.bf16.mxu0 0
        %1056 = vmatpush1.bf16.xpose.msra.mxu0 %v1039
        %1057 = vmatprep.subr.bf16.mxu0 0
        %1058 = vmatpush2.bf16.xpose.msra.mxu0 0
        %1059 = vmatprep.subr.bf16.mxu0 0
        %1060 = vmatpush2.bf16.xpose.msra.mxu0 0
        %1061 = vmatprep.subr.bf16.mxu0 0
        %1062 = vmatpush2.bf16.xpose.msra.mxu0 0
        %1063 = vmatprep.subr.bf16.mxu0 0
        %1064 = vmatpush2.bf16.xpose.msra.mxu0 0
        %1065 = vmatprep.subr.bf16.mxu0 0
        %1066 = vmatpush2.bf16.xpose.msra.mxu0 0
        %1067 = vmatprep.subr.bf16.mxu0 0
        %1068 = vmatpush2.bf16.xpose.msra.mxu0 0
        %1069 = vmatprep.subr.bf16.mxu0 0
        %1070 = vmatpush2.bf16.xpose.msra.mxu0 0
        %1071 = vmatprep.subr.bf16.mxu0 0
        %1072 = vmatpush2.bf16.xpose.msra.mxu0 0
        %1073 = vmatprep.mubr.bf16.mxu0 0
        %1074 = vmatmul.mubr.bf16.gmra.mxu0 %v1036
        %v1075 = vpop.f32.mrf.mxu0
        %v1076 = vadd.f32 0.0, %v1075
        %v1077 = vpop.f32.mrf.mxu0
        %v1078 = vpop.f32.mrf.mxu0
        %v1079 = vpop.f32.mrf.mxu0
        %1080 = vdwg.mxu0
        %v1081 = vsel %vm896, %v938, -inf
        %1082 = vmax.xlane.f32.xlu0 %v1081
        %v1083 = vpop.xlane.xlu0 %1082
        %v1084 = vsel %vm896, %v984, -inf
        %1085 = vmax.xlane.f32.xlu0 %v1084
        %v1086 = vpop.xlane.xlu0 %1085
        %v1087 = vsel %vm896, %v1030, -inf
        %1088 = vmax.xlane.f32.xlu0 %v1087
        %v1089 = vpop.xlane.xlu0 %1088
        %v1090 = vsel %vm896, %v1076, -inf
        %1091 = vmax.xlane.f32.xlu0 %v1090
        %v1092 = vpop.xlane.xlu0 %1091
        %v1093 = vsub.f32 %v938, %v1083
        %v1094 = vsub.f32 %v984, %v1086
        %v1095 = vsub.f32 %v1030, %v1089
        %v1096 = vsub.f32 %v1076, %v1092
        %v1097 = vmul.f32 %v1093, 1.442695
        %v1098 = vpow.pop %v1097
        %v1099 = vmul.f32 %v1094, 1.442695
        %v1100 = vpow.pop %v1099
        %v1101 = vmul.f32 %v1095, 1.442695
        %v1102 = vpow.pop %v1101
        %v1103 = vmul.f32 %v1096, 1.442695
        %v1104 = vpow.pop %v1103
        %v1105 = vsel %vm896, %v1098, 0.0
        %1106 = vadd.xlane.f32.xlu0 %v1105
        %v1107 = vpop.xlane.xlu0 %1106
        %v1108 = vsel %vm896, %v1100, 0.0
        %1109 = vadd.xlane.f32.xlu0 %v1108
        %v1110 = vpop.xlane.xlu0 %1109
        %v1111 = vsel %vm896, %v1102, 0.0
        %1112 = vadd.xlane.f32.xlu0 %v1111
        %v1113 = vpop.xlane.xlu0 %1112
        %v1114 = vsel %vm896, %v1104, 0.0
        %1115 = vadd.xlane.f32.xlu0 %v1114
        %v1116 = vpop.xlane.xlu0 %1115
        %v1117 = vrcp.pop %v1107
        %v1118 = vrcp.pop %v1110
        %v1119 = vrcp.pop %v1113
        %v1120 = vrcp.pop %v1116
        %v1121 = vmul.f32 %v1098, %v1117
        %v1122 = vmul.f32 %v1100, %v1118
        %v1123 = vmul.f32 %v1102, %v1119
        %v1124 = vmul.f32 %v1104, %v1120
        %v1125 = vpack.c.bf16 %v1121, %v1121
        %v1126 = vpack.c.bf16 %v1122, %v1122
        %v1127 = vpack.c.bf16 %v1123, %v1123
        %v1128 = vpack.c.bf16 %v1124, %v1124
        %v1130 = vsel %vm896, %v1125, 0
        %1132 = vmatprep.subr.bf16.mxu0 0
        %1133 = vmatpush1.bf16.msra.mxu0 0
        %1134 = vmatprep.subr.bf16.mxu0 0
        %1135 = vmatpush1.bf16.msra.mxu0 0
        %1136 = vmatprep.subr.bf16.mxu0 0
        %1137 = vmatpush1.bf16.msra.mxu0 0
        %1138 = vmatprep.subr.bf16.mxu0 0
        %1139 = vmatpush1.bf16.msra.mxu0 0
        %1140 = vmatprep.subr.bf16.mxu0 0
        %1141 = vmatpush1.bf16.msra.mxu0 0
        %1142 = vmatprep.subr.bf16.mxu0 0
        %1143 = vmatpush1.bf16.msra.mxu0 0
        %1144 = vmatprep.subr.bf16.mxu0 0
        %1145 = vmatpush1.bf16.msra.mxu0 0
        %1146 = vmatprep.subr.bf16.mxu0 0
        %1147 = vmatpush1.bf16.msra.mxu0 %v892
        %1148 = vmatprep.subr.bf16.mxu0 0
        %1149 = vmatpush2.bf16.msra.mxu0 0
        %1150 = vmatprep.subr.bf16.mxu0 0
        %1151 = vmatpush2.bf16.msra.mxu0 0
        %1152 = vmatprep.subr.bf16.mxu0 0
        %1153 = vmatpush2.bf16.msra.mxu0 0
        %1154 = vmatprep.subr.bf16.mxu0 0
        %1155 = vmatpush2.bf16.msra.mxu0 0
        %1156 = vmatprep.subr.bf16.mxu0 0
        %1157 = vmatpush2.bf16.msra.mxu0 0
        %1158 = vmatprep.subr.bf16.mxu0 0
        %1159 = vmatpush2.bf16.msra.mxu0 0
        %1160 = vmatprep.subr.bf16.mxu0 0
        %1161 = vmatpush2.bf16.msra.mxu0 0
        %1162 = vmatprep.subr.bf16.mxu0 0
        %1163 = vmatpush2.bf16.msra.mxu0 0
        %1164 = vmatprep.mubr.bf16.mxu0 0
        %1165 = vmatmul.mubr.bf16.gmra.mxu0 %v1130
        %v1166 = vpop.f32.mrf.mxu0
        %v1167 = vadd.f32 0.0, %v1166
        %v1168 = vpop.f32.mrf.mxu0
        %v1169 = vpop.f32.mrf.mxu0
        %v1170 = vpop.f32.mrf.mxu0
        %1171 = vdwg.mxu0
        %v1173 = vsel %vm896, %v1126, 0
        %1175 = vmatprep.subr.bf16.mxu0 0
        %1176 = vmatpush1.bf16.msra.mxu0 0
        %1177 = vmatprep.subr.bf16.mxu0 0
        %1178 = vmatpush1.bf16.msra.mxu0 0
        %1179 = vmatprep.subr.bf16.mxu0 0
        %1180 = vmatpush1.bf16.msra.mxu0 0
        %1181 = vmatprep.subr.bf16.mxu0 0
        %1182 = vmatpush1.bf16.msra.mxu0 0
        %1183 = vmatprep.subr.bf16.mxu0 0
        %1184 = vmatpush1.bf16.msra.mxu0 0
        %1185 = vmatprep.subr.bf16.mxu0 0
        %1186 = vmatpush1.bf16.msra.mxu0 0
        %1187 = vmatprep.subr.bf16.mxu0 0
        %1188 = vmatpush1.bf16.msra.mxu0 0
        %1189 = vmatprep.subr.bf16.mxu0 0
        %1190 = vmatpush1.bf16.msra.mxu0 %v893
        %1191 = vmatprep.subr.bf16.mxu0 0
        %1192 = vmatpush2.bf16.msra.mxu0 0
        %1193 = vmatprep.subr.bf16.mxu0 0
        %1194 = vmatpush2.bf16.msra.mxu0 0
        %1195 = vmatprep.subr.bf16.mxu0 0
        %1196 = vmatpush2.bf16.msra.mxu0 0
        %1197 = vmatprep.subr.bf16.mxu0 0
        %1198 = vmatpush2.bf16.msra.mxu0 0
        %1199 = vmatprep.subr.bf16.mxu0 0
        %1200 = vmatpush2.bf16.msra.mxu0 0
        %1201 = vmatprep.subr.bf16.mxu0 0
        %1202 = vmatpush2.bf16.msra.mxu0 0
        %1203 = vmatprep.subr.bf16.mxu0 0
        %1204 = vmatpush2.bf16.msra.mxu0 0
        %1205 = vmatprep.subr.bf16.mxu0 0
        %1206 = vmatpush2.bf16.msra.mxu0 0
        %1207 = vmatprep.mubr.bf16.mxu0 0
        %1208 = vmatmul.mubr.bf16.gmra.mxu0 %v1173
        %v1209 = vpop.f32.mrf.mxu0
        %v1210 = vadd.f32 0.0, %v1209
        %v1211 = vpop.f32.mrf.mxu0
        %v1212 = vpop.f32.mrf.mxu0
        %v1213 = vpop.f32.mrf.mxu0
        %1214 = vdwg.mxu0
        %v1216 = vsel %vm896, %v1127, 0
        %1218 = vmatprep.subr.bf16.mxu0 0
        %1219 = vmatpush1.bf16.msra.mxu0 0
        %1220 = vmatprep.subr.bf16.mxu0 0
        %1221 = vmatpush1.bf16.msra.mxu0 0
        %1222 = vmatprep.subr.bf16.mxu0 0
        %1223 = vmatpush1.bf16.msra.mxu0 0
        %1224 = vmatprep.subr.bf16.mxu0 0
        %1225 = vmatpush1.bf16.msra.mxu0 0
        %1226 = vmatprep.subr.bf16.mxu0 0
        %1227 = vmatpush1.bf16.msra.mxu0 0
        %1228 = vmatprep.subr.bf16.mxu0 0
        %1229 = vmatpush1.bf16.msra.mxu0 0
        %1230 = vmatprep.subr.bf16.mxu0 0
        %1231 = vmatpush1.bf16.msra.mxu0 0
        %1232 = vmatprep.subr.bf16.mxu0 0
        %1233 = vmatpush1.bf16.msra.mxu0 %v894
        %1234 = vmatprep.subr.bf16.mxu0 0
        %1235 = vmatpush2.bf16.msra.mxu0 0
        %1236 = vmatprep.subr.bf16.mxu0 0
        %1237 = vmatpush2.bf16.msra.mxu0 0
        %1238 = vmatprep.subr.bf16.mxu0 0
        %1239 = vmatpush2.bf16.msra.mxu0 0
        %1240 = vmatprep.subr.bf16.mxu0 0
        %1241 = vmatpush2.bf16.msra.mxu0 0
        %1242 = vmatprep.subr.bf16.mxu0 0
        %1243 = vmatpush2.bf16.msra.mxu0 0
        %1244 = vmatprep.subr.bf16.mxu0 0
        %1245 = vmatpush2.bf16.msra.mxu0 0
        %1246 = vmatprep.subr.bf16.mxu0 0
        %1247 = vmatpush2.bf16.msra.mxu0 0
        %1248 = vmatprep.subr.bf16.mxu0 0
        %1249 = vmatpush2.bf16.msra.mxu0 0
        %1250 = vmatprep.mubr.bf16.mxu0 0
        %1251 = vmatmul.mubr.bf16.gmra.mxu0 %v1216
        %v1252 = vpop.f32.mrf.mxu0
        %v1253 = vadd.f32 0.0, %v1252
        %v1254 = vpop.f32.mrf.mxu0
        %v1255 = vpop.f32.mrf.mxu0
        %v1256 = vpop.f32.mrf.mxu0
        %1257 = vdwg.mxu0
        %v1259 = vsel %vm896, %v1128, 0
        %1261 = vmatprep.subr.bf16.mxu0 0
        %1262 = vmatpush1.bf16.msra.mxu0 0
        %1263 = vmatprep.subr.bf16.mxu0 0
        %1264 = vmatpush1.bf16.msra.mxu0 0
        %1265 = vmatprep.subr.bf16.mxu0 0
        %1266 = vmatpush1.bf16.msra.mxu0 0
        %1267 = vmatprep.subr.bf16.mxu0 0
        %1268 = vmatpush1.bf16.msra.mxu0 0
        %1269 = vmatprep.subr.bf16.mxu0 0
        %1270 = vmatpush1.bf16.msra.mxu0 0
        %1271 = vmatprep.subr.bf16.mxu0 0
        %1272 = vmatpush1.bf16.msra.mxu0 0
        %1273 = vmatprep.subr.bf16.mxu0 0
        %1274 = vmatpush1.bf16.msra.mxu0 0
        %1275 = vmatprep.subr.bf16.mxu0 0
        %1276 = vmatpush1.bf16.msra.mxu0 %v895
        %1277 = vmatprep.subr.bf16.mxu0 0
        %1278 = vmatpush2.bf16.msra.mxu0 0
        %1279 = vmatprep.subr.bf16.mxu0 0
        %1280 = vmatpush2.bf16.msra.mxu0 0
        %1281 = vmatprep.subr.bf16.mxu0 0
        %1282 = vmatpush2.bf16.msra.mxu0 0
        %1283 = vmatprep.subr.bf16.mxu0 0
        %1284 = vmatpush2.bf16.msra.mxu0 0
        %1285 = vmatprep.subr.bf16.mxu0 0
        %1286 = vmatpush2.bf16.msra.mxu0 0
        %1287 = vmatprep.subr.bf16.mxu0 0
        %1288 = vmatpush2.bf16.msra.mxu0 0
        %1289 = vmatprep.subr.bf16.mxu0 0
        %1290 = vmatpush2.bf16.msra.mxu0 0
        %1291 = vmatprep.subr.bf16.mxu0 0
        %1292 = vmatpush2.bf16.msra.mxu0 0
        %1293 = vmatprep.mubr.bf16.mxu0 0
        %1294 = vmatmul.mubr.bf16.gmra.mxu0 %v1259
        %v1295 = vpop.f32.mrf.mxu0
        %v1296 = vadd.f32 0.0, %v1295
        %v1297 = vpop.f32.mrf.mxu0
        %v1298 = vpop.f32.mrf.mxu0
        %v1299 = vpop.f32.mrf.mxu0
        %1300 = vdwg.mxu0
        %v1301 = vld [vmem:[#allocation2] sm:$0xff]
        %v1302 = vld [vmem:[#allocation2 + $0x8] sm:$0xff]
        %v1303 = vld [vmem:[#allocation2 + $0x10] sm:$0xff]
        %v1304 = vld [vmem:[#allocation2 + $0x18] sm:$0xff]
        %v1305 = vpack.c.bf16 %v1167, %v1167
        %v1306 = vpack.c.bf16 %v1210, %v1210
        %v1307 = vpack.c.bf16 %v1253, %v1253
        %v1308 = vpack.c.bf16 %v1296, %v1296
        %v1309 = vld [vmem:[%s9] sm:$0xf]
        %v1310 = vld [vmem:[%s9 + $0x4] sm:$0xf]
        %v1315 = vunpack.c.l.b16 %v1305
        %v1316 = vunpack.c.l.b16 %v1306
        %v1317 = vunpack.c.l.b16 %v1307
        %v1318 = vunpack.c.l.b16 %v1308
        %v1319 = vpack.c.b16 %v1316, %v1315
        %v1320 = vpack.c.b16 %v1318, %v1317
        %v1323 = vunpack.c.l.b16 %v1309
        %v1324 = vunpack.c.l.b16 %v1310
        %v1325 = vpack.c.b16 %v1324, %v1323
        %v1328 = vsel %vm896, %v1319, 0
        %v1331 = vsel %vm896, %v1320, 0
        %1333 = vmatprep.subr.bf16.mxu0 0
        %1334 = vmatpush1.bf16.msra.mxu0 0
        %1335 = vmatprep.subr.bf16.mxu0 0
        %1336 = vmatpush1.bf16.msra.mxu0 0
        %1337 = vmatprep.subr.bf16.mxu0 0
        %1338 = vmatpush1.bf16.msra.mxu0 0
        %1339 = vmatprep.subr.bf16.mxu0 0
        %1340 = vmatpush1.bf16.msra.mxu0 0
        %1341 = vmatprep.subr.bf16.mxu0 0
        %1342 = vmatpush1.bf16.msra.mxu0 0
        %1343 = vmatprep.subr.bf16.mxu0 0
        %1344 = vmatpush1.bf16.msra.mxu0 0
        %1345 = vmatprep.subr.bf16.mxu0 0
        %1346 = vmatpush1.bf16.msra.mxu0 0
        %1347 = vmatprep.subr.bf16.mxu0 0
        %1348 = vmatpush1.bf16.msra.mxu0 %v1325
        %1349 = vmatprep.subr.bf16.mxu0 0
        %1350 = vmatpush2.bf16.msra.mxu0 0
        %1351 = vmatprep.subr.bf16.mxu0 0
        %1352 = vmatpush2.bf16.msra.mxu0 0
        %1353 = vmatprep.subr.bf16.mxu0 0
        %1354 = vmatpush2.bf16.msra.mxu0 0
        %1355 = vmatprep.subr.bf16.mxu0 0
        %1356 = vmatpush2.bf16.msra.mxu0 0
        %1357 = vmatprep.subr.bf16.mxu0 0
        %1358 = vmatpush2.bf16.msra.mxu0 0
        %1359 = vmatprep.subr.bf16.mxu0 0
        %1360 = vmatpush2.bf16.msra.mxu0 0
        %1361 = vmatprep.subr.bf16.mxu0 0
        %1362 = vmatpush2.bf16.msra.mxu0 0
        %1363 = vmatprep.subr.bf16.mxu0 0
        %1364 = vmatpush2.bf16.msra.mxu0 0
        %1365 = vmatprep.mubr.bf16.mxu0 0
        %1366 = vmatmul.mubr.bf16.gmra.mxu0 %v1328
        %v1367 = vpop.f32.mrf.mxu0
        %v1368 = vadd.f32 0.0, %v1367
        %v1369 = vpop.f32.mrf.mxu0
        %v1370 = vpop.f32.mrf.mxu0
        %v1371 = vadd.f32 0.0, %v1370
        %v1372 = vpop.f32.mrf.mxu0
        %1373 = vmatprep.mubr.bf16.mxu0 0
        %1374 = vmatmul.mubr.bf16.gmra.mxu0 %v1331
        %v1375 = vpop.f32.mrf.mxu0
        %v1376 = vadd.f32 0.0, %v1375
        %v1377 = vpop.f32.mrf.mxu0
        %v1378 = vpop.f32.mrf.mxu0
        %v1379 = vadd.f32 0.0, %v1378
        %v1380 = vpop.f32.mrf.mxu0
        %1381 = vdwg.mxu0
        %v1382 = vadd.f32 %v1301, %v1368
        %v1383 = vadd.f32 %v1302, %v1371
        %v1384 = vadd.f32 %v1303, %v1376
        %v1385 = vadd.f32 %v1304, %v1379
        %1386 = vst.msk [vmem:[#allocation2] sm:$0xff] %vm415, %v1382
        %1387 = vst.msk [vmem:[#allocation2 + $0x8] sm:$0xff] %vm415, %v1383
        %1388 = vst.msk [vmem:[#allocation2 + $0x10] sm:$0xff] %vm415, %v1384
        %1389 = vst.msk [vmem:[#allocation2 + $0x18] sm:$0xff] %vm415, %v1385
        %s1390 = scalar_lea.vmem %s6, 16
        %v1391 = vld [vmem:[%s1390] sm:$0xf]
        %v1392 = vld [vmem:[%s1390 + $0x4] sm:$0xf]
        %v1393 = vld [vmem:[%s1390 + $0x8] sm:$0xf]
        %v1394 = vld [vmem:[%s1390 + $0xc] sm:$0xf]
        %v1399 = vunpack.c.l.b16 %v1391
        %v1400 = vunpack.c.l.b16 %v1392
        %v1401 = vunpack.c.l.b16 %v1393
        %v1402 = vunpack.c.l.b16 %v1394
        %v1403 = vpack.c.b16 %v1400, %v1399
        %v1404 = vpack.c.b16 %v1402, %v1401
        %1407 = vmatprep.subr.bf16.mxu0 0
        %1408 = vmatpush1.bf16.msra.mxu0 0
        %1409 = vmatprep.subr.bf16.mxu0 0
        %1410 = vmatpush1.bf16.msra.mxu0 0
        %1411 = vmatprep.subr.bf16.mxu0 0
        %1412 = vmatpush1.bf16.msra.mxu0 0
        %1413 = vmatprep.subr.bf16.mxu0 0
        %1414 = vmatpush1.bf16.msra.mxu0 0
        %1415 = vmatprep.subr.bf16.mxu0 0
        %1416 = vmatpush1.bf16.msra.mxu0 0
        %1417 = vmatprep.subr.bf16.mxu0 0
        %1418 = vmatpush1.bf16.msra.mxu0 0
        %1419 = vmatprep.subr.bf16.mxu0 0
        %1420 = vmatpush1.bf16.msra.mxu0 %v1404
        %1421 = vmatprep.subr.bf16.mxu0 0
        %1422 = vmatpush1.bf16.msra.mxu0 %v1403
        %1423 = vmatprep.subr.bf16.mxu0 0
        %1424 = vmatpush2.bf16.msra.mxu0 0
        %1425 = vmatprep.subr.bf16.mxu0 0
        %1426 = vmatpush2.bf16.msra.mxu0 0
        %1427 = vmatprep.subr.bf16.mxu0 0
        %1428 = vmatpush2.bf16.msra.mxu0 0
        %1429 = vmatprep.subr.bf16.mxu0 0
        %1430 = vmatpush2.bf16.msra.mxu0 0
        %1431 = vmatprep.subr.bf16.mxu0 0
        %1432 = vmatpush2.bf16.msra.mxu0 0
        %1433 = vmatprep.subr.bf16.mxu0 0
        %1434 = vmatpush2.bf16.msra.mxu0 0
        %1435 = vmatprep.subr.bf16.mxu0 0
        %1436 = vmatpush2.bf16.msra.mxu0 0
        %1437 = vmatprep.subr.bf16.mxu0 0
        %1438 = vmatpush2.bf16.msra.mxu0 0
        %1439 = vmatprep.mubr.bf16.mxu0 0
        %1440 = vmatmul.mubr.bf16.gmra.mxu0 %v644
        %v1441 = vpop.f32.mrf.mxu0
        %v1442 = vadd.f32 0.0, %v1441
        %v1443 = vpop.f32.mrf.mxu0
        %v1444 = vpop.f32.mrf.mxu0
        %v1445 = vadd.f32 0.0, %v1444
        %v1446 = vpop.f32.mrf.mxu0
        %1447 = vmatprep.mubr.bf16.mxu0 0
        %1448 = vmatmul.mubr.bf16.gmra.mxu0 %v647
        %v1449 = vpop.f32.mrf.mxu0
        %v1450 = vadd.f32 0.0, %v1449
        %v1451 = vpop.f32.mrf.mxu0
        %v1452 = vpop.f32.mrf.mxu0
        %v1453 = vadd.f32 0.0, %v1452
        %v1454 = vpop.f32.mrf.mxu0
        %1455 = vdwg.mxu0
        %s1456 = scalar_lea.vmem %s7, 16
        %v1457 = vld [vmem:[%s1456] sm:$0xf]
        %v1458 = vld [vmem:[%s1456 + $0x4] sm:$0xf]
        %v1459 = vld [vmem:[%s1456 + $0x8] sm:$0xf]
        %v1460 = vld [vmem:[%s1456 + $0xc] sm:$0xf]
        %v1465 = vunpack.c.l.b16 %v1457
        %v1466 = vunpack.c.l.b16 %v1458
        %v1467 = vunpack.c.l.b16 %v1459
        %v1468 = vunpack.c.l.b16 %v1460
        %v1469 = vpack.c.b16 %v1466, %v1465
        %v1470 = vpack.c.b16 %v1468, %v1467
        %1473 = vmatprep.subr.bf16.mxu0 0
        %1474 = vmatpush1.bf16.msra.mxu0 0
        %1475 = vmatprep.subr.bf16.mxu0 0
        %1476 = vmatpush1.bf16.msra.mxu0 0
        %1477 = vmatprep.subr.bf16.mxu0 0
        %1478 = vmatpush1.bf16.msra.mxu0 0
        %1479 = vmatprep.subr.bf16.mxu0 0
        %1480 = vmatpush1.bf16.msra.mxu0 0
        %1481 = vmatprep.subr.bf16.mxu0 0
        %1482 = vmatpush1.bf16.msra.mxu0 0
        %1483 = vmatprep.subr.bf16.mxu0 0
        %1484 = vmatpush1.bf16.msra.mxu0 0
        %1485 = vmatprep.subr.bf16.mxu0 0
        %1486 = vmatpush1.bf16.msra.mxu0 %v1470
        %1487 = vmatprep.subr.bf16.mxu0 0
        %1488 = vmatpush1.bf16.msra.mxu0 %v1469
        %1489 = vmatprep.subr.bf16.mxu0 0
        %1490 = vmatpush2.bf16.msra.mxu0 0
        %1491 = vmatprep.subr.bf16.mxu0 0
        %1492 = vmatpush2.bf16.msra.mxu0 0
        %1493 = vmatprep.subr.bf16.mxu0 0
        %1494 = vmatpush2.bf16.msra.mxu0 0
        %1495 = vmatprep.subr.bf16.mxu0 0
        %1496 = vmatpush2.bf16.msra.mxu0 0
        %1497 = vmatprep.subr.bf16.mxu0 0
        %1498 = vmatpush2.bf16.msra.mxu0 0
        %1499 = vmatprep.subr.bf16.mxu0 0
        %1500 = vmatpush2.bf16.msra.mxu0 0
        %1501 = vmatprep.subr.bf16.mxu0 0
        %1502 = vmatpush2.bf16.msra.mxu0 0
        %1503 = vmatprep.subr.bf16.mxu0 0
        %1504 = vmatpush2.bf16.msra.mxu0 0
        %1505 = vmatprep.mubr.bf16.mxu0 0
        %1506 = vmatmul.mubr.bf16.gmra.mxu0 %v715
        %v1507 = vpop.f32.mrf.mxu0
        %v1508 = vadd.f32 0.0, %v1507
        %v1509 = vpop.f32.mrf.mxu0
        %v1510 = vpop.f32.mrf.mxu0
        %v1511 = vadd.f32 0.0, %v1510
        %v1512 = vpop.f32.mrf.mxu0
        %1513 = vmatprep.mubr.bf16.mxu0 0
        %1514 = vmatmul.mubr.bf16.gmra.mxu0 %v718
        %v1515 = vpop.f32.mrf.mxu0
        %v1516 = vadd.f32 0.0, %v1515
        %v1517 = vpop.f32.mrf.mxu0
        %v1518 = vpop.f32.mrf.mxu0
        %v1519 = vadd.f32 0.0, %v1518
        %v1520 = vpop.f32.mrf.mxu0
        %1521 = vmatprep.mubr.bf16.mxu0 0
        %1522 = vmatmul.mubr.bf16.gmra.mxu0 %v721
        %v1523 = vpop.f32.mrf.mxu0
        %v1524 = vadd.f32 0.0, %v1523
        %v1525 = vpop.f32.mrf.mxu0
        %v1526 = vpop.f32.mrf.mxu0
        %v1527 = vadd.f32 0.0, %v1526
        %v1528 = vpop.f32.mrf.mxu0
        %1529 = vmatprep.mubr.bf16.mxu0 0
        %1530 = vmatmul.mubr.bf16.gmra.mxu0 %v724
        %v1531 = vpop.f32.mrf.mxu0
        %v1532 = vadd.f32 0.0, %v1531
        %v1533 = vpop.f32.mrf.mxu0
        %v1534 = vpop.f32.mrf.mxu0
        %v1535 = vadd.f32 0.0, %v1534
        %v1536 = vpop.f32.mrf.mxu0
        %1537 = vdwg.mxu0
        %s1538 = scalar_lea.vmem %s8, 16
        %v1539 = vld [vmem:[%s1538] sm:$0xf]
        %v1540 = vld [vmem:[%s1538 + $0x4] sm:$0xf]
        %v1541 = vld [vmem:[%s1538 + $0x8] sm:$0xf]
        %v1542 = vld [vmem:[%s1538 + $0xc] sm:$0xf]
        %v1547 = vunpack.c.l.b16 %v1539
        %v1548 = vunpack.c.l.b16 %v1540
        %v1549 = vunpack.c.l.b16 %v1541
        %v1550 = vunpack.c.l.b16 %v1542
        %v1551 = vpack.c.b16 %v1548, %v1547
        %v1552 = vpack.c.b16 %v1550, %v1549
        %1555 = vmatprep.subr.bf16.mxu0 0
        %1556 = vmatpush1.bf16.msra.mxu0 0
        %1557 = vmatprep.subr.bf16.mxu0 0
        %1558 = vmatpush1.bf16.msra.mxu0 0
        %1559 = vmatprep.subr.bf16.mxu0 0
        %1560 = vmatpush1.bf16.msra.mxu0 0
        %1561 = vmatprep.subr.bf16.mxu0 0
        %1562 = vmatpush1.bf16.msra.mxu0 0
        %1563 = vmatprep.subr.bf16.mxu0 0
        %1564 = vmatpush1.bf16.msra.mxu0 0
        %1565 = vmatprep.subr.bf16.mxu0 0
        %1566 = vmatpush1.bf16.msra.mxu0 0
        %1567 = vmatprep.subr.bf16.mxu0 0
        %1568 = vmatpush1.bf16.msra.mxu0 %v1552
        %1569 = vmatprep.subr.bf16.mxu0 0
        %1570 = vmatpush1.bf16.msra.mxu0 %v1551
        %1571 = vmatprep.subr.bf16.mxu0 0
        %1572 = vmatpush2.bf16.msra.mxu0 0
        %1573 = vmatprep.subr.bf16.mxu0 0
        %1574 = vmatpush2.bf16.msra.mxu0 0
        %1575 = vmatprep.subr.bf16.mxu0 0
        %1576 = vmatpush2.bf16.msra.mxu0 0
        %1577 = vmatprep.subr.bf16.mxu0 0
        %1578 = vmatpush2.bf16.msra.mxu0 0
        %1579 = vmatprep.subr.bf16.mxu0 0
        %1580 = vmatpush2.bf16.msra.mxu0 0
        %1581 = vmatprep.subr.bf16.mxu0 0
        %1582 = vmatpush2.bf16.msra.mxu0 0
        %1583 = vmatprep.subr.bf16.mxu0 0
        %1584 = vmatpush2.bf16.msra.mxu0 0
        %1585 = vmatprep.subr.bf16.mxu0 0
        %1586 = vmatpush2.bf16.msra.mxu0 0
        %1587 = vmatprep.mubr.bf16.mxu0 0
        %1588 = vmatmul.mubr.bf16.gmra.mxu0 %v715
        %v1589 = vpop.f32.mrf.mxu0
        %v1590 = vadd.f32 0.0, %v1589
        %v1591 = vpop.f32.mrf.mxu0
        %v1592 = vpop.f32.mrf.mxu0
        %v1593 = vadd.f32 0.0, %v1592
        %v1594 = vpop.f32.mrf.mxu0
        %1595 = vmatprep.mubr.bf16.mxu0 0
        %1596 = vmatmul.mubr.bf16.gmra.mxu0 %v718
        %v1597 = vpop.f32.mrf.mxu0
        %v1598 = vadd.f32 0.0, %v1597
        %v1599 = vpop.f32.mrf.mxu0
        %v1600 = vpop.f32.mrf.mxu0
        %v1601 = vadd.f32 0.0, %v1600
        %v1602 = vpop.f32.mrf.mxu0
        %1603 = vmatprep.mubr.bf16.mxu0 0
        %1604 = vmatmul.mubr.bf16.gmra.mxu0 %v721
        %v1605 = vpop.f32.mrf.mxu0
        %v1606 = vadd.f32 0.0, %v1605
        %v1607 = vpop.f32.mrf.mxu0
        %v1608 = vpop.f32.mrf.mxu0
        %v1609 = vadd.f32 0.0, %v1608
        %v1610 = vpop.f32.mrf.mxu0
        %1611 = vmatprep.mubr.bf16.mxu0 0
        %1612 = vmatmul.mubr.bf16.gmra.mxu0 %v724
        %v1613 = vpop.f32.mrf.mxu0
        %v1614 = vadd.f32 0.0, %v1613
        %v1615 = vpop.f32.mrf.mxu0
        %v1616 = vpop.f32.mrf.mxu0
        %v1617 = vadd.f32 0.0, %v1616
        %v1618 = vpop.f32.mrf.mxu0
        %1619 = vdwg.mxu0
        %v1620 = vmul.f32 %v1442, 0.25
        %v1621 = vmul.f32 %v1445, 0.25
        %v1622 = vmul.f32 %v1450, 0.25
        %v1623 = vmul.f32 %v1453, 0.25
        %v1624 = vpack.c.bf16 %v1621, %v1620
        %v1625 = vpack.c.bf16 %v1623, %v1622
        %v1628 = vunpack.c.l.b16 %v1624
        %v1629 = vunpack.c.h.b16 %v1624
        %v1630 = vunpack.c.l.b16 %v1625
        %v1631 = vunpack.c.h.b16 %v1625
        %v1632 = vpack.c.b16 %v1628, %v1628
        %v1633 = vpack.c.b16 %v1629, %v1629
        %v1634 = vpack.c.b16 %v1630, %v1630
        %v1635 = vpack.c.b16 %v1631, %v1631
        %v1636 = vpack.c.bf16 %v1511, %v1508
        %v1637 = vpack.c.bf16 %v1519, %v1516
        %v1638 = vpack.c.bf16 %v1527, %v1524
        %v1639 = vpack.c.bf16 %v1535, %v1532
        %v1640 = vpack.c.bf16 %v1593, %v1590
        %v1641 = vpack.c.bf16 %v1601, %v1598
        %v1642 = vpack.c.bf16 %v1609, %v1606
        %v1643 = vpack.c.bf16 %v1617, %v1614
        %v1645 = vsel %vm896, %v1632, 0
        %v1648 = vsel %vm896, %v1636, 0
        %1650 = vmatprep.subr.bf16.mxu0 0
        %1651 = vmatpush1.bf16.xpose.msra.mxu0 0
        %1652 = vmatprep.subr.bf16.mxu0 0
        %1653 = vmatpush1.bf16.xpose.msra.mxu0 0
        %1654 = vmatprep.subr.bf16.mxu0 0
        %1655 = vmatpush1.bf16.xpose.msra.mxu0 0
        %1656 = vmatprep.subr.bf16.mxu0 0
        %1657 = vmatpush1.bf16.xpose.msra.mxu0 0
        %1658 = vmatprep.subr.bf16.mxu0 0
        %1659 = vmatpush1.bf16.xpose.msra.mxu0 0
        %1660 = vmatprep.subr.bf16.mxu0 0
        %1661 = vmatpush1.bf16.xpose.msra.mxu0 0
        %1662 = vmatprep.subr.bf16.mxu0 0
        %1663 = vmatpush1.bf16.xpose.msra.mxu0 0
        %1664 = vmatprep.subr.bf16.mxu0 0
        %1665 = vmatpush1.bf16.xpose.msra.mxu0 %v1648
        %1666 = vmatprep.subr.bf16.mxu0 0
        %1667 = vmatpush2.bf16.xpose.msra.mxu0 0
        %1668 = vmatprep.subr.bf16.mxu0 0
        %1669 = vmatpush2.bf16.xpose.msra.mxu0 0
        %1670 = vmatprep.subr.bf16.mxu0 0
        %1671 = vmatpush2.bf16.xpose.msra.mxu0 0
        %1672 = vmatprep.subr.bf16.mxu0 0
        %1673 = vmatpush2.bf16.xpose.msra.mxu0 0
        %1674 = vmatprep.subr.bf16.mxu0 0
        %1675 = vmatpush2.bf16.xpose.msra.mxu0 0
        %1676 = vmatprep.subr.bf16.mxu0 0
        %1677 = vmatpush2.bf16.xpose.msra.mxu0 0
        %1678 = vmatprep.subr.bf16.mxu0 0
        %1679 = vmatpush2.bf16.xpose.msra.mxu0 0
        %1680 = vmatprep.subr.bf16.mxu0 0
        %1681 = vmatpush2.bf16.xpose.msra.mxu0 0
        %1682 = vmatprep.mubr.bf16.mxu0 0
        %1683 = vmatmul.mubr.bf16.gmra.mxu0 %v1645
        %v1684 = vpop.f32.mrf.mxu0
        %v1685 = vadd.f32 0.0, %v1684
        %v1686 = vpop.f32.mrf.mxu0
        %v1687 = vpop.f32.mrf.mxu0
        %v1688 = vpop.f32.mrf.mxu0
        %1689 = vdwg.mxu0
        %v1691 = vsel %vm896, %v1633, 0
        %v1694 = vsel %vm896, %v1637, 0
        %1696 = vmatprep.subr.bf16.mxu0 0
        %1697 = vmatpush1.bf16.xpose.msra.mxu0 0
        %1698 = vmatprep.subr.bf16.mxu0 0
        %1699 = vmatpush1.bf16.xpose.msra.mxu0 0
        %1700 = vmatprep.subr.bf16.mxu0 0
        %1701 = vmatpush1.bf16.xpose.msra.mxu0 0
        %1702 = vmatprep.subr.bf16.mxu0 0
        %1703 = vmatpush1.bf16.xpose.msra.mxu0 0
        %1704 = vmatprep.subr.bf16.mxu0 0
        %1705 = vmatpush1.bf16.xpose.msra.mxu0 0
        %1706 = vmatprep.subr.bf16.mxu0 0
        %1707 = vmatpush1.bf16.xpose.msra.mxu0 0
        %1708 = vmatprep.subr.bf16.mxu0 0
        %1709 = vmatpush1.bf16.xpose.msra.mxu0 0
        %1710 = vmatprep.subr.bf16.mxu0 0
        %1711 = vmatpush1.bf16.xpose.msra.mxu0 %v1694
        %1712 = vmatprep.subr.bf16.mxu0 0
        %1713 = vmatpush2.bf16.xpose.msra.mxu0 0
        %1714 = vmatprep.subr.bf16.mxu0 0
        %1715 = vmatpush2.bf16.xpose.msra.mxu0 0
        %1716 = vmatprep.subr.bf16.mxu0 0
        %1717 = vmatpush2.bf16.xpose.msra.mxu0 0
        %1718 = vmatprep.subr.bf16.mxu0 0
        %1719 = vmatpush2.bf16.xpose.msra.mxu0 0
        %1720 = vmatprep.subr.bf16.mxu0 0
        %1721 = vmatpush2.bf16.xpose.msra.mxu0 0
        %1722 = vmatprep.subr.bf16.mxu0 0
        %1723 = vmatpush2.bf16.xpose.msra.mxu0 0
        %1724 = vmatprep.subr.bf16.mxu0 0
        %1725 = vmatpush2.bf16.xpose.msra.mxu0 0
        %1726 = vmatprep.subr.bf16.mxu0 0
        %1727 = vmatpush2.bf16.xpose.msra.mxu0 0
        %1728 = vmatprep.mubr.bf16.mxu0 0
        %1729 = vmatmul.mubr.bf16.gmra.mxu0 %v1691
        %v1730 = vpop.f32.mrf.mxu0
        %v1731 = vadd.f32 0.0, %v1730
        %v1732 = vpop.f32.mrf.mxu0
        %v1733 = vpop.f32.mrf.mxu0
        %v1734 = vpop.f32.mrf.mxu0
        %1735 = vdwg.mxu0
        %v1737 = vsel %vm896, %v1634, 0
        %v1740 = vsel %vm896, %v1638, 0
        %1742 = vmatprep.subr.bf16.mxu0 0
        %1743 = vmatpush1.bf16.xpose.msra.mxu0 0
        %1744 = vmatprep.subr.bf16.mxu0 0
        %1745 = vmatpush1.bf16.xpose.msra.mxu0 0
        %1746 = vmatprep.subr.bf16.mxu0 0
        %1747 = vmatpush1.bf16.xpose.msra.mxu0 0
        %1748 = vmatprep.subr.bf16.mxu0 0
        %1749 = vmatpush1.bf16.xpose.msra.mxu0 0
        %1750 = vmatprep.subr.bf16.mxu0 0
        %1751 = vmatpush1.bf16.xpose.msra.mxu0 0
        %1752 = vmatprep.subr.bf16.mxu0 0
        %1753 = vmatpush1.bf16.xpose.msra.mxu0 0
        %1754 = vmatprep.subr.bf16.mxu0 0
        %1755 = vmatpush1.bf16.xpose.msra.mxu0 0
        %1756 = vmatprep.subr.bf16.mxu0 0
        %1757 = vmatpush1.bf16.xpose.msra.mxu0 %v1740
        %1758 = vmatprep.subr.bf16.mxu0 0
        %1759 = vmatpush2.bf16.xpose.msra.mxu0 0
        %1760 = vmatprep.subr.bf16.mxu0 0
        %1761 = vmatpush2.bf16.xpose.msra.mxu0 0
        %1762 = vmatprep.subr.bf16.mxu0 0
        %1763 = vmatpush2.bf16.xpose.msra.mxu0 0
        %1764 = vmatprep.subr.bf16.mxu0 0
        %1765 = vmatpush2.bf16.xpose.msra.mxu0 0
        %1766 = vmatprep.subr.bf16.mxu0 0
        %1767 = vmatpush2.bf16.xpose.msra.mxu0 0
        %1768 = vmatprep.subr.bf16.mxu0 0
        %1769 = vmatpush2.bf16.xpose.msra.mxu0 0
        %1770 = vmatprep.subr.bf16.mxu0 0
        %1771 = vmatpush2.bf16.xpose.msra.mxu0 0
        %1772 = vmatprep.subr.bf16.mxu0 0
        %1773 = vmatpush2.bf16.xpose.msra.mxu0 0
        %1774 = vmatprep.mubr.bf16.mxu0 0
        %1775 = vmatmul.mubr.bf16.gmra.mxu0 %v1737
        %v1776 = vpop.f32.mrf.mxu0
        %v1777 = vadd.f32 0.0, %v1776
        %v1778 = vpop.f32.mrf.mxu0
        %v1779 = vpop.f32.mrf.mxu0
        %v1780 = vpop.f32.mrf.mxu0
        %1781 = vdwg.mxu0
        %v1783 = vsel %vm896, %v1635, 0
        %v1786 = vsel %vm896, %v1639, 0
        %1788 = vmatprep.subr.bf16.mxu0 0
        %1789 = vmatpush1.bf16.xpose.msra.mxu0 0
        %1790 = vmatprep.subr.bf16.mxu0 0
        %1791 = vmatpush1.bf16.xpose.msra.mxu0 0
        %1792 = vmatprep.subr.bf16.mxu0 0
        %1793 = vmatpush1.bf16.xpose.msra.mxu0 0
        %1794 = vmatprep.subr.bf16.mxu0 0
        %1795 = vmatpush1.bf16.xpose.msra.mxu0 0
        %1796 = vmatprep.subr.bf16.mxu0 0
        %1797 = vmatpush1.bf16.xpose.msra.mxu0 0
        %1798 = vmatprep.subr.bf16.mxu0 0
        %1799 = vmatpush1.bf16.xpose.msra.mxu0 0
        %1800 = vmatprep.subr.bf16.mxu0 0
        %1801 = vmatpush1.bf16.xpose.msra.mxu0 0
        %1802 = vmatprep.subr.bf16.mxu0 0
        %1803 = vmatpush1.bf16.xpose.msra.mxu0 %v1786
        %1804 = vmatprep.subr.bf16.mxu0 0
        %1805 = vmatpush2.bf16.xpose.msra.mxu0 0
        %1806 = vmatprep.subr.bf16.mxu0 0
        %1807 = vmatpush2.bf16.xpose.msra.mxu0 0
        %1808 = vmatprep.subr.bf16.mxu0 0
        %1809 = vmatpush2.bf16.xpose.msra.mxu0 0
        %1810 = vmatprep.subr.bf16.mxu0 0
        %1811 = vmatpush2.bf16.xpose.msra.mxu0 0
        %1812 = vmatprep.subr.bf16.mxu0 0
        %1813 = vmatpush2.bf16.xpose.msra.mxu0 0
        %1814 = vmatprep.subr.bf16.mxu0 0
        %1815 = vmatpush2.bf16.xpose.msra.mxu0 0
        %1816 = vmatprep.subr.bf16.mxu0 0
        %1817 = vmatpush2.bf16.xpose.msra.mxu0 0
        %1818 = vmatprep.subr.bf16.mxu0 0
        %1819 = vmatpush2.bf16.xpose.msra.mxu0 0
        %1820 = vmatprep.mubr.bf16.mxu0 0
        %1821 = vmatmul.mubr.bf16.gmra.mxu0 %v1783
        %v1822 = vpop.f32.mrf.mxu0
        %v1823 = vadd.f32 0.0, %v1822
        %v1824 = vpop.f32.mrf.mxu0
        %v1825 = vpop.f32.mrf.mxu0
        %v1826 = vpop.f32.mrf.mxu0
        %1827 = vdwg.mxu0
        %v1828 = vsel %vm896, %v1685, -inf
        %1829 = vmax.xlane.f32.xlu0 %v1828
        %v1830 = vpop.xlane.xlu0 %1829
        %v1831 = vsel %vm896, %v1731, -inf
        %1832 = vmax.xlane.f32.xlu0 %v1831
        %v1833 = vpop.xlane.xlu0 %1832
        %v1834 = vsel %vm896, %v1777, -inf
        %1835 = vmax.xlane.f32.xlu0 %v1834
        %v1836 = vpop.xlane.xlu0 %1835
        %v1837 = vsel %vm896, %v1823, -inf
        %1838 = vmax.xlane.f32.xlu0 %v1837
        %v1839 = vpop.xlane.xlu0 %1838
        %v1840 = vsub.f32 %v1685, %v1830
        %v1841 = vsub.f32 %v1731, %v1833
        %v1842 = vsub.f32 %v1777, %v1836
        %v1843 = vsub.f32 %v1823, %v1839
        %v1844 = vmul.f32 %v1840, 1.442695
        %v1845 = vpow.pop %v1844
        %v1846 = vmul.f32 %v1841, 1.442695
        %v1847 = vpow.pop %v1846
        %v1848 = vmul.f32 %v1842, 1.442695
        %v1849 = vpow.pop %v1848
        %v1850 = vmul.f32 %v1843, 1.442695
        %v1851 = vpow.pop %v1850
        %v1852 = vsel %vm896, %v1845, 0.0
        %1853 = vadd.xlane.f32.xlu0 %v1852
        %v1854 = vpop.xlane.xlu0 %1853
        %v1855 = vsel %vm896, %v1847, 0.0
        %1856 = vadd.xlane.f32.xlu0 %v1855
        %v1857 = vpop.xlane.xlu0 %1856
        %v1858 = vsel %vm896, %v1849, 0.0
        %1859 = vadd.xlane.f32.xlu0 %v1858
        %v1860 = vpop.xlane.xlu0 %1859
        %v1861 = vsel %vm896, %v1851, 0.0
        %1862 = vadd.xlane.f32.xlu0 %v1861
        %v1863 = vpop.xlane.xlu0 %1862
        %v1864 = vrcp.pop %v1854
        %v1865 = vrcp.pop %v1857
        %v1866 = vrcp.pop %v1860
        %v1867 = vrcp.pop %v1863
        %v1868 = vmul.f32 %v1845, %v1864
        %v1869 = vmul.f32 %v1847, %v1865
        %v1870 = vmul.f32 %v1849, %v1866
        %v1871 = vmul.f32 %v1851, %v1867
        %v1872 = vpack.c.bf16 %v1868, %v1868
        %v1873 = vpack.c.bf16 %v1869, %v1869
        %v1874 = vpack.c.bf16 %v1870, %v1870
        %v1875 = vpack.c.bf16 %v1871, %v1871
        %v1877 = vsel %vm896, %v1872, 0
        %1879 = vmatprep.subr.bf16.mxu0 0
        %1880 = vmatpush1.bf16.msra.mxu0 0
        %1881 = vmatprep.subr.bf16.mxu0 0
        %1882 = vmatpush1.bf16.msra.mxu0 0
        %1883 = vmatprep.subr.bf16.mxu0 0
        %1884 = vmatpush1.bf16.msra.mxu0 0
        %1885 = vmatprep.subr.bf16.mxu0 0
        %1886 = vmatpush1.bf16.msra.mxu0 0
        %1887 = vmatprep.subr.bf16.mxu0 0
        %1888 = vmatpush1.bf16.msra.mxu0 0
        %1889 = vmatprep.subr.bf16.mxu0 0
        %1890 = vmatpush1.bf16.msra.mxu0 0
        %1891 = vmatprep.subr.bf16.mxu0 0
        %1892 = vmatpush1.bf16.msra.mxu0 0
        %1893 = vmatprep.subr.bf16.mxu0 0
        %1894 = vmatpush1.bf16.msra.mxu0 %v1640
        %1895 = vmatprep.subr.bf16.mxu0 0
        %1896 = vmatpush2.bf16.msra.mxu0 0
        %1897 = vmatprep.subr.bf16.mxu0 0
        %1898 = vmatpush2.bf16.msra.mxu0 0
        %1899 = vmatprep.subr.bf16.mxu0 0
        %1900 = vmatpush2.bf16.msra.mxu0 0
        %1901 = vmatprep.subr.bf16.mxu0 0
        %1902 = vmatpush2.bf16.msra.mxu0 0
        %1903 = vmatprep.subr.bf16.mxu0 0
        %1904 = vmatpush2.bf16.msra.mxu0 0
        %1905 = vmatprep.subr.bf16.mxu0 0
        %1906 = vmatpush2.bf16.msra.mxu0 0
        %1907 = vmatprep.subr.bf16.mxu0 0
        %1908 = vmatpush2.bf16.msra.mxu0 0
        %1909 = vmatprep.subr.bf16.mxu0 0
        %1910 = vmatpush2.bf16.msra.mxu0 0
        %1911 = vmatprep.mubr.bf16.mxu0 0
        %1912 = vmatmul.mubr.bf16.gmra.mxu0 %v1877
        %v1913 = vpop.f32.mrf.mxu0
        %v1914 = vadd.f32 0.0, %v1913
        %v1915 = vpop.f32.mrf.mxu0
        %v1916 = vpop.f32.mrf.mxu0
        %v1917 = vpop.f32.mrf.mxu0
        %1918 = vdwg.mxu0
        %v1920 = vsel %vm896, %v1873, 0
        %1922 = vmatprep.subr.bf16.mxu0 0
        %1923 = vmatpush1.bf16.msra.mxu0 0
        %1924 = vmatprep.subr.bf16.mxu0 0
        %1925 = vmatpush1.bf16.msra.mxu0 0
        %1926 = vmatprep.subr.bf16.mxu0 0
        %1927 = vmatpush1.bf16.msra.mxu0 0
        %1928 = vmatprep.subr.bf16.mxu0 0
        %1929 = vmatpush1.bf16.msra.mxu0 0
        %1930 = vmatprep.subr.bf16.mxu0 0
        %1931 = vmatpush1.bf16.msra.mxu0 0
        %1932 = vmatprep.subr.bf16.mxu0 0
        %1933 = vmatpush1.bf16.msra.mxu0 0
        %1934 = vmatprep.subr.bf16.mxu0 0
        %1935 = vmatpush1.bf16.msra.mxu0 0
        %1936 = vmatprep.subr.bf16.mxu0 0
        %1937 = vmatpush1.bf16.msra.mxu0 %v1641
        %1938 = vmatprep.subr.bf16.mxu0 0
        %1939 = vmatpush2.bf16.msra.mxu0 0
        %1940 = vmatprep.subr.bf16.mxu0 0
        %1941 = vmatpush2.bf16.msra.mxu0 0
        %1942 = vmatprep.subr.bf16.mxu0 0
        %1943 = vmatpush2.bf16.msra.mxu0 0
        %1944 = vmatprep.subr.bf16.mxu0 0
        %1945 = vmatpush2.bf16.msra.mxu0 0
        %1946 = vmatprep.subr.bf16.mxu0 0
        %1947 = vmatpush2.bf16.msra.mxu0 0
        %1948 = vmatprep.subr.bf16.mxu0 0
        %1949 = vmatpush2.bf16.msra.mxu0 0
        %1950 = vmatprep.subr.bf16.mxu0 0
        %1951 = vmatpush2.bf16.msra.mxu0 0
        %1952 = vmatprep.subr.bf16.mxu0 0
        %1953 = vmatpush2.bf16.msra.mxu0 0
        %1954 = vmatprep.mubr.bf16.mxu0 0
        %1955 = vmatmul.mubr.bf16.gmra.mxu0 %v1920
        %v1956 = vpop.f32.mrf.mxu0
        %v1957 = vadd.f32 0.0, %v1956
        %v1958 = vpop.f32.mrf.mxu0
        %v1959 = vpop.f32.mrf.mxu0
        %v1960 = vpop.f32.mrf.mxu0
        %1961 = vdwg.mxu0
        %v1963 = vsel %vm896, %v1874, 0
        %1965 = vmatprep.subr.bf16.mxu0 0
        %1966 = vmatpush1.bf16.msra.mxu0 0
        %1967 = vmatprep.subr.bf16.mxu0 0
        %1968 = vmatpush1.bf16.msra.mxu0 0
        %1969 = vmatprep.subr.bf16.mxu0 0
        %1970 = vmatpush1.bf16.msra.mxu0 0
        %1971 = vmatprep.subr.bf16.mxu0 0
        %1972 = vmatpush1.bf16.msra.mxu0 0
        %1973 = vmatprep.subr.bf16.mxu0 0
        %1974 = vmatpush1.bf16.msra.mxu0 0
        %1975 = vmatprep.subr.bf16.mxu0 0
        %1976 = vmatpush1.bf16.msra.mxu0 0
        %1977 = vmatprep.subr.bf16.mxu0 0
        %1978 = vmatpush1.bf16.msra.mxu0 0
        %1979 = vmatprep.subr.bf16.mxu0 0
        %1980 = vmatpush1.bf16.msra.mxu0 %v1642
        %1981 = vmatprep.subr.bf16.mxu0 0
        %1982 = vmatpush2.bf16.msra.mxu0 0
        %1983 = vmatprep.subr.bf16.mxu0 0
        %1984 = vmatpush2.bf16.msra.mxu0 0
        %1985 = vmatprep.subr.bf16.mxu0 0
        %1986 = vmatpush2.bf16.msra.mxu0 0
        %1987 = vmatprep.subr.bf16.mxu0 0
        %1988 = vmatpush2.bf16.msra.mxu0 0
        %1989 = vmatprep.subr.bf16.mxu0 0
        %1990 = vmatpush2.bf16.msra.mxu0 0
        %1991 = vmatprep.subr.bf16.mxu0 0
        %1992 = vmatpush2.bf16.msra.mxu0 0
        %1993 = vmatprep.subr.bf16.mxu0 0
        %1994 = vmatpush2.bf16.msra.mxu0 0
        %1995 = vmatprep.subr.bf16.mxu0 0
        %1996 = vmatpush2.bf16.msra.mxu0 0
        %1997 = vmatprep.mubr.bf16.mxu0 0
        %1998 = vmatmul.mubr.bf16.gmra.mxu0 %v1963
        %v1999 = vpop.f32.mrf.mxu0
        %v2000 = vadd.f32 0.0, %v1999
        %v2001 = vpop.f32.mrf.mxu0
        %v2002 = vpop.f32.mrf.mxu0
        %v2003 = vpop.f32.mrf.mxu0
        %2004 = vdwg.mxu0
        %v2006 = vsel %vm896, %v1875, 0
        %2008 = vmatprep.subr.bf16.mxu0 0
        %2009 = vmatpush1.bf16.msra.mxu0 0
        %2010 = vmatprep.subr.bf16.mxu0 0
        %2011 = vmatpush1.bf16.msra.mxu0 0
        %2012 = vmatprep.subr.bf16.mxu0 0
        %2013 = vmatpush1.bf16.msra.mxu0 0
        %2014 = vmatprep.subr.bf16.mxu0 0
        %2015 = vmatpush1.bf16.msra.mxu0 0
        %2016 = vmatprep.subr.bf16.mxu0 0
        %2017 = vmatpush1.bf16.msra.mxu0 0
        %2018 = vmatprep.subr.bf16.mxu0 0
        %2019 = vmatpush1.bf16.msra.mxu0 0
        %2020 = vmatprep.subr.bf16.mxu0 0
        %2021 = vmatpush1.bf16.msra.mxu0 0
        %2022 = vmatprep.subr.bf16.mxu0 0
        %2023 = vmatpush1.bf16.msra.mxu0 %v1643
        %2024 = vmatprep.subr.bf16.mxu0 0
        %2025 = vmatpush2.bf16.msra.mxu0 0
        %2026 = vmatprep.subr.bf16.mxu0 0
        %2027 = vmatpush2.bf16.msra.mxu0 0
        %2028 = vmatprep.subr.bf16.mxu0 0
        %2029 = vmatpush2.bf16.msra.mxu0 0
        %2030 = vmatprep.subr.bf16.mxu0 0
        %2031 = vmatpush2.bf16.msra.mxu0 0
        %2032 = vmatprep.subr.bf16.mxu0 0
        %2033 = vmatpush2.bf16.msra.mxu0 0
        %2034 = vmatprep.subr.bf16.mxu0 0
        %2035 = vmatpush2.bf16.msra.mxu0 0
        %2036 = vmatprep.subr.bf16.mxu0 0
        %2037 = vmatpush2.bf16.msra.mxu0 0
        %2038 = vmatprep.subr.bf16.mxu0 0
        %2039 = vmatpush2.bf16.msra.mxu0 0
        %2040 = vmatprep.mubr.bf16.mxu0 0
        %2041 = vmatmul.mubr.bf16.gmra.mxu0 %v2006
        %v2042 = vpop.f32.mrf.mxu0
        %v2043 = vadd.f32 0.0, %v2042
        %v2044 = vpop.f32.mrf.mxu0
        %v2045 = vpop.f32.mrf.mxu0
        %v2046 = vpop.f32.mrf.mxu0
        %2047 = vdwg.mxu0
        %v2048 = vld [vmem:[#allocation2] sm:$0xff]
        %v2049 = vld [vmem:[#allocation2 + $0x8] sm:$0xff]
        %v2050 = vld [vmem:[#allocation2 + $0x10] sm:$0xff]
        %v2051 = vld [vmem:[#allocation2 + $0x18] sm:$0xff]
        %v2052 = vpack.c.bf16 %v1914, %v1914
        %v2053 = vpack.c.bf16 %v1957, %v1957
        %v2054 = vpack.c.bf16 %v2000, %v2000
        %v2055 = vpack.c.bf16 %v2043, %v2043
        %s2056 = scalar_lea.vmem %s9, 8
        %v2057 = vld [vmem:[%s2056] sm:$0xf]
        %v2058 = vld [vmem:[%s2056 + $0x4] sm:$0xf]
        %v2063 = vunpack.c.l.b16 %v2052
        %v2064 = vunpack.c.l.b16 %v2053
        %v2065 = vunpack.c.l.b16 %v2054
        %v2066 = vunpack.c.l.b16 %v2055
        %v2067 = vpack.c.b16 %v2064, %v2063
        %v2068 = vpack.c.b16 %v2066, %v2065
        %v2071 = vunpack.c.l.b16 %v2057
        %v2072 = vunpack.c.l.b16 %v2058
        %v2073 = vpack.c.b16 %v2072, %v2071
        %v2076 = vsel %vm896, %v2067, 0
        %v2079 = vsel %vm896, %v2068, 0
        %2081 = vmatprep.subr.bf16.mxu0 0
        %2082 = vmatpush1.bf16.msra.mxu0 0
        %2083 = vmatprep.subr.bf16.mxu0 0
        %2084 = vmatpush1.bf16.msra.mxu0 0
        %2085 = vmatprep.subr.bf16.mxu0 0
        %2086 = vmatpush1.bf16.msra.mxu0 0
        %2087 = vmatprep.subr.bf16.mxu0 0
        %2088 = vmatpush1.bf16.msra.mxu0 0
        %2089 = vmatprep.subr.bf16.mxu0 0
        %2090 = vmatpush1.bf16.msra.mxu0 0
        %2091 = vmatprep.subr.bf16.mxu0 0
        %2092 = vmatpush1.bf16.msra.mxu0 0
        %2093 = vmatprep.subr.bf16.mxu0 0
        %2094 = vmatpush1.bf16.msra.mxu0 0
        %2095 = vmatprep.subr.bf16.mxu0 0
        %2096 = vmatpush1.bf16.msra.mxu0 %v2073
        %2097 = vmatprep.subr.bf16.mxu0 0
        %2098 = vmatpush2.bf16.msra.mxu0 0
        %2099 = vmatprep.subr.bf16.mxu0 0
        %2100 = vmatpush2.bf16.msra.mxu0 0
        %2101 = vmatprep.subr.bf16.mxu0 0
        %2102 = vmatpush2.bf16.msra.mxu0 0
        %2103 = vmatprep.subr.bf16.mxu0 0
        %2104 = vmatpush2.bf16.msra.mxu0 0
        %2105 = vmatprep.subr.bf16.mxu0 0
        %2106 = vmatpush2.bf16.msra.mxu0 0
        %2107 = vmatprep.subr.bf16.mxu0 0
        %2108 = vmatpush2.bf16.msra.mxu0 0
        %2109 = vmatprep.subr.bf16.mxu0 0
        %2110 = vmatpush2.bf16.msra.mxu0 0
        %2111 = vmatprep.subr.bf16.mxu0 0
        %2112 = vmatpush2.bf16.msra.mxu0 0
        %2113 = vmatprep.mubr.bf16.mxu0 0
        %2114 = vmatmul.mubr.bf16.gmra.mxu0 %v2076
        %v2115 = vpop.f32.mrf.mxu0
        %v2116 = vadd.f32 0.0, %v2115
        %v2117 = vpop.f32.mrf.mxu0
        %v2118 = vpop.f32.mrf.mxu0
        %v2119 = vadd.f32 0.0, %v2118
        %v2120 = vpop.f32.mrf.mxu0
        %2121 = vmatprep.mubr.bf16.mxu0 0
        %2122 = vmatmul.mubr.bf16.gmra.mxu0 %v2079
        %v2123 = vpop.f32.mrf.mxu0
        %v2124 = vadd.f32 0.0, %v2123
        %v2125 = vpop.f32.mrf.mxu0
        %v2126 = vpop.f32.mrf.mxu0
        %v2127 = vadd.f32 0.0, %v2126
        %v2128 = vpop.f32.mrf.mxu0
        %2129 = vdwg.mxu0
        %v2130 = vadd.f32 %v2048, %v2116
        %v2131 = vadd.f32 %v2049, %v2119
        %v2132 = vadd.f32 %v2050, %v2124
        %v2133 = vadd.f32 %v2051, %v2127
        %2134 = vst.msk [vmem:[#allocation2] sm:$0xff] %vm415, %v2130
        %2135 = vst.msk [vmem:[#allocation2 + $0x8] sm:$0xff] %vm415, %v2131
        %2136 = vst.msk [vmem:[#allocation2 + $0x10] sm:$0xff] %vm415, %v2132
        %2137 = vst.msk [vmem:[#allocation2 + $0x18] sm:$0xff] %vm415, %v2133
        %s2138 = scalar_lea.vmem %s6, 32
        %v2139 = vld [vmem:[%s2138] sm:$0xf]
        %v2140 = vld [vmem:[%s2138 + $0x4] sm:$0xf]
        %v2141 = vld [vmem:[%s2138 + $0x8] sm:$0xf]
        %v2142 = vld [vmem:[%s2138 + $0xc] sm:$0xf]
        %v2147 = vunpack.c.l.b16 %v2139
        %v2148 = vunpack.c.l.b16 %v2140
        %v2149 = vunpack.c.l.b16 %v2141
        %v2150 = vunpack.c.l.b16 %v2142
        %v2151 = vpack.c.b16 %v2148, %v2147
        %v2152 = vpack.c.b16 %v2150, %v2149
        %2155 = vmatprep.subr.bf16.mxu0 0
        %2156 = vmatpush1.bf16.msra.mxu0 0
        %2157 = vmatprep.subr.bf16.mxu0 0
        %2158 = vmatpush1.bf16.msra.mxu0 0
        %2159 = vmatprep.subr.bf16.mxu0 0
        %2160 = vmatpush1.bf16.msra.mxu0 0
        %2161 = vmatprep.subr.bf16.mxu0 0
        %2162 = vmatpush1.bf16.msra.mxu0 0
        %2163 = vmatprep.subr.bf16.mxu0 0
        %2164 = vmatpush1.bf16.msra.mxu0 0
        %2165 = vmatprep.subr.bf16.mxu0 0
        %2166 = vmatpush1.bf16.msra.mxu0 0
        %2167 = vmatprep.subr.bf16.mxu0 0
        %2168 = vmatpush1.bf16.msra.mxu0 %v2152
        %2169 = vmatprep.subr.bf16.mxu0 0
        %2170 = vmatpush1.bf16.msra.mxu0 %v2151
        %2171 = vmatprep.subr.bf16.mxu0 0
        %2172 = vmatpush2.bf16.msra.mxu0 0
        %2173 = vmatprep.subr.bf16.mxu0 0
        %2174 = vmatpush2.bf16.msra.mxu0 0
        %2175 = vmatprep.subr.bf16.mxu0 0
        %2176 = vmatpush2.bf16.msra.mxu0 0
        %2177 = vmatprep.subr.bf16.mxu0 0
        %2178 = vmatpush2.bf16.msra.mxu0 0
        %2179 = vmatprep.subr.bf16.mxu0 0
        %2180 = vmatpush2.bf16.msra.mxu0 0
        %2181 = vmatprep.subr.bf16.mxu0 0
        %2182 = vmatpush2.bf16.msra.mxu0 0
        %2183 = vmatprep.subr.bf16.mxu0 0
        %2184 = vmatpush2.bf16.msra.mxu0 0
        %2185 = vmatprep.subr.bf16.mxu0 0
        %2186 = vmatpush2.bf16.msra.mxu0 0
        %2187 = vmatprep.mubr.bf16.mxu0 0
        %2188 = vmatmul.mubr.bf16.gmra.mxu0 %v644
        %v2189 = vpop.f32.mrf.mxu0
        %v2190 = vadd.f32 0.0, %v2189
        %v2191 = vpop.f32.mrf.mxu0
        %v2192 = vpop.f32.mrf.mxu0
        %v2193 = vadd.f32 0.0, %v2192
        %v2194 = vpop.f32.mrf.mxu0
        %2195 = vmatprep.mubr.bf16.mxu0 0
        %2196 = vmatmul.mubr.bf16.gmra.mxu0 %v647
        %v2197 = vpop.f32.mrf.mxu0
        %v2198 = vadd.f32 0.0, %v2197
        %v2199 = vpop.f32.mrf.mxu0
        %v2200 = vpop.f32.mrf.mxu0
        %v2201 = vadd.f32 0.0, %v2200
        %v2202 = vpop.f32.mrf.mxu0
        %2203 = vdwg.mxu0
        %s2204 = scalar_lea.vmem %s7, 32
        %v2205 = vld [vmem:[%s2204] sm:$0xf]
        %v2206 = vld [vmem:[%s2204 + $0x4] sm:$0xf]
        %v2207 = vld [vmem:[%s2204 + $0x8] sm:$0xf]
        %v2208 = vld [vmem:[%s2204 + $0xc] sm:$0xf]
        %v2213 = vunpack.c.l.b16 %v2205
        %v2214 = vunpack.c.l.b16 %v2206
        %v2215 = vunpack.c.l.b16 %v2207
        %v2216 = vunpack.c.l.b16 %v2208
        %v2217 = vpack.c.b16 %v2214, %v2213
        %v2218 = vpack.c.b16 %v2216, %v2215
        %2221 = vmatprep.subr.bf16.mxu0 0
        %2222 = vmatpush1.bf16.msra.mxu0 0
        %2223 = vmatprep.subr.bf16.mxu0 0
        %2224 = vmatpush1.bf16.msra.mxu0 0
        %2225 = vmatprep.subr.bf16.mxu0 0
        %2226 = vmatpush1.bf16.msra.mxu0 0
        %2227 = vmatprep.subr.bf16.mxu0 0
        %2228 = vmatpush1.bf16.msra.mxu0 0
        %2229 = vmatprep.subr.bf16.mxu0 0
        %2230 = vmatpush1.bf16.msra.mxu0 0
        %2231 = vmatprep.subr.bf16.mxu0 0
        %2232 = vmatpush1.bf16.msra.mxu0 0
        %2233 = vmatprep.subr.bf16.mxu0 0
        %2234 = vmatpush1.bf16.msra.mxu0 %v2218
        %2235 = vmatprep.subr.bf16.mxu0 0
        %2236 = vmatpush1.bf16.msra.mxu0 %v2217
        %2237 = vmatprep.subr.bf16.mxu0 0
        %2238 = vmatpush2.bf16.msra.mxu0 0
        %2239 = vmatprep.subr.bf16.mxu0 0
        %2240 = vmatpush2.bf16.msra.mxu0 0
        %2241 = vmatprep.subr.bf16.mxu0 0
        %2242 = vmatpush2.bf16.msra.mxu0 0
        %2243 = vmatprep.subr.bf16.mxu0 0
        %2244 = vmatpush2.bf16.msra.mxu0 0
        %2245 = vmatprep.subr.bf16.mxu0 0
        %2246 = vmatpush2.bf16.msra.mxu0 0
        %2247 = vmatprep.subr.bf16.mxu0 0
        %2248 = vmatpush2.bf16.msra.mxu0 0
        %2249 = vmatprep.subr.bf16.mxu0 0
        %2250 = vmatpush2.bf16.msra.mxu0 0
        %2251 = vmatprep.subr.bf16.mxu0 0
        %2252 = vmatpush2.bf16.msra.mxu0 0
        %2253 = vmatprep.mubr.bf16.mxu0 0
        %2254 = vmatmul.mubr.bf16.gmra.mxu0 %v715
        %v2255 = vpop.f32.mrf.mxu0
        %v2256 = vadd.f32 0.0, %v2255
        %v2257 = vpop.f32.mrf.mxu0
        %v2258 = vpop.f32.mrf.mxu0
        %v2259 = vadd.f32 0.0, %v2258
        %v2260 = vpop.f32.mrf.mxu0
        %2261 = vmatprep.mubr.bf16.mxu0 0
        %2262 = vmatmul.mubr.bf16.gmra.mxu0 %v718
        %v2263 = vpop.f32.mrf.mxu0
        %v2264 = vadd.f32 0.0, %v2263
        %v2265 = vpop.f32.mrf.mxu0
        %v2266 = vpop.f32.mrf.mxu0
        %v2267 = vadd.f32 0.0, %v2266
        %v2268 = vpop.f32.mrf.mxu0
        %2269 = vmatprep.mubr.bf16.mxu0 0
        %2270 = vmatmul.mubr.bf16.gmra.mxu0 %v721
        %v2271 = vpop.f32.mrf.mxu0
        %v2272 = vadd.f32 0.0, %v2271
        %v2273 = vpop.f32.mrf.mxu0
        %v2274 = vpop.f32.mrf.mxu0
        %v2275 = vadd.f32 0.0, %v2274
        %v2276 = vpop.f32.mrf.mxu0
        %2277 = vmatprep.mubr.bf16.mxu0 0
        %2278 = vmatmul.mubr.bf16.gmra.mxu0 %v724
        %v2279 = vpop.f32.mrf.mxu0
        %v2280 = vadd.f32 0.0, %v2279
        %v2281 = vpop.f32.mrf.mxu0
        %v2282 = vpop.f32.mrf.mxu0
        %v2283 = vadd.f32 0.0, %v2282
        %v2284 = vpop.f32.mrf.mxu0
        %2285 = vdwg.mxu0
        %s2286 = scalar_lea.vmem %s8, 32
        %v2287 = vld [vmem:[%s2286] sm:$0xf]
        %v2288 = vld [vmem:[%s2286 + $0x4] sm:$0xf]
        %v2289 = vld [vmem:[%s2286 + $0x8] sm:$0xf]
        %v2290 = vld [vmem:[%s2286 + $0xc] sm:$0xf]
        %v2295 = vunpack.c.l.b16 %v2287
        %v2296 = vunpack.c.l.b16 %v2288
        %v2297 = vunpack.c.l.b16 %v2289
        %v2298 = vunpack.c.l.b16 %v2290
        %v2299 = vpack.c.b16 %v2296, %v2295
        %v2300 = vpack.c.b16 %v2298, %v2297
        %2303 = vmatprep.subr.bf16.mxu0 0
        %2304 = vmatpush1.bf16.msra.mxu0 0
        %2305 = vmatprep.subr.bf16.mxu0 0
        %2306 = vmatpush1.bf16.msra.mxu0 0
        %2307 = vmatprep.subr.bf16.mxu0 0
        %2308 = vmatpush1.bf16.msra.mxu0 0
        %2309 = vmatprep.subr.bf16.mxu0 0
        %2310 = vmatpush1.bf16.msra.mxu0 0
        %2311 = vmatprep.subr.bf16.mxu0 0
        %2312 = vmatpush1.bf16.msra.mxu0 0
        %2313 = vmatprep.subr.bf16.mxu0 0
        %2314 = vmatpush1.bf16.msra.mxu0 0
        %2315 = vmatprep.subr.bf16.mxu0 0
        %2316 = vmatpush1.bf16.msra.mxu0 %v2300
        %2317 = vmatprep.subr.bf16.mxu0 0
        %2318 = vmatpush1.bf16.msra.mxu0 %v2299
        %2319 = vmatprep.subr.bf16.mxu0 0
        %2320 = vmatpush2.bf16.msra.mxu0 0
        %2321 = vmatprep.subr.bf16.mxu0 0
        %2322 = vmatpush2.bf16.msra.mxu0 0
        %2323 = vmatprep.subr.bf16.mxu0 0
        %2324 = vmatpush2.bf16.msra.mxu0 0
        %2325 = vmatprep.subr.bf16.mxu0 0
        %2326 = vmatpush2.bf16.msra.mxu0 0
        %2327 = vmatprep.subr.bf16.mxu0 0
        %2328 = vmatpush2.bf16.msra.mxu0 0
        %2329 = vmatprep.subr.bf16.mxu0 0
        %2330 = vmatpush2.bf16.msra.mxu0 0
        %2331 = vmatprep.subr.bf16.mxu0 0
        %2332 = vmatpush2.bf16.msra.mxu0 0
        %2333 = vmatprep.subr.bf16.mxu0 0
        %2334 = vmatpush2.bf16.msra.mxu0 0
        %2335 = vmatprep.mubr.bf16.mxu0 0
        %2336 = vmatmul.mubr.bf16.gmra.mxu0 %v715
        %v2337 = vpop.f32.mrf.mxu0
        %v2338 = vadd.f32 0.0, %v2337
        %v2339 = vpop.f32.mrf.mxu0
        %v2340 = vpop.f32.mrf.mxu0
        %v2341 = vadd.f32 0.0, %v2340
        %v2342 = vpop.f32.mrf.mxu0
        %2343 = vmatprep.mubr.bf16.mxu0 0
        %2344 = vmatmul.mubr.bf16.gmra.mxu0 %v718
        %v2345 = vpop.f32.mrf.mxu0
        %v2346 = vadd.f32 0.0, %v2345
        %v2347 = vpop.f32.mrf.mxu0
        %v2348 = vpop.f32.mrf.mxu0
        %v2349 = vadd.f32 0.0, %v2348
        %v2350 = vpop.f32.mrf.mxu0
        %2351 = vmatprep.mubr.bf16.mxu0 0
        %2352 = vmatmul.mubr.bf16.gmra.mxu0 %v721
        %v2353 = vpop.f32.mrf.mxu0
        %v2354 = vadd.f32 0.0, %v2353
        %v2355 = vpop.f32.mrf.mxu0
        %v2356 = vpop.f32.mrf.mxu0
        %v2357 = vadd.f32 0.0, %v2356
        %v2358 = vpop.f32.mrf.mxu0
        %2359 = vmatprep.mubr.bf16.mxu0 0
        %2360 = vmatmul.mubr.bf16.gmra.mxu0 %v724
        %v2361 = vpop.f32.mrf.mxu0
        %v2362 = vadd.f32 0.0, %v2361
        %v2363 = vpop.f32.mrf.mxu0
        %v2364 = vpop.f32.mrf.mxu0
        %v2365 = vadd.f32 0.0, %v2364
        %v2366 = vpop.f32.mrf.mxu0
        %2367 = vdwg.mxu0
        %v2368 = vmul.f32 %v2190, 0.25
        %v2369 = vmul.f32 %v2193, 0.25
        %v2370 = vmul.f32 %v2198, 0.25
        %v2371 = vmul.f32 %v2201, 0.25
        %v2372 = vpack.c.bf16 %v2369, %v2368
        %v2373 = vpack.c.bf16 %v2371, %v2370
        %v2376 = vunpack.c.l.b16 %v2372
        %v2377 = vunpack.c.h.b16 %v2372
        %v2378 = vunpack.c.l.b16 %v2373
        %v2379 = vunpack.c.h.b16 %v2373
        %v2380 = vpack.c.b16 %v2376, %v2376
        %v2381 = vpack.c.b16 %v2377, %v2377
        %v2382 = vpack.c.b16 %v2378, %v2378
        %v2383 = vpack.c.b16 %v2379, %v2379
        %v2384 = vpack.c.bf16 %v2259, %v2256
        %v2385 = vpack.c.bf16 %v2267, %v2264
        %v2386 = vpack.c.bf16 %v2275, %v2272
        %v2387 = vpack.c.bf16 %v2283, %v2280
        %v2388 = vpack.c.bf16 %v2341, %v2338
        %v2389 = vpack.c.bf16 %v2349, %v2346
        %v2390 = vpack.c.bf16 %v2357, %v2354
        %v2391 = vpack.c.bf16 %v2365, %v2362
        %v2393 = vsel %vm896, %v2380, 0
        %v2396 = vsel %vm896, %v2384, 0
        %2398 = vmatprep.subr.bf16.mxu0 0
        %2399 = vmatpush1.bf16.xpose.msra.mxu0 0
        %2400 = vmatprep.subr.bf16.mxu0 0
        %2401 = vmatpush1.bf16.xpose.msra.mxu0 0
        %2402 = vmatprep.subr.bf16.mxu0 0
        %2403 = vmatpush1.bf16.xpose.msra.mxu0 0
        %2404 = vmatprep.subr.bf16.mxu0 0
        %2405 = vmatpush1.bf16.xpose.msra.mxu0 0
        %2406 = vmatprep.subr.bf16.mxu0 0
        %2407 = vmatpush1.bf16.xpose.msra.mxu0 0
        %2408 = vmatprep.subr.bf16.mxu0 0
        %2409 = vmatpush1.bf16.xpose.msra.mxu0 0
        %2410 = vmatprep.subr.bf16.mxu0 0
        %2411 = vmatpush1.bf16.xpose.msra.mxu0 0
        %2412 = vmatprep.subr.bf16.mxu0 0
        %2413 = vmatpush1.bf16.xpose.msra.mxu0 %v2396
        %2414 = vmatprep.subr.bf16.mxu0 0
        %2415 = vmatpush2.bf16.xpose.msra.mxu0 0
        %2416 = vmatprep.subr.bf16.mxu0 0
        %2417 = vmatpush2.bf16.xpose.msra.mxu0 0
        %2418 = vmatprep.subr.bf16.mxu0 0
        %2419 = vmatpush2.bf16.xpose.msra.mxu0 0
        %2420 = vmatprep.subr.bf16.mxu0 0
        %2421 = vmatpush2.bf16.xpose.msra.mxu0 0
        %2422 = vmatprep.subr.bf16.mxu0 0
        %2423 = vmatpush2.bf16.xpose.msra.mxu0 0
        %2424 = vmatprep.subr.bf16.mxu0 0
        %2425 = vmatpush2.bf16.xpose.msra.mxu0 0
        %2426 = vmatprep.subr.bf16.mxu0 0
        %2427 = vmatpush2.bf16.xpose.msra.mxu0 0
        %2428 = vmatprep.subr.bf16.mxu0 0
        %2429 = vmatpush2.bf16.xpose.msra.mxu0 0
        %2430 = vmatprep.mubr.bf16.mxu0 0
        %2431 = vmatmul.mubr.bf16.gmra.mxu0 %v2393
        %v2432 = vpop.f32.mrf.mxu0
        %v2433 = vadd.f32 0.0, %v2432
        %v2434 = vpop.f32.mrf.mxu0
        %v2435 = vpop.f32.mrf.mxu0
        %v2436 = vpop.f32.mrf.mxu0
        %2437 = vdwg.mxu0
        %v2439 = vsel %vm896, %v2381, 0
        %v2442 = vsel %vm896, %v2385, 0
        %2444 = vmatprep.subr.bf16.mxu0 0
        %2445 = vmatpush1.bf16.xpose.msra.mxu0 0
        %2446 = vmatprep.subr.bf16.mxu0 0
        %2447 = vmatpush1.bf16.xpose.msra.mxu0 0
        %2448 = vmatprep.subr.bf16.mxu0 0
        %2449 = vmatpush1.bf16.xpose.msra.mxu0 0
        %2450 = vmatprep.subr.bf16.mxu0 0
        %2451 = vmatpush1.bf16.xpose.msra.mxu0 0
        %2452 = vmatprep.subr.bf16.mxu0 0
        %2453 = vmatpush1.bf16.xpose.msra.mxu0 0
        %2454 = vmatprep.subr.bf16.mxu0 0
        %2455 = vmatpush1.bf16.xpose.msra.mxu0 0
        %2456 = vmatprep.subr.bf16.mxu0 0
        %2457 = vmatpush1.bf16.xpose.msra.mxu0 0
        %2458 = vmatprep.subr.bf16.mxu0 0
        %2459 = vmatpush1.bf16.xpose.msra.mxu0 %v2442
        %2460 = vmatprep.subr.bf16.mxu0 0
        %2461 = vmatpush2.bf16.xpose.msra.mxu0 0
        %2462 = vmatprep.subr.bf16.mxu0 0
        %2463 = vmatpush2.bf16.xpose.msra.mxu0 0
        %2464 = vmatprep.subr.bf16.mxu0 0
        %2465 = vmatpush2.bf16.xpose.msra.mxu0 0
        %2466 = vmatprep.subr.bf16.mxu0 0
        %2467 = vmatpush2.bf16.xpose.msra.mxu0 0
        %2468 = vmatprep.subr.bf16.mxu0 0
        %2469 = vmatpush2.bf16.xpose.msra.mxu0 0
        %2470 = vmatprep.subr.bf16.mxu0 0
        %2471 = vmatpush2.bf16.xpose.msra.mxu0 0
        %2472 = vmatprep.subr.bf16.mxu0 0
        %2473 = vmatpush2.bf16.xpose.msra.mxu0 0
        %2474 = vmatprep.subr.bf16.mxu0 0
        %2475 = vmatpush2.bf16.xpose.msra.mxu0 0
        %2476 = vmatprep.mubr.bf16.mxu0 0
        %2477 = vmatmul.mubr.bf16.gmra.mxu0 %v2439
        %v2478 = vpop.f32.mrf.mxu0
        %v2479 = vadd.f32 0.0, %v2478
        %v2480 = vpop.f32.mrf.mxu0
        %v2481 = vpop.f32.mrf.mxu0
        %v2482 = vpop.f32.mrf.mxu0
        %2483 = vdwg.mxu0
        %v2485 = vsel %vm896, %v2382, 0
        %v2488 = vsel %vm896, %v2386, 0
        %2490 = vmatprep.subr.bf16.mxu0 0
        %2491 = vmatpush1.bf16.xpose.msra.mxu0 0
        %2492 = vmatprep.subr.bf16.mxu0 0
        %2493 = vmatpush1.bf16.xpose.msra.mxu0 0
        %2494 = vmatprep.subr.bf16.mxu0 0
        %2495 = vmatpush1.bf16.xpose.msra.mxu0 0
        %2496 = vmatprep.subr.bf16.mxu0 0
        %2497 = vmatpush1.bf16.xpose.msra.mxu0 0
        %2498 = vmatprep.subr.bf16.mxu0 0
        %2499 = vmatpush1.bf16.xpose.msra.mxu0 0
        %2500 = vmatprep.subr.bf16.mxu0 0
        %2501 = vmatpush1.bf16.xpose.msra.mxu0 0
        %2502 = vmatprep.subr.bf16.mxu0 0
        %2503 = vmatpush1.bf16.xpose.msra.mxu0 0
        %2504 = vmatprep.subr.bf16.mxu0 0
        %2505 = vmatpush1.bf16.xpose.msra.mxu0 %v2488
        %2506 = vmatprep.subr.bf16.mxu0 0
        %2507 = vmatpush2.bf16.xpose.msra.mxu0 0
        %2508 = vmatprep.subr.bf16.mxu0 0
        %2509 = vmatpush2.bf16.xpose.msra.mxu0 0
        %2510 = vmatprep.subr.bf16.mxu0 0
        %2511 = vmatpush2.bf16.xpose.msra.mxu0 0
        %2512 = vmatprep.subr.bf16.mxu0 0
        %2513 = vmatpush2.bf16.xpose.msra.mxu0 0
        %2514 = vmatprep.subr.bf16.mxu0 0
        %2515 = vmatpush2.bf16.xpose.msra.mxu0 0
        %2516 = vmatprep.subr.bf16.mxu0 0
        %2517 = vmatpush2.bf16.xpose.msra.mxu0 0
        %2518 = vmatprep.subr.bf16.mxu0 0
        %2519 = vmatpush2.bf16.xpose.msra.mxu0 0
        %2520 = vmatprep.subr.bf16.mxu0 0
        %2521 = vmatpush2.bf16.xpose.msra.mxu0 0
        %2522 = vmatprep.mubr.bf16.mxu0 0
        %2523 = vmatmul.mubr.bf16.gmra.mxu0 %v2485
        %v2524 = vpop.f32.mrf.mxu0
        %v2525 = vadd.f32 0.0, %v2524
        %v2526 = vpop.f32.mrf.mxu0
        %v2527 = vpop.f32.mrf.mxu0
        %v2528 = vpop.f32.mrf.mxu0
        %2529 = vdwg.mxu0
        %v2531 = vsel %vm896, %v2383, 0
        %v2534 = vsel %vm896, %v2387, 0
        %2536 = vmatprep.subr.bf16.mxu0 0
        %2537 = vmatpush1.bf16.xpose.msra.mxu0 0
        %2538 = vmatprep.subr.bf16.mxu0 0
        %2539 = vmatpush1.bf16.xpose.msra.mxu0 0
        %2540 = vmatprep.subr.bf16.mxu0 0
        %2541 = vmatpush1.bf16.xpose.msra.mxu0 0
        %2542 = vmatprep.subr.bf16.mxu0 0
        %2543 = vmatpush1.bf16.xpose.msra.mxu0 0
        %2544 = vmatprep.subr.bf16.mxu0 0
        %2545 = vmatpush1.bf16.xpose.msra.mxu0 0
        %2546 = vmatprep.subr.bf16.mxu0 0
        %2547 = vmatpush1.bf16.xpose.msra.mxu0 0
        %2548 = vmatprep.subr.bf16.mxu0 0
        %2549 = vmatpush1.bf16.xpose.msra.mxu0 0
        %2550 = vmatprep.subr.bf16.mxu0 0
        %2551 = vmatpush1.bf16.xpose.msra.mxu0 %v2534
        %2552 = vmatprep.subr.bf16.mxu0 0
        %2553 = vmatpush2.bf16.xpose.msra.mxu0 0
        %2554 = vmatprep.subr.bf16.mxu0 0
        %2555 = vmatpush2.bf16.xpose.msra.mxu0 0
        %2556 = vmatprep.subr.bf16.mxu0 0
        %2557 = vmatpush2.bf16.xpose.msra.mxu0 0
        %2558 = vmatprep.subr.bf16.mxu0 0
        %2559 = vmatpush2.bf16.xpose.msra.mxu0 0
        %2560 = vmatprep.subr.bf16.mxu0 0
        %2561 = vmatpush2.bf16.xpose.msra.mxu0 0
        %2562 = vmatprep.subr.bf16.mxu0 0
        %2563 = vmatpush2.bf16.xpose.msra.mxu0 0
        %2564 = vmatprep.subr.bf16.mxu0 0
        %2565 = vmatpush2.bf16.xpose.msra.mxu0 0
        %2566 = vmatprep.subr.bf16.mxu0 0
        %2567 = vmatpush2.bf16.xpose.msra.mxu0 0
        %2568 = vmatprep.mubr.bf16.mxu0 0
        %2569 = vmatmul.mubr.bf16.gmra.mxu0 %v2531
        %v2570 = vpop.f32.mrf.mxu0
        %v2571 = vadd.f32 0.0, %v2570
        %v2572 = vpop.f32.mrf.mxu0
        %v2573 = vpop.f32.mrf.mxu0
        %v2574 = vpop.f32.mrf.mxu0
        %2575 = vdwg.mxu0
        %v2576 = vsel %vm896, %v2433, -inf
        %2577 = vmax.xlane.f32.xlu0 %v2576
        %v2578 = vpop.xlane.xlu0 %2577
        %v2579 = vsel %vm896, %v2479, -inf
        %2580 = vmax.xlane.f32.xlu0 %v2579
        %v2581 = vpop.xlane.xlu0 %2580
        %v2582 = vsel %vm896, %v2525, -inf
        %2583 = vmax.xlane.f32.xlu0 %v2582
        %v2584 = vpop.xlane.xlu0 %2583
        %v2585 = vsel %vm896, %v2571, -inf
        %2586 = vmax.xlane.f32.xlu0 %v2585
        %v2587 = vpop.xlane.xlu0 %2586
        %v2588 = vsub.f32 %v2433, %v2578
        %v2589 = vsub.f32 %v2479, %v2581
        %v2590 = vsub.f32 %v2525, %v2584
        %v2591 = vsub.f32 %v2571, %v2587
        %v2592 = vmul.f32 %v2588, 1.442695
        %v2593 = vpow.pop %v2592
        %v2594 = vmul.f32 %v2589, 1.442695
        %v2595 = vpow.pop %v2594
        %v2596 = vmul.f32 %v2590, 1.442695
        %v2597 = vpow.pop %v2596
        %v2598 = vmul.f32 %v2591, 1.442695
        %v2599 = vpow.pop %v2598
        %v2600 = vsel %vm896, %v2593, 0.0
        %2601 = vadd.xlane.f32.xlu0 %v2600
        %v2602 = vpop.xlane.xlu0 %2601
        %v2603 = vsel %vm896, %v2595, 0.0
        %2604 = vadd.xlane.f32.xlu0 %v2603
        %v2605 = vpop.xlane.xlu0 %2604
        %v2606 = vsel %vm896, %v2597, 0.0
        %2607 = vadd.xlane.f32.xlu0 %v2606
        %v2608 = vpop.xlane.xlu0 %2607
        %v2609 = vsel %vm896, %v2599, 0.0
        %2610 = vadd.xlane.f32.xlu0 %v2609
        %v2611 = vpop.xlane.xlu0 %2610
        %v2612 = vrcp.pop %v2602
        %v2613 = vrcp.pop %v2605
        %v2614 = vrcp.pop %v2608
        %v2615 = vrcp.pop %v2611
        %v2616 = vmul.f32 %v2593, %v2612
        %v2617 = vmul.f32 %v2595, %v2613
        %v2618 = vmul.f32 %v2597, %v2614
        %v2619 = vmul.f32 %v2599, %v2615
        %v2620 = vpack.c.bf16 %v2616, %v2616
        %v2621 = vpack.c.bf16 %v2617, %v2617
        %v2622 = vpack.c.bf16 %v2618, %v2618
        %v2623 = vpack.c.bf16 %v2619, %v2619
        %v2625 = vsel %vm896, %v2620, 0
        %2627 = vmatprep.subr.bf16.mxu0 0
        %2628 = vmatpush1.bf16.msra.mxu0 0
        %2629 = vmatprep.subr.bf16.mxu0 0
        %2630 = vmatpush1.bf16.msra.mxu0 0
        %2631 = vmatprep.subr.bf16.mxu0 0
        %2632 = vmatpush1.bf16.msra.mxu0 0
        %2633 = vmatprep.subr.bf16.mxu0 0
        %2634 = vmatpush1.bf16.msra.mxu0 0
        %2635 = vmatprep.subr.bf16.mxu0 0
        %2636 = vmatpush1.bf16.msra.mxu0 0
        %2637 = vmatprep.subr.bf16.mxu0 0
        %2638 = vmatpush1.bf16.msra.mxu0 0
        %2639 = vmatprep.subr.bf16.mxu0 0
        %2640 = vmatpush1.bf16.msra.mxu0 0
        %2641 = vmatprep.subr.bf16.mxu0 0
        %2642 = vmatpush1.bf16.msra.mxu0 %v2388
        %2643 = vmatprep.subr.bf16.mxu0 0
        %2644 = vmatpush2.bf16.msra.mxu0 0
        %2645 = vmatprep.subr.bf16.mxu0 0
        %2646 = vmatpush2.bf16.msra.mxu0 0
        %2647 = vmatprep.subr.bf16.mxu0 0
        %2648 = vmatpush2.bf16.msra.mxu0 0
        %2649 = vmatprep.subr.bf16.mxu0 0
        %2650 = vmatpush2.bf16.msra.mxu0 0
        %2651 = vmatprep.subr.bf16.mxu0 0
        %2652 = vmatpush2.bf16.msra.mxu0 0
        %2653 = vmatprep.subr.bf16.mxu0 0
        %2654 = vmatpush2.bf16.msra.mxu0 0
        %2655 = vmatprep.subr.bf16.mxu0 0
        %2656 = vmatpush2.bf16.msra.mxu0 0
        %2657 = vmatprep.subr.bf16.mxu0 0
        %2658 = vmatpush2.bf16.msra.mxu0 0
        %2659 = vmatprep.mubr.bf16.mxu0 0
        %2660 = vmatmul.mubr.bf16.gmra.mxu0 %v2625
        %v2661 = vpop.f32.mrf.mxu0
        %v2662 = vadd.f32 0.0, %v2661
        %v2663 = vpop.f32.mrf.mxu0
        %v2664 = vpop.f32.mrf.mxu0
        %v2665 = vpop.f32.mrf.mxu0
        %2666 = vdwg.mxu0
        %v2668 = vsel %vm896, %v2621, 0
        %2670 = vmatprep.subr.bf16.mxu0 0
        %2671 = vmatpush1.bf16.msra.mxu0 0
        %2672 = vmatprep.subr.bf16.mxu0 0
        %2673 = vmatpush1.bf16.msra.mxu0 0
        %2674 = vmatprep.subr.bf16.mxu0 0
        %2675 = vmatpush1.bf16.msra.mxu0 0
        %2676 = vmatprep.subr.bf16.mxu0 0
        %2677 = vmatpush1.bf16.msra.mxu0 0
        %2678 = vmatprep.subr.bf16.mxu0 0
        %2679 = vmatpush1.bf16.msra.mxu0 0
        %2680 = vmatprep.subr.bf16.mxu0 0
        %2681 = vmatpush1.bf16.msra.mxu0 0
        %2682 = vmatprep.subr.bf16.mxu0 0
        %2683 = vmatpush1.bf16.msra.mxu0 0
        %2684 = vmatprep.subr.bf16.mxu0 0
        %2685 = vmatpush1.bf16.msra.mxu0 %v2389
        %2686 = vmatprep.subr.bf16.mxu0 0
        %2687 = vmatpush2.bf16.msra.mxu0 0
        %2688 = vmatprep.subr.bf16.mxu0 0
        %2689 = vmatpush2.bf16.msra.mxu0 0
        %2690 = vmatprep.subr.bf16.mxu0 0
        %2691 = vmatpush2.bf16.msra.mxu0 0
        %2692 = vmatprep.subr.bf16.mxu0 0
        %2693 = vmatpush2.bf16.msra.mxu0 0
        %2694 = vmatprep.subr.bf16.mxu0 0
        %2695 = vmatpush2.bf16.msra.mxu0 0
        %2696 = vmatprep.subr.bf16.mxu0 0
        %2697 = vmatpush2.bf16.msra.mxu0 0
        %2698 = vmatprep.subr.bf16.mxu0 0
        %2699 = vmatpush2.bf16.msra.mxu0 0
        %2700 = vmatprep.subr.bf16.mxu0 0
        %2701 = vmatpush2.bf16.msra.mxu0 0
        %2702 = vmatprep.mubr.bf16.mxu0 0
        %2703 = vmatmul.mubr.bf16.gmra.mxu0 %v2668
        %v2704 = vpop.f32.mrf.mxu0
        %v2705 = vadd.f32 0.0, %v2704
        %v2706 = vpop.f32.mrf.mxu0
        %v2707 = vpop.f32.mrf.mxu0
        %v2708 = vpop.f32.mrf.mxu0
        %2709 = vdwg.mxu0
        %v2711 = vsel %vm896, %v2622, 0
        %2713 = vmatprep.subr.bf16.mxu0 0
        %2714 = vmatpush1.bf16.msra.mxu0 0
        %2715 = vmatprep.subr.bf16.mxu0 0
        %2716 = vmatpush1.bf16.msra.mxu0 0
        %2717 = vmatprep.subr.bf16.mxu0 0
        %2718 = vmatpush1.bf16.msra.mxu0 0
        %2719 = vmatprep.subr.bf16.mxu0 0
        %2720 = vmatpush1.bf16.msra.mxu0 0
        %2721 = vmatprep.subr.bf16.mxu0 0
        %2722 = vmatpush1.bf16.msra.mxu0 0
        %2723 = vmatprep.subr.bf16.mxu0 0
        %2724 = vmatpush1.bf16.msra.mxu0 0
        %2725 = vmatprep.subr.bf16.mxu0 0
        %2726 = vmatpush1.bf16.msra.mxu0 0
        %2727 = vmatprep.subr.bf16.mxu0 0
        %2728 = vmatpush1.bf16.msra.mxu0 %v2390
        %2729 = vmatprep.subr.bf16.mxu0 0
        %2730 = vmatpush2.bf16.msra.mxu0 0
        %2731 = vmatprep.subr.bf16.mxu0 0
        %2732 = vmatpush2.bf16.msra.mxu0 0
        %2733 = vmatprep.subr.bf16.mxu0 0
        %2734 = vmatpush2.bf16.msra.mxu0 0
        %2735 = vmatprep.subr.bf16.mxu0 0
        %2736 = vmatpush2.bf16.msra.mxu0 0
        %2737 = vmatprep.subr.bf16.mxu0 0
        %2738 = vmatpush2.bf16.msra.mxu0 0
        %2739 = vmatprep.subr.bf16.mxu0 0
        %2740 = vmatpush2.bf16.msra.mxu0 0
        %2741 = vmatprep.subr.bf16.mxu0 0
        %2742 = vmatpush2.bf16.msra.mxu0 0
        %2743 = vmatprep.subr.bf16.mxu0 0
        %2744 = vmatpush2.bf16.msra.mxu0 0
        %2745 = vmatprep.mubr.bf16.mxu0 0
        %2746 = vmatmul.mubr.bf16.gmra.mxu0 %v2711
        %v2747 = vpop.f32.mrf.mxu0
        %v2748 = vadd.f32 0.0, %v2747
        %v2749 = vpop.f32.mrf.mxu0
        %v2750 = vpop.f32.mrf.mxu0
        %v2751 = vpop.f32.mrf.mxu0
        %2752 = vdwg.mxu0
        %v2754 = vsel %vm896, %v2623, 0
        %2756 = vmatprep.subr.bf16.mxu0 0
        %2757 = vmatpush1.bf16.msra.mxu0 0
        %2758 = vmatprep.subr.bf16.mxu0 0
        %2759 = vmatpush1.bf16.msra.mxu0 0
        %2760 = vmatprep.subr.bf16.mxu0 0
        %2761 = vmatpush1.bf16.msra.mxu0 0
        %2762 = vmatprep.subr.bf16.mxu0 0
        %2763 = vmatpush1.bf16.msra.mxu0 0
        %2764 = vmatprep.subr.bf16.mxu0 0
        %2765 = vmatpush1.bf16.msra.mxu0 0
        %2766 = vmatprep.subr.bf16.mxu0 0
        %2767 = vmatpush1.bf16.msra.mxu0 0
        %2768 = vmatprep.subr.bf16.mxu0 0
        %2769 = vmatpush1.bf16.msra.mxu0 0
        %2770 = vmatprep.subr.bf16.mxu0 0
        %2771 = vmatpush1.bf16.msra.mxu0 %v2391
        %2772 = vmatprep.subr.bf16.mxu0 0
        %2773 = vmatpush2.bf16.msra.mxu0 0
        %2774 = vmatprep.subr.bf16.mxu0 0
        %2775 = vmatpush2.bf16.msra.mxu0 0
        %2776 = vmatprep.subr.bf16.mxu0 0
        %2777 = vmatpush2.bf16.msra.mxu0 0
        %2778 = vmatprep.subr.bf16.mxu0 0
        %2779 = vmatpush2.bf16.msra.mxu0 0
        %2780 = vmatprep.subr.bf16.mxu0 0
        %2781 = vmatpush2.bf16.msra.mxu0 0
        %2782 = vmatprep.subr.bf16.mxu0 0
        %2783 = vmatpush2.bf16.msra.mxu0 0
        %2784 = vmatprep.subr.bf16.mxu0 0
        %2785 = vmatpush2.bf16.msra.mxu0 0
        %2786 = vmatprep.subr.bf16.mxu0 0
        %2787 = vmatpush2.bf16.msra.mxu0 0
        %2788 = vmatprep.mubr.bf16.mxu0 0
        %2789 = vmatmul.mubr.bf16.gmra.mxu0 %v2754
        %v2790 = vpop.f32.mrf.mxu0
        %v2791 = vadd.f32 0.0, %v2790
        %v2792 = vpop.f32.mrf.mxu0
        %v2793 = vpop.f32.mrf.mxu0
        %v2794 = vpop.f32.mrf.mxu0
        %2795 = vdwg.mxu0
        %v2796 = vld [vmem:[#allocation2] sm:$0xff]
        %v2797 = vld [vmem:[#allocation2 + $0x8] sm:$0xff]
        %v2798 = vld [vmem:[#allocation2 + $0x10] sm:$0xff]
        %v2799 = vld [vmem:[#allocation2 + $0x18] sm:$0xff]
        %v2800 = vpack.c.bf16 %v2662, %v2662
        %v2801 = vpack.c.bf16 %v2705, %v2705
        %v2802 = vpack.c.bf16 %v2748, %v2748
        %v2803 = vpack.c.bf16 %v2791, %v2791
        %s2804 = scalar_lea.vmem %s9, 16
        %v2805 = vld [vmem:[%s2804] sm:$0xf]
        %v2806 = vld [vmem:[%s2804 + $0x4] sm:$0xf]
        %v2811 = vunpack.c.l.b16 %v2800
        %v2812 = vunpack.c.l.b16 %v2801
        %v2813 = vunpack.c.l.b16 %v2802
        %v2814 = vunpack.c.l.b16 %v2803
        %v2815 = vpack.c.b16 %v2812, %v2811
        %v2816 = vpack.c.b16 %v2814, %v2813
        %v2819 = vunpack.c.l.b16 %v2805
        %v2820 = vunpack.c.l.b16 %v2806
        %v2821 = vpack.c.b16 %v2820, %v2819
        %v2824 = vsel %vm896, %v2815, 0
        %v2827 = vsel %vm896, %v2816, 0
        %2829 = vmatprep.subr.bf16.mxu0 0
        %2830 = vmatpush1.bf16.msra.mxu0 0
        %2831 = vmatprep.subr.bf16.mxu0 0
        %2832 = vmatpush1.bf16.msra.mxu0 0
        %2833 = vmatprep.subr.bf16.mxu0 0
        %2834 = vmatpush1.bf16.msra.mxu0 0
        %2835 = vmatprep.subr.bf16.mxu0 0
        %2836 = vmatpush1.bf16.msra.mxu0 0
        %2837 = vmatprep.subr.bf16.mxu0 0
        %2838 = vmatpush1.bf16.msra.mxu0 0
        %2839 = vmatprep.subr.bf16.mxu0 0
        %2840 = vmatpush1.bf16.msra.mxu0 0
        %2841 = vmatprep.subr.bf16.mxu0 0
        %2842 = vmatpush1.bf16.msra.mxu0 0
        %2843 = vmatprep.subr.bf16.mxu0 0
        %2844 = vmatpush1.bf16.msra.mxu0 %v2821
        %2845 = vmatprep.subr.bf16.mxu0 0
        %2846 = vmatpush2.bf16.msra.mxu0 0
        %2847 = vmatprep.subr.bf16.mxu0 0
        %2848 = vmatpush2.bf16.msra.mxu0 0
        %2849 = vmatprep.subr.bf16.mxu0 0
        %2850 = vmatpush2.bf16.msra.mxu0 0
        %2851 = vmatprep.subr.bf16.mxu0 0
        %2852 = vmatpush2.bf16.msra.mxu0 0
        %2853 = vmatprep.subr.bf16.mxu0 0
        %2854 = vmatpush2.bf16.msra.mxu0 0
        %2855 = vmatprep.subr.bf16.mxu0 0
        %2856 = vmatpush2.bf16.msra.mxu0 0
        %2857 = vmatprep.subr.bf16.mxu0 0
        %2858 = vmatpush2.bf16.msra.mxu0 0
        %2859 = vmatprep.subr.bf16.mxu0 0
        %2860 = vmatpush2.bf16.msra.mxu0 0
        %2861 = vmatprep.mubr.bf16.mxu0 0
        %2862 = vmatmul.mubr.bf16.gmra.mxu0 %v2824
        %v2863 = vpop.f32.mrf.mxu0
        %v2864 = vadd.f32 0.0, %v2863
        %v2865 = vpop.f32.mrf.mxu0
        %v2866 = vpop.f32.mrf.mxu0
        %v2867 = vadd.f32 0.0, %v2866
        %v2868 = vpop.f32.mrf.mxu0
        %2869 = vmatprep.mubr.bf16.mxu0 0
        %2870 = vmatmul.mubr.bf16.gmra.mxu0 %v2827
        %v2871 = vpop.f32.mrf.mxu0
        %v2872 = vadd.f32 0.0, %v2871
        %v2873 = vpop.f32.mrf.mxu0
        %v2874 = vpop.f32.mrf.mxu0
        %v2875 = vadd.f32 0.0, %v2874
        %v2876 = vpop.f32.mrf.mxu0
        %2877 = vdwg.mxu0
        %v2878 = vadd.f32 %v2796, %v2864
        %v2879 = vadd.f32 %v2797, %v2867
        %v2880 = vadd.f32 %v2798, %v2872
        %v2881 = vadd.f32 %v2799, %v2875
        %2882 = vst.msk [vmem:[#allocation2] sm:$0xff] %vm415, %v2878
        %2883 = vst.msk [vmem:[#allocation2 + $0x8] sm:$0xff] %vm415, %v2879
        %2884 = vst.msk [vmem:[#allocation2 + $0x10] sm:$0xff] %vm415, %v2880
        %2885 = vst.msk [vmem:[#allocation2 + $0x18] sm:$0xff] %vm415, %v2881
        %s2886 = scalar_lea.vmem %s6, 48
        %v2887 = vld [vmem:[%s2886] sm:$0xf]
        %v2888 = vld [vmem:[%s2886 + $0x4] sm:$0xf]
        %v2889 = vld [vmem:[%s2886 + $0x8] sm:$0xf]
        %v2890 = vld [vmem:[%s2886 + $0xc] sm:$0xf]
        %v2895 = vunpack.c.l.b16 %v2887
        %v2896 = vunpack.c.l.b16 %v2888
        %v2897 = vunpack.c.l.b16 %v2889
        %v2898 = vunpack.c.l.b16 %v2890
        %v2899 = vpack.c.b16 %v2896, %v2895
        %v2900 = vpack.c.b16 %v2898, %v2897
        %2903 = vmatprep.subr.bf16.mxu0 0
        %2904 = vmatpush1.bf16.msra.mxu0 0
        %2905 = vmatprep.subr.bf16.mxu0 0
        %2906 = vmatpush1.bf16.msra.mxu0 0
        %2907 = vmatprep.subr.bf16.mxu0 0
        %2908 = vmatpush1.bf16.msra.mxu0 0
        %2909 = vmatprep.subr.bf16.mxu0 0
        %2910 = vmatpush1.bf16.msra.mxu0 0
        %2911 = vmatprep.subr.bf16.mxu0 0
        %2912 = vmatpush1.bf16.msra.mxu0 0
        %2913 = vmatprep.subr.bf16.mxu0 0
        %2914 = vmatpush1.bf16.msra.mxu0 0
        %2915 = vmatprep.subr.bf16.mxu0 0
        %2916 = vmatpush1.bf16.msra.mxu0 %v2900
        %2917 = vmatprep.subr.bf16.mxu0 0
        %2918 = vmatpush1.bf16.msra.mxu0 %v2899
        %2919 = vmatprep.subr.bf16.mxu0 0
        %2920 = vmatpush2.bf16.msra.mxu0 0
        %2921 = vmatprep.subr.bf16.mxu0 0
        %2922 = vmatpush2.bf16.msra.mxu0 0
        %2923 = vmatprep.subr.bf16.mxu0 0
        %2924 = vmatpush2.bf16.msra.mxu0 0
        %2925 = vmatprep.subr.bf16.mxu0 0
        %2926 = vmatpush2.bf16.msra.mxu0 0
        %2927 = vmatprep.subr.bf16.mxu0 0
        %2928 = vmatpush2.bf16.msra.mxu0 0
        %2929 = vmatprep.subr.bf16.mxu0 0
        %2930 = vmatpush2.bf16.msra.mxu0 0
        %2931 = vmatprep.subr.bf16.mxu0 0
        %2932 = vmatpush2.bf16.msra.mxu0 0
        %2933 = vmatprep.subr.bf16.mxu0 0
        %2934 = vmatpush2.bf16.msra.mxu0 0
        %2935 = vmatprep.mubr.bf16.mxu0 0
        %2936 = vmatmul.mubr.bf16.gmra.mxu0 %v644
        %v2937 = vpop.f32.mrf.mxu0
        %v2938 = vadd.f32 0.0, %v2937
        %v2939 = vpop.f32.mrf.mxu0
        %v2940 = vpop.f32.mrf.mxu0
        %v2941 = vadd.f32 0.0, %v2940
        %v2942 = vpop.f32.mrf.mxu0
        %2943 = vmatprep.mubr.bf16.mxu0 0
        %2944 = vmatmul.mubr.bf16.gmra.mxu0 %v647
        %v2945 = vpop.f32.mrf.mxu0
        %v2946 = vadd.f32 0.0, %v2945
        %v2947 = vpop.f32.mrf.mxu0
        %v2948 = vpop.f32.mrf.mxu0
        %v2949 = vadd.f32 0.0, %v2948
        %v2950 = vpop.f32.mrf.mxu0
        %2951 = vdwg.mxu0
        %s2952 = scalar_lea.vmem %s7, 48
        %v2953 = vld [vmem:[%s2952] sm:$0xf]
        %v2954 = vld [vmem:[%s2952 + $0x4] sm:$0xf]
        %v2955 = vld [vmem:[%s2952 + $0x8] sm:$0xf]
        %v2956 = vld [vmem:[%s2952 + $0xc] sm:$0xf]
        %v2961 = vunpack.c.l.b16 %v2953
        %v2962 = vunpack.c.l.b16 %v2954
        %v2963 = vunpack.c.l.b16 %v2955
        %v2964 = vunpack.c.l.b16 %v2956
        %v2965 = vpack.c.b16 %v2962, %v2961
        %v2966 = vpack.c.b16 %v2964, %v2963
        %2969 = vmatprep.subr.bf16.mxu0 0
        %2970 = vmatpush1.bf16.msra.mxu0 0
        %2971 = vmatprep.subr.bf16.mxu0 0
        %2972 = vmatpush1.bf16.msra.mxu0 0
        %2973 = vmatprep.subr.bf16.mxu0 0
        %2974 = vmatpush1.bf16.msra.mxu0 0
        %2975 = vmatprep.subr.bf16.mxu0 0
        %2976 = vmatpush1.bf16.msra.mxu0 0
        %2977 = vmatprep.subr.bf16.mxu0 0
        %2978 = vmatpush1.bf16.msra.mxu0 0
        %2979 = vmatprep.subr.bf16.mxu0 0
        %2980 = vmatpush1.bf16.msra.mxu0 0
        %2981 = vmatprep.subr.bf16.mxu0 0
        %2982 = vmatpush1.bf16.msra.mxu0 %v2966
        %2983 = vmatprep.subr.bf16.mxu0 0
        %2984 = vmatpush1.bf16.msra.mxu0 %v2965
        %2985 = vmatprep.subr.bf16.mxu0 0
        %2986 = vmatpush2.bf16.msra.mxu0 0
        %2987 = vmatprep.subr.bf16.mxu0 0
        %2988 = vmatpush2.bf16.msra.mxu0 0
        %2989 = vmatprep.subr.bf16.mxu0 0
        %2990 = vmatpush2.bf16.msra.mxu0 0
        %2991 = vmatprep.subr.bf16.mxu0 0
        %2992 = vmatpush2.bf16.msra.mxu0 0
        %2993 = vmatprep.subr.bf16.mxu0 0
        %2994 = vmatpush2.bf16.msra.mxu0 0
        %2995 = vmatprep.subr.bf16.mxu0 0
        %2996 = vmatpush2.bf16.msra.mxu0 0
        %2997 = vmatprep.subr.bf16.mxu0 0
        %2998 = vmatpush2.bf16.msra.mxu0 0
        %2999 = vmatprep.subr.bf16.mxu0 0
        %3000 = vmatpush2.bf16.msra.mxu0 0
        %3001 = vmatprep.mubr.bf16.mxu0 0
        %3002 = vmatmul.mubr.bf16.gmra.mxu0 %v715
        %v3003 = vpop.f32.mrf.mxu0
        %v3004 = vadd.f32 0.0, %v3003
        %v3005 = vpop.f32.mrf.mxu0
        %v3006 = vpop.f32.mrf.mxu0
        %v3007 = vadd.f32 0.0, %v3006
        %v3008 = vpop.f32.mrf.mxu0
        %3009 = vmatprep.mubr.bf16.mxu0 0
        %3010 = vmatmul.mubr.bf16.gmra.mxu0 %v718
        %v3011 = vpop.f32.mrf.mxu0
        %v3012 = vadd.f32 0.0, %v3011
        %v3013 = vpop.f32.mrf.mxu0
        %v3014 = vpop.f32.mrf.mxu0
        %v3015 = vadd.f32 0.0, %v3014
        %v3016 = vpop.f32.mrf.mxu0
        %3017 = vmatprep.mubr.bf16.mxu0 0
        %3018 = vmatmul.mubr.bf16.gmra.mxu0 %v721
        %v3019 = vpop.f32.mrf.mxu0
        %v3020 = vadd.f32 0.0, %v3019
        %v3021 = vpop.f32.mrf.mxu0
        %v3022 = vpop.f32.mrf.mxu0
        %v3023 = vadd.f32 0.0, %v3022
        %v3024 = vpop.f32.mrf.mxu0
        %3025 = vmatprep.mubr.bf16.mxu0 0
        %3026 = vmatmul.mubr.bf16.gmra.mxu0 %v724
        %v3027 = vpop.f32.mrf.mxu0
        %v3028 = vadd.f32 0.0, %v3027
        %v3029 = vpop.f32.mrf.mxu0
        %v3030 = vpop.f32.mrf.mxu0
        %v3031 = vadd.f32 0.0, %v3030
        %v3032 = vpop.f32.mrf.mxu0
        %3033 = vdwg.mxu0
        %s3034 = scalar_lea.vmem %s8, 48
        %v3035 = vld [vmem:[%s3034] sm:$0xf]
        %v3036 = vld [vmem:[%s3034 + $0x4] sm:$0xf]
        %v3037 = vld [vmem:[%s3034 + $0x8] sm:$0xf]
        %v3038 = vld [vmem:[%s3034 + $0xc] sm:$0xf]
        %v3043 = vunpack.c.l.b16 %v3035
        %v3044 = vunpack.c.l.b16 %v3036
        %v3045 = vunpack.c.l.b16 %v3037
        %v3046 = vunpack.c.l.b16 %v3038
        %v3047 = vpack.c.b16 %v3044, %v3043
        %v3048 = vpack.c.b16 %v3046, %v3045
        %3051 = vmatprep.subr.bf16.mxu0 0
        %3052 = vmatpush1.bf16.msra.mxu0 0
        %3053 = vmatprep.subr.bf16.mxu0 0
        %3054 = vmatpush1.bf16.msra.mxu0 0
        %3055 = vmatprep.subr.bf16.mxu0 0
        %3056 = vmatpush1.bf16.msra.mxu0 0
        %3057 = vmatprep.subr.bf16.mxu0 0
        %3058 = vmatpush1.bf16.msra.mxu0 0
        %3059 = vmatprep.subr.bf16.mxu0 0
        %3060 = vmatpush1.bf16.msra.mxu0 0
        %3061 = vmatprep.subr.bf16.mxu0 0
        %3062 = vmatpush1.bf16.msra.mxu0 0
        %3063 = vmatprep.subr.bf16.mxu0 0
        %3064 = vmatpush1.bf16.msra.mxu0 %v3048
        %3065 = vmatprep.subr.bf16.mxu0 0
        %3066 = vmatpush1.bf16.msra.mxu0 %v3047
        %3067 = vmatprep.subr.bf16.mxu0 0
        %3068 = vmatpush2.bf16.msra.mxu0 0
        %3069 = vmatprep.subr.bf16.mxu0 0
        %3070 = vmatpush2.bf16.msra.mxu0 0
        %3071 = vmatprep.subr.bf16.mxu0 0
        %3072 = vmatpush2.bf16.msra.mxu0 0
        %3073 = vmatprep.subr.bf16.mxu0 0
        %3074 = vmatpush2.bf16.msra.mxu0 0
        %3075 = vmatprep.subr.bf16.mxu0 0
        %3076 = vmatpush2.bf16.msra.mxu0 0
        %3077 = vmatprep.subr.bf16.mxu0 0
        %3078 = vmatpush2.bf16.msra.mxu0 0
        %3079 = vmatprep.subr.bf16.mxu0 0
        %3080 = vmatpush2.bf16.msra.mxu0 0
        %3081 = vmatprep.subr.bf16.mxu0 0
        %3082 = vmatpush2.bf16.msra.mxu0 0
        %3083 = vmatprep.mubr.bf16.mxu0 0
        %3084 = vmatmul.mubr.bf16.gmra.mxu0 %v715
        %v3085 = vpop.f32.mrf.mxu0
        %v3086 = vadd.f32 0.0, %v3085
        %v3087 = vpop.f32.mrf.mxu0
        %v3088 = vpop.f32.mrf.mxu0
        %v3089 = vadd.f32 0.0, %v3088
        %v3090 = vpop.f32.mrf.mxu0
        %3091 = vmatprep.mubr.bf16.mxu0 0
        %3092 = vmatmul.mubr.bf16.gmra.mxu0 %v718
        %v3093 = vpop.f32.mrf.mxu0
        %v3094 = vadd.f32 0.0, %v3093
        %v3095 = vpop.f32.mrf.mxu0
        %v3096 = vpop.f32.mrf.mxu0
        %v3097 = vadd.f32 0.0, %v3096
        %v3098 = vpop.f32.mrf.mxu0
        %3099 = vmatprep.mubr.bf16.mxu0 0
        %3100 = vmatmul.mubr.bf16.gmra.mxu0 %v721
        %v3101 = vpop.f32.mrf.mxu0
        %v3102 = vadd.f32 0.0, %v3101
        %v3103 = vpop.f32.mrf.mxu0
        %v3104 = vpop.f32.mrf.mxu0
        %v3105 = vadd.f32 0.0, %v3104
        %v3106 = vpop.f32.mrf.mxu0
        %3107 = vmatprep.mubr.bf16.mxu0 0
        %3108 = vmatmul.mubr.bf16.gmra.mxu0 %v724
        %v3109 = vpop.f32.mrf.mxu0
        %v3110 = vadd.f32 0.0, %v3109
        %v3111 = vpop.f32.mrf.mxu0
        %v3112 = vpop.f32.mrf.mxu0
        %v3113 = vadd.f32 0.0, %v3112
        %v3114 = vpop.f32.mrf.mxu0
        %3115 = vdwg.mxu0
        %v3116 = vmul.f32 %v2938, 0.25
        %v3117 = vmul.f32 %v2941, 0.25
        %v3118 = vmul.f32 %v2946, 0.25
        %v3119 = vmul.f32 %v2949, 0.25
        %v3120 = vpack.c.bf16 %v3117, %v3116
        %v3121 = vpack.c.bf16 %v3119, %v3118
        %v3124 = vunpack.c.l.b16 %v3120
        %v3125 = vunpack.c.h.b16 %v3120
        %v3126 = vunpack.c.l.b16 %v3121
        %v3127 = vunpack.c.h.b16 %v3121
        %v3128 = vpack.c.b16 %v3124, %v3124
        %v3129 = vpack.c.b16 %v3125, %v3125
        %v3130 = vpack.c.b16 %v3126, %v3126
        %v3131 = vpack.c.b16 %v3127, %v3127
        %v3132 = vpack.c.bf16 %v3007, %v3004
        %v3133 = vpack.c.bf16 %v3015, %v3012
        %v3134 = vpack.c.bf16 %v3023, %v3020
        %v3135 = vpack.c.bf16 %v3031, %v3028
        %v3136 = vpack.c.bf16 %v3089, %v3086
        %v3137 = vpack.c.bf16 %v3097, %v3094
        %v3138 = vpack.c.bf16 %v3105, %v3102
        %v3139 = vpack.c.bf16 %v3113, %v3110
        %v3141 = vsel %vm896, %v3128, 0
        %v3144 = vsel %vm896, %v3132, 0
        %3146 = vmatprep.subr.bf16.mxu0 0
        %3147 = vmatpush1.bf16.xpose.msra.mxu0 0
        %3148 = vmatprep.subr.bf16.mxu0 0
        %3149 = vmatpush1.bf16.xpose.msra.mxu0 0
        %3150 = vmatprep.subr.bf16.mxu0 0
        %3151 = vmatpush1.bf16.xpose.msra.mxu0 0
        %3152 = vmatprep.subr.bf16.mxu0 0
        %3153 = vmatpush1.bf16.xpose.msra.mxu0 0
        %3154 = vmatprep.subr.bf16.mxu0 0
        %3155 = vmatpush1.bf16.xpose.msra.mxu0 0
        %3156 = vmatprep.subr.bf16.mxu0 0
        %3157 = vmatpush1.bf16.xpose.msra.mxu0 0
        %3158 = vmatprep.subr.bf16.mxu0 0
        %3159 = vmatpush1.bf16.xpose.msra.mxu0 0
        %3160 = vmatprep.subr.bf16.mxu0 0
        %3161 = vmatpush1.bf16.xpose.msra.mxu0 %v3144
        %3162 = vmatprep.subr.bf16.mxu0 0
        %3163 = vmatpush2.bf16.xpose.msra.mxu0 0
        %3164 = vmatprep.subr.bf16.mxu0 0
        %3165 = vmatpush2.bf16.xpose.msra.mxu0 0
        %3166 = vmatprep.subr.bf16.mxu0 0
        %3167 = vmatpush2.bf16.xpose.msra.mxu0 0
        %3168 = vmatprep.subr.bf16.mxu0 0
        %3169 = vmatpush2.bf16.xpose.msra.mxu0 0
        %3170 = vmatprep.subr.bf16.mxu0 0
        %3171 = vmatpush2.bf16.xpose.msra.mxu0 0
        %3172 = vmatprep.subr.bf16.mxu0 0
        %3173 = vmatpush2.bf16.xpose.msra.mxu0 0
        %3174 = vmatprep.subr.bf16.mxu0 0
        %3175 = vmatpush2.bf16.xpose.msra.mxu0 0
        %3176 = vmatprep.subr.bf16.mxu0 0
        %3177 = vmatpush2.bf16.xpose.msra.mxu0 0
        %3178 = vmatprep.mubr.bf16.mxu0 0
        %3179 = vmatmul.mubr.bf16.gmra.mxu0 %v3141
        %v3180 = vpop.f32.mrf.mxu0
        %v3181 = vadd.f32 0.0, %v3180
        %v3182 = vpop.f32.mrf.mxu0
        %v3183 = vpop.f32.mrf.mxu0
        %v3184 = vpop.f32.mrf.mxu0
        %3185 = vdwg.mxu0
        %v3187 = vsel %vm896, %v3129, 0
        %v3190 = vsel %vm896, %v3133, 0
        %3192 = vmatprep.subr.bf16.mxu0 0
        %3193 = vmatpush1.bf16.xpose.msra.mxu0 0
        %3194 = vmatprep.subr.bf16.mxu0 0
        %3195 = vmatpush1.bf16.xpose.msra.mxu0 0
        %3196 = vmatprep.subr.bf16.mxu0 0
        %3197 = vmatpush1.bf16.xpose.msra.mxu0 0
        %3198 = vmatprep.subr.bf16.mxu0 0
        %3199 = vmatpush1.bf16.xpose.msra.mxu0 0
        %3200 = vmatprep.subr.bf16.mxu0 0
        %3201 = vmatpush1.bf16.xpose.msra.mxu0 0
        %3202 = vmatprep.subr.bf16.mxu0 0
        %3203 = vmatpush1.bf16.xpose.msra.mxu0 0
        %3204 = vmatprep.subr.bf16.mxu0 0
        %3205 = vmatpush1.bf16.xpose.msra.mxu0 0
        %3206 = vmatprep.subr.bf16.mxu0 0
        %3207 = vmatpush1.bf16.xpose.msra.mxu0 %v3190
        %3208 = vmatprep.subr.bf16.mxu0 0
        %3209 = vmatpush2.bf16.xpose.msra.mxu0 0
        %3210 = vmatprep.subr.bf16.mxu0 0
        %3211 = vmatpush2.bf16.xpose.msra.mxu0 0
        %3212 = vmatprep.subr.bf16.mxu0 0
        %3213 = vmatpush2.bf16.xpose.msra.mxu0 0
        %3214 = vmatprep.subr.bf16.mxu0 0
        %3215 = vmatpush2.bf16.xpose.msra.mxu0 0
        %3216 = vmatprep.subr.bf16.mxu0 0
        %3217 = vmatpush2.bf16.xpose.msra.mxu0 0
        %3218 = vmatprep.subr.bf16.mxu0 0
        %3219 = vmatpush2.bf16.xpose.msra.mxu0 0
        %3220 = vmatprep.subr.bf16.mxu0 0
        %3221 = vmatpush2.bf16.xpose.msra.mxu0 0
        %3222 = vmatprep.subr.bf16.mxu0 0
        %3223 = vmatpush2.bf16.xpose.msra.mxu0 0
        %3224 = vmatprep.mubr.bf16.mxu0 0
        %3225 = vmatmul.mubr.bf16.gmra.mxu0 %v3187
        %v3226 = vpop.f32.mrf.mxu0
        %v3227 = vadd.f32 0.0, %v3226
        %v3228 = vpop.f32.mrf.mxu0
        %v3229 = vpop.f32.mrf.mxu0
        %v3230 = vpop.f32.mrf.mxu0
        %3231 = vdwg.mxu0
        %v3233 = vsel %vm896, %v3130, 0
        %v3236 = vsel %vm896, %v3134, 0
        %3238 = vmatprep.subr.bf16.mxu0 0
        %3239 = vmatpush1.bf16.xpose.msra.mxu0 0
        %3240 = vmatprep.subr.bf16.mxu0 0
        %3241 = vmatpush1.bf16.xpose.msra.mxu0 0
        %3242 = vmatprep.subr.bf16.mxu0 0
        %3243 = vmatpush1.bf16.xpose.msra.mxu0 0
        %3244 = vmatprep.subr.bf16.mxu0 0
        %3245 = vmatpush1.bf16.xpose.msra.mxu0 0
        %3246 = vmatprep.subr.bf16.mxu0 0
        %3247 = vmatpush1.bf16.xpose.msra.mxu0 0
        %3248 = vmatprep.subr.bf16.mxu0 0
        %3249 = vmatpush1.bf16.xpose.msra.mxu0 0
        %3250 = vmatprep.subr.bf16.mxu0 0
        %3251 = vmatpush1.bf16.xpose.msra.mxu0 0
        %3252 = vmatprep.subr.bf16.mxu0 0
        %3253 = vmatpush1.bf16.xpose.msra.mxu0 %v3236
        %3254 = vmatprep.subr.bf16.mxu0 0
        %3255 = vmatpush2.bf16.xpose.msra.mxu0 0
        %3256 = vmatprep.subr.bf16.mxu0 0
        %3257 = vmatpush2.bf16.xpose.msra.mxu0 0
        %3258 = vmatprep.subr.bf16.mxu0 0
        %3259 = vmatpush2.bf16.xpose.msra.mxu0 0
        %3260 = vmatprep.subr.bf16.mxu0 0
        %3261 = vmatpush2.bf16.xpose.msra.mxu0 0
        %3262 = vmatprep.subr.bf16.mxu0 0
        %3263 = vmatpush2.bf16.xpose.msra.mxu0 0
        %3264 = vmatprep.subr.bf16.mxu0 0
        %3265 = vmatpush2.bf16.xpose.msra.mxu0 0
        %3266 = vmatprep.subr.bf16.mxu0 0
        %3267 = vmatpush2.bf16.xpose.msra.mxu0 0
        %3268 = vmatprep.subr.bf16.mxu0 0
        %3269 = vmatpush2.bf16.xpose.msra.mxu0 0
        %3270 = vmatprep.mubr.bf16.mxu0 0
        %3271 = vmatmul.mubr.bf16.gmra.mxu0 %v3233
        %v3272 = vpop.f32.mrf.mxu0
        %v3273 = vadd.f32 0.0, %v3272
        %v3274 = vpop.f32.mrf.mxu0
        %v3275 = vpop.f32.mrf.mxu0
        %v3276 = vpop.f32.mrf.mxu0
        %3277 = vdwg.mxu0
        %v3279 = vsel %vm896, %v3131, 0
        %v3282 = vsel %vm896, %v3135, 0
        %3284 = vmatprep.subr.bf16.mxu0 0
        %3285 = vmatpush1.bf16.xpose.msra.mxu0 0
        %3286 = vmatprep.subr.bf16.mxu0 0
        %3287 = vmatpush1.bf16.xpose.msra.mxu0 0
        %3288 = vmatprep.subr.bf16.mxu0 0
        %3289 = vmatpush1.bf16.xpose.msra.mxu0 0
        %3290 = vmatprep.subr.bf16.mxu0 0
        %3291 = vmatpush1.bf16.xpose.msra.mxu0 0
        %3292 = vmatprep.subr.bf16.mxu0 0
        %3293 = vmatpush1.bf16.xpose.msra.mxu0 0
        %3294 = vmatprep.subr.bf16.mxu0 0
        %3295 = vmatpush1.bf16.xpose.msra.mxu0 0
        %3296 = vmatprep.subr.bf16.mxu0 0
        %3297 = vmatpush1.bf16.xpose.msra.mxu0 0
        %3298 = vmatprep.subr.bf16.mxu0 0
        %3299 = vmatpush1.bf16.xpose.msra.mxu0 %v3282
        %3300 = vmatprep.subr.bf16.mxu0 0
        %3301 = vmatpush2.bf16.xpose.msra.mxu0 0
        %3302 = vmatprep.subr.bf16.mxu0 0
        %3303 = vmatpush2.bf16.xpose.msra.mxu0 0
        %3304 = vmatprep.subr.bf16.mxu0 0
        %3305 = vmatpush2.bf16.xpose.msra.mxu0 0
        %3306 = vmatprep.subr.bf16.mxu0 0
        %3307 = vmatpush2.bf16.xpose.msra.mxu0 0
        %3308 = vmatprep.subr.bf16.mxu0 0
        %3309 = vmatpush2.bf16.xpose.msra.mxu0 0
        %3310 = vmatprep.subr.bf16.mxu0 0
        %3311 = vmatpush2.bf16.xpose.msra.mxu0 0
        %3312 = vmatprep.subr.bf16.mxu0 0
        %3313 = vmatpush2.bf16.xpose.msra.mxu0 0
        %3314 = vmatprep.subr.bf16.mxu0 0
        %3315 = vmatpush2.bf16.xpose.msra.mxu0 0
        %3316 = vmatprep.mubr.bf16.mxu0 0
        %3317 = vmatmul.mubr.bf16.gmra.mxu0 %v3279
        %v3318 = vpop.f32.mrf.mxu0
        %v3319 = vadd.f32 0.0, %v3318
        %v3320 = vpop.f32.mrf.mxu0
        %v3321 = vpop.f32.mrf.mxu0
        %v3322 = vpop.f32.mrf.mxu0
        %3323 = vdwg.mxu0
        %v3324 = vsel %vm896, %v3181, -inf
        %3325 = vmax.xlane.f32.xlu0 %v3324
        %v3326 = vpop.xlane.xlu0 %3325
        %v3327 = vsel %vm896, %v3227, -inf
        %3328 = vmax.xlane.f32.xlu0 %v3327
        %v3329 = vpop.xlane.xlu0 %3328
        %v3330 = vsel %vm896, %v3273, -inf
        %3331 = vmax.xlane.f32.xlu0 %v3330
        %v3332 = vpop.xlane.xlu0 %3331
        %v3333 = vsel %vm896, %v3319, -inf
        %3334 = vmax.xlane.f32.xlu0 %v3333
        %v3335 = vpop.xlane.xlu0 %3334
        %v3336 = vsub.f32 %v3181, %v3326
        %v3337 = vsub.f32 %v3227, %v3329
        %v3338 = vsub.f32 %v3273, %v3332
        %v3339 = vsub.f32 %v3319, %v3335
        %v3340 = vmul.f32 %v3336, 1.442695
        %v3341 = vpow.pop %v3340
        %v3342 = vmul.f32 %v3337, 1.442695
        %v3343 = vpow.pop %v3342
        %v3344 = vmul.f32 %v3338, 1.442695
        %v3345 = vpow.pop %v3344
        %v3346 = vmul.f32 %v3339, 1.442695
        %v3347 = vpow.pop %v3346
        %v3348 = vsel %vm896, %v3341, 0.0
        %3349 = vadd.xlane.f32.xlu0 %v3348
        %v3350 = vpop.xlane.xlu0 %3349
        %v3351 = vsel %vm896, %v3343, 0.0
        %3352 = vadd.xlane.f32.xlu0 %v3351
        %v3353 = vpop.xlane.xlu0 %3352
        %v3354 = vsel %vm896, %v3345, 0.0
        %3355 = vadd.xlane.f32.xlu0 %v3354
        %v3356 = vpop.xlane.xlu0 %3355
        %v3357 = vsel %vm896, %v3347, 0.0
        %3358 = vadd.xlane.f32.xlu0 %v3357
        %v3359 = vpop.xlane.xlu0 %3358
        %v3360 = vrcp.pop %v3350
        %v3361 = vrcp.pop %v3353
        %v3362 = vrcp.pop %v3356
        %v3363 = vrcp.pop %v3359
        %v3364 = vmul.f32 %v3341, %v3360
        %v3365 = vmul.f32 %v3343, %v3361
        %v3366 = vmul.f32 %v3345, %v3362
        %v3367 = vmul.f32 %v3347, %v3363
        %v3368 = vpack.c.bf16 %v3364, %v3364
        %v3369 = vpack.c.bf16 %v3365, %v3365
        %v3370 = vpack.c.bf16 %v3366, %v3366
        %v3371 = vpack.c.bf16 %v3367, %v3367
        %v3373 = vsel %vm896, %v3368, 0
        %3375 = vmatprep.subr.bf16.mxu0 0
        %3376 = vmatpush1.bf16.msra.mxu0 0
        %3377 = vmatprep.subr.bf16.mxu0 0
        %3378 = vmatpush1.bf16.msra.mxu0 0
        %3379 = vmatprep.subr.bf16.mxu0 0
        %3380 = vmatpush1.bf16.msra.mxu0 0
        %3381 = vmatprep.subr.bf16.mxu0 0
        %3382 = vmatpush1.bf16.msra.mxu0 0
        %3383 = vmatprep.subr.bf16.mxu0 0
        %3384 = vmatpush1.bf16.msra.mxu0 0
        %3385 = vmatprep.subr.bf16.mxu0 0
        %3386 = vmatpush1.bf16.msra.mxu0 0
        %3387 = vmatprep.subr.bf16.mxu0 0
        %3388 = vmatpush1.bf16.msra.mxu0 0
        %3389 = vmatprep.subr.bf16.mxu0 0
        %3390 = vmatpush1.bf16.msra.mxu0 %v3136
        %3391 = vmatprep.subr.bf16.mxu0 0
        %3392 = vmatpush2.bf16.msra.mxu0 0
        %3393 = vmatprep.subr.bf16.mxu0 0
        %3394 = vmatpush2.bf16.msra.mxu0 0
        %3395 = vmatprep.subr.bf16.mxu0 0
        %3396 = vmatpush2.bf16.msra.mxu0 0
        %3397 = vmatprep.subr.bf16.mxu0 0
        %3398 = vmatpush2.bf16.msra.mxu0 0
        %3399 = vmatprep.subr.bf16.mxu0 0
        %3400 = vmatpush2.bf16.msra.mxu0 0
        %3401 = vmatprep.subr.bf16.mxu0 0
        %3402 = vmatpush2.bf16.msra.mxu0 0
        %3403 = vmatprep.subr.bf16.mxu0 0
        %3404 = vmatpush2.bf16.msra.mxu0 0
        %3405 = vmatprep.subr.bf16.mxu0 0
        %3406 = vmatpush2.bf16.msra.mxu0 0
        %3407 = vmatprep.mubr.bf16.mxu0 0
        %3408 = vmatmul.mubr.bf16.gmra.mxu0 %v3373
        %v3409 = vpop.f32.mrf.mxu0
        %v3410 = vadd.f32 0.0, %v3409
        %v3411 = vpop.f32.mrf.mxu0
        %v3412 = vpop.f32.mrf.mxu0
        %v3413 = vpop.f32.mrf.mxu0
        %3414 = vdwg.mxu0
        %v3416 = vsel %vm896, %v3369, 0
        %3418 = vmatprep.subr.bf16.mxu0 0
        %3419 = vmatpush1.bf16.msra.mxu0 0
        %3420 = vmatprep.subr.bf16.mxu0 0
        %3421 = vmatpush1.bf16.msra.mxu0 0
        %3422 = vmatprep.subr.bf16.mxu0 0
        %3423 = vmatpush1.bf16.msra.mxu0 0
        %3424 = vmatprep.subr.bf16.mxu0 0
        %3425 = vmatpush1.bf16.msra.mxu0 0
        %3426 = vmatprep.subr.bf16.mxu0 0
        %3427 = vmatpush1.bf16.msra.mxu0 0
        %3428 = vmatprep.subr.bf16.mxu0 0
        %3429 = vmatpush1.bf16.msra.mxu0 0
        %3430 = vmatprep.subr.bf16.mxu0 0
        %3431 = vmatpush1.bf16.msra.mxu0 0
        %3432 = vmatprep.subr.bf16.mxu0 0
        %3433 = vmatpush1.bf16.msra.mxu0 %v3137
        %3434 = vmatprep.subr.bf16.mxu0 0
        %3435 = vmatpush2.bf16.msra.mxu0 0
        %3436 = vmatprep.subr.bf16.mxu0 0
        %3437 = vmatpush2.bf16.msra.mxu0 0
        %3438 = vmatprep.subr.bf16.mxu0 0
        %3439 = vmatpush2.bf16.msra.mxu0 0
        %3440 = vmatprep.subr.bf16.mxu0 0
        %3441 = vmatpush2.bf16.msra.mxu0 0
        %3442 = vmatprep.subr.bf16.mxu0 0
        %3443 = vmatpush2.bf16.msra.mxu0 0
        %3444 = vmatprep.subr.bf16.mxu0 0
        %3445 = vmatpush2.bf16.msra.mxu0 0
        %3446 = vmatprep.subr.bf16.mxu0 0
        %3447 = vmatpush2.bf16.msra.mxu0 0
        %3448 = vmatprep.subr.bf16.mxu0 0
        %3449 = vmatpush2.bf16.msra.mxu0 0
        %3450 = vmatprep.mubr.bf16.mxu0 0
        %3451 = vmatmul.mubr.bf16.gmra.mxu0 %v3416
        %v3452 = vpop.f32.mrf.mxu0
        %v3453 = vadd.f32 0.0, %v3452
        %v3454 = vpop.f32.mrf.mxu0
        %v3455 = vpop.f32.mrf.mxu0
        %v3456 = vpop.f32.mrf.mxu0
        %3457 = vdwg.mxu0
        %v3459 = vsel %vm896, %v3370, 0
        %3461 = vmatprep.subr.bf16.mxu0 0
        %3462 = vmatpush1.bf16.msra.mxu0 0
        %3463 = vmatprep.subr.bf16.mxu0 0
        %3464 = vmatpush1.bf16.msra.mxu0 0
        %3465 = vmatprep.subr.bf16.mxu0 0
        %3466 = vmatpush1.bf16.msra.mxu0 0
        %3467 = vmatprep.subr.bf16.mxu0 0
        %3468 = vmatpush1.bf16.msra.mxu0 0
        %3469 = vmatprep.subr.bf16.mxu0 0
        %3470 = vmatpush1.bf16.msra.mxu0 0
        %3471 = vmatprep.subr.bf16.mxu0 0
        %3472 = vmatpush1.bf16.msra.mxu0 0
        %3473 = vmatprep.subr.bf16.mxu0 0
        %3474 = vmatpush1.bf16.msra.mxu0 0
        %3475 = vmatprep.subr.bf16.mxu0 0
        %3476 = vmatpush1.bf16.msra.mxu0 %v3138
        %3477 = vmatprep.subr.bf16.mxu0 0
        %3478 = vmatpush2.bf16.msra.mxu0 0
        %3479 = vmatprep.subr.bf16.mxu0 0
        %3480 = vmatpush2.bf16.msra.mxu0 0
        %3481 = vmatprep.subr.bf16.mxu0 0
        %3482 = vmatpush2.bf16.msra.mxu0 0
        %3483 = vmatprep.subr.bf16.mxu0 0
        %3484 = vmatpush2.bf16.msra.mxu0 0
        %3485 = vmatprep.subr.bf16.mxu0 0
        %3486 = vmatpush2.bf16.msra.mxu0 0
        %3487 = vmatprep.subr.bf16.mxu0 0
        %3488 = vmatpush2.bf16.msra.mxu0 0
        %3489 = vmatprep.subr.bf16.mxu0 0
        %3490 = vmatpush2.bf16.msra.mxu0 0
        %3491 = vmatprep.subr.bf16.mxu0 0
        %3492 = vmatpush2.bf16.msra.mxu0 0
        %3493 = vmatprep.mubr.bf16.mxu0 0
        %3494 = vmatmul.mubr.bf16.gmra.mxu0 %v3459
        %v3495 = vpop.f32.mrf.mxu0
        %v3496 = vadd.f32 0.0, %v3495
        %v3497 = vpop.f32.mrf.mxu0
        %v3498 = vpop.f32.mrf.mxu0
        %v3499 = vpop.f32.mrf.mxu0
        %3500 = vdwg.mxu0
        %v3502 = vsel %vm896, %v3371, 0
        %3504 = vmatprep.subr.bf16.mxu0 0
        %3505 = vmatpush1.bf16.msra.mxu0 0
        %3506 = vmatprep.subr.bf16.mxu0 0
        %3507 = vmatpush1.bf16.msra.mxu0 0
        %3508 = vmatprep.subr.bf16.mxu0 0
        %3509 = vmatpush1.bf16.msra.mxu0 0
        %3510 = vmatprep.subr.bf16.mxu0 0
        %3511 = vmatpush1.bf16.msra.mxu0 0
        %3512 = vmatprep.subr.bf16.mxu0 0
        %3513 = vmatpush1.bf16.msra.mxu0 0
        %3514 = vmatprep.subr.bf16.mxu0 0
        %3515 = vmatpush1.bf16.msra.mxu0 0
        %3516 = vmatprep.subr.bf16.mxu0 0
        %3517 = vmatpush1.bf16.msra.mxu0 0
        %3518 = vmatprep.subr.bf16.mxu0 0
        %3519 = vmatpush1.bf16.msra.mxu0 %v3139
        %3520 = vmatprep.subr.bf16.mxu0 0
        %3521 = vmatpush2.bf16.msra.mxu0 0
        %3522 = vmatprep.subr.bf16.mxu0 0
        %3523 = vmatpush2.bf16.msra.mxu0 0
        %3524 = vmatprep.subr.bf16.mxu0 0
        %3525 = vmatpush2.bf16.msra.mxu0 0
        %3526 = vmatprep.subr.bf16.mxu0 0
        %3527 = vmatpush2.bf16.msra.mxu0 0
        %3528 = vmatprep.subr.bf16.mxu0 0
        %3529 = vmatpush2.bf16.msra.mxu0 0
        %3530 = vmatprep.subr.bf16.mxu0 0
        %3531 = vmatpush2.bf16.msra.mxu0 0
        %3532 = vmatprep.subr.bf16.mxu0 0
        %3533 = vmatpush2.bf16.msra.mxu0 0
        %3534 = vmatprep.subr.bf16.mxu0 0
        %3535 = vmatpush2.bf16.msra.mxu0 0
        %3536 = vmatprep.mubr.bf16.mxu0 0
        %3537 = vmatmul.mubr.bf16.gmra.mxu0 %v3502
        %v3538 = vpop.f32.mrf.mxu0
        %v3539 = vadd.f32 0.0, %v3538
        %v3540 = vpop.f32.mrf.mxu0
        %v3541 = vpop.f32.mrf.mxu0
        %v3542 = vpop.f32.mrf.mxu0
        %3543 = vdwg.mxu0
        %v3544 = vld [vmem:[#allocation2] sm:$0xff]
        %v3545 = vld [vmem:[#allocation2 + $0x8] sm:$0xff]
        %v3546 = vld [vmem:[#allocation2 + $0x10] sm:$0xff]
        %v3547 = vld [vmem:[#allocation2 + $0x18] sm:$0xff]
        %v3548 = vpack.c.bf16 %v3410, %v3410
        %v3549 = vpack.c.bf16 %v3453, %v3453
        %v3550 = vpack.c.bf16 %v3496, %v3496
        %v3551 = vpack.c.bf16 %v3539, %v3539
        %s3552 = scalar_lea.vmem %s9, 24
        %v3553 = vld [vmem:[%s3552] sm:$0xf]
        %v3554 = vld [vmem:[%s3552 + $0x4] sm:$0xf]
        %v3559 = vunpack.c.l.b16 %v3548
        %v3560 = vunpack.c.l.b16 %v3549
        %v3561 = vunpack.c.l.b16 %v3550
        %v3562 = vunpack.c.l.b16 %v3551
        %v3563 = vpack.c.b16 %v3560, %v3559
        %v3564 = vpack.c.b16 %v3562, %v3561
        %v3567 = vunpack.c.l.b16 %v3553
        %v3568 = vunpack.c.l.b16 %v3554
        %v3569 = vpack.c.b16 %v3568, %v3567
        %v3572 = vsel %vm896, %v3563, 0
        %v3575 = vsel %vm896, %v3564, 0
        %3577 = vmatprep.subr.bf16.mxu0 0
        %3578 = vmatpush1.bf16.msra.mxu0 0
        %3579 = vmatprep.subr.bf16.mxu0 0
        %3580 = vmatpush1.bf16.msra.mxu0 0
        %3581 = vmatprep.subr.bf16.mxu0 0
        %3582 = vmatpush1.bf16.msra.mxu0 0
        %3583 = vmatprep.subr.bf16.mxu0 0
        %3584 = vmatpush1.bf16.msra.mxu0 0
        %3585 = vmatprep.subr.bf16.mxu0 0
        %3586 = vmatpush1.bf16.msra.mxu0 0
        %3587 = vmatprep.subr.bf16.mxu0 0
        %3588 = vmatpush1.bf16.msra.mxu0 0
        %3589 = vmatprep.subr.bf16.mxu0 0
        %3590 = vmatpush1.bf16.msra.mxu0 0
        %3591 = vmatprep.subr.bf16.mxu0 0
        %3592 = vmatpush1.bf16.msra.mxu0 %v3569
        %3593 = vmatprep.subr.bf16.mxu0 0
        %3594 = vmatpush2.bf16.msra.mxu0 0
        %3595 = vmatprep.subr.bf16.mxu0 0
        %3596 = vmatpush2.bf16.msra.mxu0 0
        %3597 = vmatprep.subr.bf16.mxu0 0
        %3598 = vmatpush2.bf16.msra.mxu0 0
        %3599 = vmatprep.subr.bf16.mxu0 0
        %3600 = vmatpush2.bf16.msra.mxu0 0
        %3601 = vmatprep.subr.bf16.mxu0 0
        %3602 = vmatpush2.bf16.msra.mxu0 0
        %3603 = vmatprep.subr.bf16.mxu0 0
        %3604 = vmatpush2.bf16.msra.mxu0 0
        %3605 = vmatprep.subr.bf16.mxu0 0
        %3606 = vmatpush2.bf16.msra.mxu0 0
        %3607 = vmatprep.subr.bf16.mxu0 0
        %3608 = vmatpush2.bf16.msra.mxu0 0
        %3609 = vmatprep.mubr.bf16.mxu0 0
        %3610 = vmatmul.mubr.bf16.gmra.mxu0 %v3572
        %v3611 = vpop.f32.mrf.mxu0
        %v3612 = vadd.f32 0.0, %v3611
        %v3613 = vpop.f32.mrf.mxu0
        %v3614 = vpop.f32.mrf.mxu0
        %v3615 = vadd.f32 0.0, %v3614
        %v3616 = vpop.f32.mrf.mxu0
        %3617 = vmatprep.mubr.bf16.mxu0 0
        %3618 = vmatmul.mubr.bf16.gmra.mxu0 %v3575
        %v3619 = vpop.f32.mrf.mxu0
        %v3620 = vadd.f32 0.0, %v3619
        %v3621 = vpop.f32.mrf.mxu0
        %v3622 = vpop.f32.mrf.mxu0
        %v3623 = vadd.f32 0.0, %v3622
        %v3624 = vpop.f32.mrf.mxu0
        %3625 = vdwg.mxu0
        %v3626 = vadd.f32 %v3544, %v3612
        %v3627 = vadd.f32 %v3545, %v3615
        %v3628 = vadd.f32 %v3546, %v3620
        %v3629 = vadd.f32 %v3547, %v3623
        %3630 = vst.msk [vmem:[#allocation2] sm:$0xff] %vm415, %v3626
        %3631 = vst.msk [vmem:[#allocation2 + $0x8] sm:$0xff] %vm415, %v3627
        %3632 = vst.msk [vmem:[#allocation2 + $0x10] sm:$0xff] %vm415, %v3628
        %3633 = vst.msk [vmem:[#allocation2 + $0x18] sm:$0xff] %vm415, %v3629
        %v3634 = vld [vmem:[#allocation2] sm:$0xff]
        %v3635 = vld [vmem:[#allocation2 + $0x8] sm:$0xff]
        %v3636 = vld [vmem:[#allocation2 + $0x10] sm:$0xff]
        %v3637 = vld [vmem:[#allocation2 + $0x18] sm:$0xff]
        %v3638 = vpack.c.bf16 %v3634, %v3634
        %v3639 = vpack.c.bf16 %v3635, %v3635
        %v3640 = vpack.c.bf16 %v3636, %v3636
        %v3641 = vpack.c.bf16 %v3637, %v3637
        %vm3642 = vcmask 257024
        %3643 = vst.msk [vmem:[%s371] sm:$0xf] %vm3642, %v3638
        %3644 = vst.msk [vmem:[%s371 + $0x4] sm:$0xf] %vm3642, %v3639
        %3645 = vst.msk [vmem:[%s371 + $0x8] sm:$0xf] %vm3642, %v3640
        %3646 = vst.msk [vmem:[%s371 + $0xc] sm:$0xf] %vm3642, %v3641
        %s3647 = sand.u32 %s252, 1
        %s3648 = scalar_lea.sflag [#allocation4], %s3647
        %s3649 = sand.u32 %s252, 1
        %s3650 = smul.addr %s3649, 16
        %s3651 = scalar_lea.vmem [#allocation3], %s3650
        // Predicated region
        $region61: #{tpu_custom_call.1} parent=59 // pred_check
          %p3652 = pneg %p262
        $region62: #{tpu_custom_call.1} parent=59 // pred_check_branch
          %3654 = sbr.rel (%p3652) target = $region64
        $region63: #{tpu_custom_call.1} parent=59 // pred_region
          %s3655 = smul.u32 4, %s24
          %s3657 = ssub.s32 256, 256
          %3658 = vsyncadd %s3648, %s3657
          %s3659 = smul.addr %s3655, 64
          %s3660 = scalar_lea.hbm %s10, %s3659
          %s3661 = sshll.u32 %s3651, 4
          %s3662 = int_to_ptr.vmem [resolvable:$true] %s3661
          %3667 = dma.vmem_to_hbm [thread:$0]  %s3662, 256, %s3660, %s3648, 64, 64, 4
        $region64: #{tpu_custom_call.1} parent=59 // pred_fallthru
          _
      $region60: #{tpu_custom_call.1} parent=5 // pred_fallthru
        _
      %p3668 = scmp.le.s32.totalorder 2, %s19
      // Predicated region
      $region65: #{tpu_custom_call.1} parent=5 // pred_check
        %p3669 = pneg %p3668
      $region66: #{tpu_custom_call.1} parent=5 // pred_check_branch
        %3671 = sbr.rel (%p3669) target = $region68
      $region67: #{tpu_custom_call.1} parent=5 // pred_region
        %s3672 = ssub.s32 %s19, 2
        // Predicated region
        $region69: #{tpu_custom_call.1} parent=67 // pred_check
          %p3673 = pneg %p268
        $region70: #{tpu_custom_call.1} parent=67 // pred_check_branch
          %3675 = sbr.rel (%p3673) target = $region72
        $region71: #{tpu_custom_call.1} parent=67 // pred_region
          %s3676 = sand.u32 %s253, 1
          %s3677 = scalar_lea.sflag [#allocation4], %s3676
          %s3678 = sand.u32 %s253, 1
          %s3679 = smul.addr %s3678, 16
          %s3680 = scalar_lea.vmem [#allocation3], %s3679
          %3681 = dma.done %s3677, 256
        $region72: #{tpu_custom_call.1} parent=67 // pred_fallthru
          _
      $region68: #{tpu_custom_call.1} parent=5 // pred_fallthru
        _
    $region6: #{tpu_custom_call.1} parent=1 // loop_footer
      %s23 = sadd.s32 1, %s19
    $region7: #{tpu_custom_call.1} parent=1 // loop_footer_branch
      %18 = sbr.rel target = $region3
    $region8: #{tpu_custom_call.1} parent=1 // loop_exit
      _
    %3682 = vsyncpa [#allocation4], 1
    %s3683 = scalar_lea.sflag [#allocation4], 1
    %3684 = vsyncpa %s3683, 1

</llo_original>
